<compile_context>
chip_gen: v6e
topology: v6e:2x2x1
jax: 0.10.0
libtpu: 0.0.40
codegen_flags: <defaults>
</compile_context>

<pallas_src>
import jax
import jax.numpy as jnp
import numpy as np
from jax.experimental import pallas as pl
from jax.experimental.pallas import tpu as pltpu

LANE = 128


def _round_up(x, m):
    return ((x + m - 1) // m) * m


def upconv_kernel(x_ref, w_ref, scale_ref, shift_ref,
                  o_ee, o_eo, o_oe, o_oo, acc_ref):
    """One (batch, row-tile) grid step.

    x_ref:     (1, H+2, W+2, Cin_p)  zero-padded source image (resident per batch)
    w_ref:     (16, Cin_p, Cout_p)   folded sub-pixel 2x2 weights,
                                     flat index = ((pr*2+pc)*2+i)*2+j
    scale_ref: (1, Cout_p)           gamma / sqrt(var + eps)
    shift_ref: (1, Cout_p)           scale*(conv_bias - mean) + beta
    o_pp:      (1, HS, W, Cout_p)    parity planes: out[2r+pr, 2c+pc] = o_prpc[r, c]
    acc_ref:   (HS*W, Cout_p) f32    VMEM scratch accumulator (reused per parity)
    """
    hs = o_ee.shape[1]
    wdim = o_ee.shape[2]
    cout_p = o_ee.shape[3]
    cin_p = x_ref.shape[3]

    t = pl.program_id(1)
    r0 = pl.multiple_of(t * hs, hs)          # first source row of this tile

    # hoisted once per tile (reused by all 4 parity epilogues)
    scale = scale_ref[...]                   # (1, Cout_p)
    shift = shift_ref[...]

    outs = ((o_ee, o_eo), (o_oe, o_oo))
    for pr in range(2):                      # output row parity
        for pc in range(2):                  # output col parity
            for i in range(2):               # 2x2 sub-pixel taps
                for j in range(2):
                    # source rows r0+pr+i .. r0+pr+i+HS-1, cols pc+j .. pc+j+W-1
                    slab = x_ref[0, pl.ds(r0 + pr + i, hs),
                                 pc + j:pc + j + wdim, :]
                    contrib = jnp.dot(
                        slab.reshape(hs * wdim, cin_p),
                        w_ref[((pr * 2 + pc) * 2 + i) * 2 + j],
                        preferred_element_type=jnp.float32)
                    if i == 0 and j == 0:
                        acc_ref[...] = contrib
                    else:
                        acc_ref[...] += contrib
            # epilogue: fused conv bias + BN affine + ReLU, lane-dense store
            y = acc_ref[...] * scale + shift
            o = outs[pr][pc]
            o[0] = jnp.maximum(y, 0.0).reshape(hs, wdim, cout_p).astype(o.dtype)


def upconv_forward(x_nchw, conv_w, conv_b, bn_gamma, bn_beta, bn_mean, bn_var,
                   *, eps=1e-5, row_tile=None, compute_dtype=jnp.float32):
    """UpConv.forward: (N, Cin, H, W) -> (N, Cout, 2H, 2W), eval-mode BatchNorm."""
    N, Cin, H, W = x_nchw.shape
    Cout = conv_w.shape[0]
    cin_p = _round_up(Cin, LANE)
    cout_p = _round_up(Cout, LANE)

    # ---- choose row tile (source rows per grid step; must divide H) ----
    if row_tile is None:
        row_tile = max(1, (2 << 20) // max(1, W * cout_p * 4))  # ~2 MiB parity tile
    hs = max(1, min(int(row_tile), H))
    while H % hs:
        hs -= 1
    n_tiles = H // hs

    # ---- prepare inputs (layout plumbing only; upsampled tensor never built) ----
    x = jnp.transpose(x_nchw, (0, 2, 3, 1))                       # NCHW -> NHWC
    xp = jnp.pad(x, ((0, 0), (1, 1), (1, 1), (0, cin_p - Cin)))   # 1px halo + lane pad
    xp = xp.astype(compute_dtype)

    # Fold x2-nearest-upsample + 3x3 conv into four parity-phased 2x2 convs:
    #   out[2r+pr, 2c+pc] = sum_{i,j in {0,1}} W_sub[pr,pc,i,j] . xpad[r+pr+i, c+pc+j]
    wt = jnp.transpose(conv_w, (2, 3, 1, 0)).astype(jnp.float32)  # (kh, kw, Cin, Cout)
    F = jnp.array([[[1., 0., 0.], [0., 1., 1.]],
                   [[1., 1., 0.], [0., 0., 1.]]], jnp.float32)    # [parity, i, kh]
    w_sub = jnp.einsum('pik,qjl,klcf->pqijcf', F, F, wt)          # (2,2,2,2,Cin,Cout)
    w_sub = jnp.pad(w_sub, ((0, 0),) * 4 + ((0, cin_p - Cin), (0, cout_p - Cout)))
    w_sub = w_sub.reshape(16, cin_p, cout_p).astype(compute_dtype)

    # Eval-mode BatchNorm folded with conv bias into a per-channel affine:
    #   BN(conv + b) = s*conv + (s*(b - mean) + beta),  s = gamma/sqrt(var+eps)
    s = bn_gamma / jnp.sqrt(bn_var + eps)
    shift = s * (conv_b - bn_mean) + bn_beta
    scale2d = jnp.pad(s, (0, cout_p - Cout)).reshape(1, cout_p).astype(jnp.float32)
    shift2d = jnp.pad(shift, (0, cout_p - Cout)).reshape(1, cout_p).astype(jnp.float32)

    # ---- VMEM budget (inputs double-buffered by BlockSpec) ----
    dt_size = np.dtype(compute_dtype).itemsize
    x_blk = (H + 2) * (W + 2) * cin_p * dt_size
    w_blk = 16 * cin_p * cout_p * dt_size
    out_blk = hs * W * cout_p * 4
    vmem_need = 2 * x_blk + w_blk + 8 * out_blk + out_blk + (2 << 20)
    vmem_limit = int(min(max(vmem_need, 32 << 20), 96 << 20))

    out_spec = pl.BlockSpec((1, hs, W, cout_p), lambda n, t: (n, t, 0, 0))
    out_sds = jax.ShapeDtypeStruct((N, H, W, cout_p), jnp.float32)

    grid_spec = pltpu.PrefetchScalarGridSpec(
        num_scalar_prefetch=0,
        grid=(N, n_tiles),
        in_specs=[
            # full padded source image per batch element; constant across row
            # tiles -> stays VMEM-resident, re-DMA'd only when n changes.
            pl.BlockSpec((1, H + 2, W + 2, cin_p), lambda n, t: (n, 0, 0, 0)),
            pl.BlockSpec((16, cin_p, cout_p), lambda n, t: (0, 0, 0)),
            pl.BlockSpec((1, cout_p), lambda n, t: (0, 0)),
            pl.BlockSpec((1, cout_p), lambda n, t: (0, 0)),
        ],
        out_specs=(out_spec, out_spec, out_spec, out_spec),
        scratch_shapes=[pltpu.VMEM((hs * W, cout_p), jnp.float32)],
    )

    y_ee, y_eo, y_oe, y_oo = pl.pallas_call(
        upconv_kernel,
        grid_spec=grid_spec,
        out_shape=(out_sds, out_sds, out_sds, out_sds),
        compiler_params=pltpu.CompilerParams(
            dimension_semantics=("parallel", "parallel"),
            vmem_limit_bytes=vmem_limit),
    )(xp, w_sub, scale2d, shift2d)

    # interleave parity planes -> (N, 2H, 2W, Cout) -> NCHW (single XLA copy pass)
    rows_e = jnp.stack([y_ee, y_eo], axis=3)           # (N, H, W, 2, Cp)
    rows_o = jnp.stack([y_oe, y_oo], axis=3)
    out = jnp.stack([rows_e, rows_o], axis=2)          # (N, H, 2, W, 2, Cp)
    out = out.reshape(N, 2 * H, 2 * W, cout_p)[..., :Cout]
    return jnp.transpose(out, (0, 3, 1, 2))            # NHWC -> NCHW


if __name__ == "__main__":
    key = jax.random.PRNGKey(0)
    kx, kw, kb, kg, kbe, km, kv = jax.random.split(key, 7)

    N, Cin, Cout, H, W = 2, 4, 8, 16, 16
    x = jax.random.normal(kx, (N, Cin, H, W), jnp.float32)
    conv_w = jax.random.normal(kw, (Cout, Cin, 3, 3), jnp.float32) * 0.1
    conv_b = jax.random.normal(kb, (Cout,), jnp.float32) * 0.1
    gamma = 1.0 + jax.random.normal(kg, (Cout,), jnp.float32) * 0.1
    beta = jax.random.normal(kbe, (Cout,), jnp.float32) * 0.1
    mean = jax.random.normal(km, (Cout,), jnp.float32) * 0.1
    var = jax.random.uniform(kv, (Cout,), jnp.float32, 0.5, 1.5)

    # Pure-JAX reference of UpConv.forward (eval-mode BN).
    xu = jnp.repeat(jnp.repeat(x, 2, axis=2), 2, axis=3)
    ref = jax.lax.conv_general_dilated(
        xu, conv_w, window_strides=(1, 1), padding=((1, 1), (1, 1)),
        dimension_numbers=("NCHW", "OIHW", "NCHW"))
    ref = ref + conv_b.reshape(1, Cout, 1, 1)
    ref = (ref - mean.reshape(1, Cout, 1, 1)) / jnp.sqrt(
        var.reshape(1, Cout, 1, 1) + 1e-5)
    ref = ref * gamma.reshape(1, Cout, 1, 1) + beta.reshape(1, Cout, 1, 1)
    ref = np.asarray(jax.block_until_ready(jnp.maximum(ref, 0.0)))

    # f32 path, exercising the (batch, row-tile) grid: grid = (2, 4)
    out = upconv_forward(x, conv_w, conv_b, gamma, beta, mean, var,
                         row_tile=4, compute_dtype=jnp.float32)
    out = np.asarray(jax.block_until_ready(out))
    assert out.shape == (N, Cout, 2 * H, 2 * W)
    np.testing.assert_allclose(out, ref, atol=1e-3, rtol=1e-3)

    # bf16 activations/weights with f32 accumulation, different row tile
    out_bf16 = upconv_forward(x, conv_w, conv_b, gamma, beta, mean, var,
                              row_tile=8, compute_dtype=jnp.bfloat16)
    out_bf16 = np.asarray(jax.block_until_ready(out_bf16))
    np.testing.assert_allclose(out_bf16, ref, atol=5e-2, rtol=5e-2)

    print("KERNEL_OK")
</pallas_src>

<mosaic_0001>
module attributes {stable_mosaic.version = 11 : i64} {
  func.func @upconv_kernel(%arg0: i32, %arg1: i32, %arg2: memref<1x18x18x128xf32, #tpu.memory_space<vmem>>, %arg3: memref<16x128x128xf32, #tpu.memory_space<vmem>>, %arg4: memref<1x128xf32, #tpu.memory_space<vmem>>, %arg5: memref<1x128xf32, #tpu.memory_space<vmem>>, %arg6: memref<1x4x16x128xf32, #tpu.memory_space<vmem>>, %arg7: memref<1x4x16x128xf32, #tpu.memory_space<vmem>>, %arg8: memref<1x4x16x128xf32, #tpu.memory_space<vmem>>, %arg9: memref<1x4x16x128xf32, #tpu.memory_space<vmem>>, %arg10: memref<64x128xf32, #tpu.memory_space<vmem>>) attributes {dimension_semantics = [#tpu.dimension_semantics<parallel>, #tpu.dimension_semantics<parallel>], iteration_bounds = array<i64: 2, 4>, scalar_prefetch = 0 : i64, scratch_operands = 1 : i64, tpu.core_type = #tpu.core_type<tc>, window_params = [{transform_indices = @transform_0, window_bounds = array<i64: 1, 18, 18, 128>}, {pipeline_mode = #tpu.pipeline_mode<synchronous>, transform_indices = @transform_1, window_bounds = array<i64: 16, 128, 128>}, {pipeline_mode = #tpu.pipeline_mode<synchronous>, transform_indices = @transform_2, window_bounds = array<i64: 1, 128>}, {pipeline_mode = #tpu.pipeline_mode<synchronous>, transform_indices = @transform_3, window_bounds = array<i64: 1, 128>}, {transform_indices = @transform_4, window_bounds = array<i64: 1, 4, 16, 128>}, {transform_indices = @transform_5, window_bounds = array<i64: 1, 4, 16, 128>}, {transform_indices = @transform_6, window_bounds = array<i64: 1, 4, 16, 128>}, {transform_indices = @transform_7, window_bounds = array<i64: 1, 4, 16, 128>}]} {
    %c4_i32 = arith.constant 4 : i32
    %0 = arith.muli %arg1, %c4_i32 : i32
    %1 = tpu.assume_multiple %0, 4 : i32
    %c0 = arith.constant 0 : index
    %c0_0 = arith.constant 0 : index
    %2 = vector.load %arg4[%c0, %c0_0] : memref<1x128xf32, #tpu.memory_space<vmem>>, vector<1x128xf32>
    %c0_1 = arith.constant 0 : index
    %c0_2 = arith.constant 0 : index
    %3 = vector.load %arg5[%c0_1, %c0_2] : memref<1x128xf32, #tpu.memory_space<vmem>>, vector<1x128xf32>
    %c0_i32 = arith.constant 0 : i32
    %4 = arith.addi %1, %c0_i32 : i32
    %c0_i32_3 = arith.constant 0 : i32
    %5 = arith.addi %4, %c0_i32_3 : i32
    %c0_4 = arith.constant 0 : index
    %6 = arith.index_cast %5 : i32 to index
    %c0_5 = arith.constant 0 : index
    %c0_6 = arith.constant 0 : index
    %7 = vector.load %arg2[%c0_4, %6, %c0_5, %c0_6] : memref<1x18x18x128xf32, #tpu.memory_space<vmem>>, vector<1x4x16x128xf32>
    %8 = vector.shape_cast %7 : vector<1x4x16x128xf32> to vector<4x16x128xf32>
    %9 = vector.shape_cast %8 : vector<4x16x128xf32> to vector<64x128xf32>
    %c0_7 = arith.constant 0 : index
    %c0_8 = arith.constant 0 : index
    %c0_9 = arith.constant 0 : index
    %10 = vector.load %arg3[%c0_7, %c0_8, %c0_9] : memref<16x128x128xf32, #tpu.memory_space<vmem>>, vector<1x128x128xf32>
    %11 = vector.shape_cast %10 : vector<1x128x128xf32> to vector<128x128xf32>
    %cst = arith.constant dense<0.000000e+00> : vector<64x128xf32>
    %12 = tpu.matmul %9, %11, %cst {dimension_numbers = #tpu.dot_dimension_numbers<[1], [0], [0], [1], [0, 0, 1, 1], [], []>} : vector<64x128xf32>, vector<128x128xf32>, vector<64x128xf32> -> vector<64x128xf32>
    %c0_10 = arith.constant 0 : index
    %c0_11 = arith.constant 0 : index
    %13 = vector.load %arg10[%c0_10, %c0_11] : memref<64x128xf32, #tpu.memory_space<vmem>>, vector<64x128xf32>
    tpu.vector_store %arg10[%c0_10, %c0_11], %12 {strides = array<i32>} : memref<64x128xf32, #tpu.memory_space<vmem>>, vector<64x128xf32>,
    %c0_i32_12 = arith.constant 0 : i32
    %14 = arith.addi %1, %c0_i32_12 : i32
    %c0_i32_13 = arith.constant 0 : i32
    %15 = arith.addi %14, %c0_i32_13 : i32
    %c0_14 = arith.constant 0 : index
    %16 = arith.index_cast %15 : i32 to index
    %c1 = arith.constant 1 : index
    %c0_15 = arith.constant 0 : index
    %17 = vector.load %arg2[%c0_14, %16, %c1, %c0_15] : memref<1x18x18x128xf32, #tpu.memory_space<vmem>>, vector<1x4x16x128xf32>
    %18 = vector.shape_cast %17 : vector<1x4x16x128xf32> to vector<4x16x128xf32>
    %19 = vector.shape_cast %18 : vector<4x16x128xf32> to vector<64x128xf32>
    %c1_16 = arith.constant 1 : index
    %c0_17 = arith.constant 0 : index
    %c0_18 = arith.constant 0 : index
    %20 = vector.load %arg3[%c1_16, %c0_17, %c0_18] : memref<16x128x128xf32, #tpu.memory_space<vmem>>, vector<1x128x128xf32>
    %21 = vector.shape_cast %20 : vector<1x128x128xf32> to vector<128x128xf32>
    %cst_19 = arith.constant dense<0.000000e+00> : vector<64x128xf32>
    %22 = tpu.matmul %19, %21, %cst_19 {dimension_numbers = #tpu.dot_dimension_numbers<[1], [0], [0], [1], [0, 0, 1, 1], [], []>} : vector<64x128xf32>, vector<128x128xf32>, vector<64x128xf32> -> vector<64x128xf32>
    %c0_20 = arith.constant 0 : index
    %c0_21 = arith.constant 0 : index
    %23 = vector.load %arg10[%c0_20, %c0_21] : memref<64x128xf32, #tpu.memory_space<vmem>>, vector<64x128xf32>
    %24 = arith.addf %23, %22 : vector<64x128xf32>
    %c0_22 = arith.constant 0 : index
    %c0_23 = arith.constant 0 : index
    %25 = vector.load %arg10[%c0_22, %c0_23] : memref<64x128xf32, #tpu.memory_space<vmem>>, vector<64x128xf32>
    tpu.vector_store %arg10[%c0_22, %c0_23], %24 {strides = array<i32>} : memref<64x128xf32, #tpu.memory_space<vmem>>, vector<64x128xf32>,
    %c0_i32_24 = arith.constant 0 : i32
    %26 = arith.addi %1, %c0_i32_24 : i32
    %c1_i32 = arith.constant 1 : i32
    %27 = arith.addi %26, %c1_i32 : i32
    %c0_25 = arith.constant 0 : index
    %28 = arith.index_cast %27 : i32 to index
    %c0_26 = arith.constant 0 : index
    %c0_27 = arith.constant 0 : index
    %29 = vector.load %arg2[%c0_25, %28, %c0_26, %c0_27] : memref<1x18x18x128xf32, #tpu.memory_space<vmem>>, vector<1x4x16x128xf32>
    %30 = vector.shape_cast %29 : vector<1x4x16x128xf32> to vector<4x16x128xf32>
    %31 = vector.shape_cast %30 : vector<4x16x128xf32> to vector<64x128xf32>
    %c2 = arith.constant 2 : index
    %c0_28 = arith.constant 0 : index
    %c0_29 = arith.constant 0 : index
    %32 = vector.load %arg3[%c2, %c0_28, %c0_29] : memref<16x128x128xf32, #tpu.memory_space<vmem>>, vector<1x128x128xf32>
    %33 = vector.shape_cast %32 : vector<1x128x128xf32> to vector<128x128xf32>
    %cst_30 = arith.constant dense<0.000000e+00> : vector<64x128xf32>
    %34 = tpu.matmul %31, %33, %cst_30 {dimension_numbers = #tpu.dot_dimension_numbers<[1], [0], [0], [1], [0, 0, 1, 1], [], []>} : vector<64x128xf32>, vector<128x128xf32>, vector<64x128xf32> -> vector<64x128xf32>
    %c0_31 = arith.constant 0 : index
    %c0_32 = arith.constant 0 : index
    %35 = vector.load %arg10[%c0_31, %c0_32] : memref<64x128xf32, #tpu.memory_space<vmem>>, vector<64x128xf32>
    %36 = arith.addf %35, %34 : vector<64x128xf32>
    %c0_33 = arith.constant 0 : index
    %c0_34 = arith.constant 0 : index
    %37 = vector.load %arg10[%c0_33, %c0_34] : memref<64x128xf32, #tpu.memory_space<vmem>>, vector<64x128xf32>
    tpu.vector_store %arg10[%c0_33, %c0_34], %36 {strides = array<i32>} : memref<64x128xf32, #tpu.memory_space<vmem>>, vector<64x128xf32>,
    %c0_i32_35 = arith.constant 0 : i32
    %38 = arith.addi %1, %c0_i32_35 : i32
    %c1_i32_36 = arith.constant 1 : i32
    %39 = arith.addi %38, %c1_i32_36 : i32
    %c0_37 = arith.constant 0 : index
    %40 = arith.index_cast %39 : i32 to index
    %c1_38 = arith.constant 1 : index
    %c0_39 = arith.constant 0 : index
    %41 = vector.load %arg2[%c0_37, %40, %c1_38, %c0_39] : memref<1x18x18x128xf32, #tpu.memory_space<vmem>>, vector<1x4x16x128xf32>
    %42 = vector.shape_cast %41 : vector<1x4x16x128xf32> to vector<4x16x128xf32>
    %43 = vector.shape_cast %42 : vector<4x16x128xf32> to vector<64x128xf32>
    %c3 = arith.constant 3 : index
    %c0_40 = arith.constant 0 : index
    %c0_41 = arith.constant 0 : index
    %44 = vector.load %arg3[%c3, %c0_40, %c0_41] : memref<16x128x128xf32, #tpu.memory_space<vmem>>, vector<1x128x128xf32>
    %45 = vector.shape_cast %44 : vector<1x128x128xf32> to vector<128x128xf32>
    %cst_42 = arith.constant dense<0.000000e+00> : vector<64x128xf32>
    %46 = tpu.matmul %43, %45, %cst_42 {dimension_numbers = #tpu.dot_dimension_numbers<[1], [0], [0], [1], [0, 0, 1, 1], [], []>} : vector<64x128xf32>, vector<128x128xf32>, vector<64x128xf32> -> vector<64x128xf32>
    %c0_43 = arith.constant 0 : index
    %c0_44 = arith.constant 0 : index
    %47 = vector.load %arg10[%c0_43, %c0_44] : memref<64x128xf32, #tpu.memory_space<vmem>>, vector<64x128xf32>
    %48 = arith.addf %47, %46 : vector<64x128xf32>
    %c0_45 = arith.constant 0 : index
    %c0_46 = arith.constant 0 : index
    %49 = vector.load %arg10[%c0_45, %c0_46] : memref<64x128xf32, #tpu.memory_space<vmem>>, vector<64x128xf32>
    tpu.vector_store %arg10[%c0_45, %c0_46], %48 {strides = array<i32>} : memref<64x128xf32, #tpu.memory_space<vmem>>, vector<64x128xf32>,
    %c0_47 = arith.constant 0 : index
    %c0_48 = arith.constant 0 : index
    %50 = vector.load %arg10[%c0_47, %c0_48] : memref<64x128xf32, #tpu.memory_space<vmem>>, vector<64x128xf32>
    %51 = vector.broadcast %2 : vector<1x128xf32> to vector<64x128xf32>
    %52 = arith.mulf %50, %51 : vector<64x128xf32>
    %53 = vector.broadcast %3 : vector<1x128xf32> to vector<64x128xf32>
    %54 = arith.addf %52, %53 : vector<64x128xf32>
    %cst_49 = arith.constant 0.000000e+00 : f32
    %55 = vector.broadcast %cst_49 : f32 to vector<64x128xf32>
    %56 = arith.maximumf %54, %55 : vector<64x128xf32>
    %57 = vector.shape_cast %56 : vector<64x128xf32> to vector<4x16x128xf32>
    %c0_50 = arith.constant 0 : index
    %c0_51 = arith.constant 0 : index
    %c0_52 = arith.constant 0 : index
    %c0_53 = arith.constant 0 : index
    %58 = vector.load %arg6[%c0_50, %c0_51, %c0_52, %c0_53] : memref<1x4x16x128xf32, #tpu.memory_space<vmem>>, vector<1x4x16x128xf32>
    %59 = vector.shape_cast %58 : vector<1x4x16x128xf32> to vector<4x16x128xf32>
    %60 = vector.shape_cast %57 : vector<4x16x128xf32> to vector<1x4x16x128xf32>
    tpu.vector_store %arg6[%c0_50, %c0_51, %c0_52, %c0_53], %60 {strides = array<i32>} : memref<1x4x16x128xf32, #tpu.memory_space<vmem>>, vector<1x4x16x128xf32>,
    %c0_i32_54 = arith.constant 0 : i32
    %61 = arith.addi %1, %c0_i32_54 : i32
    %c0_i32_55 = arith.constant 0 : i32
    %62 = arith.addi %61, %c0_i32_55 : i32
    %c0_56 = arith.constant 0 : index
    %63 = arith.index_cast %62 : i32 to index
    %c1_57 = arith.constant 1 : index
    %c0_58 = arith.constant 0 : index
    %64 = vector.load %arg2[%c0_56, %63, %c1_57, %c0_58] : memref<1x18x18x128xf32, #tpu.memory_space<vmem>>, vector<1x4x16x128xf32>
    %65 = vector.shape_cast %64 : vector<1x4x16x128xf32> to vector<4x16x128xf32>
    %66 = vector.shape_cast %65 : vector<4x16x128xf32> to vector<64x128xf32>
    %c4 = arith.constant 4 : index
    %c0_59 = arith.constant 0 : index
    %c0_60 = arith.constant 0 : index
    %67 = vector.load %arg3[%c4, %c0_59, %c0_60] : memref<16x128x128xf32, #tpu.memory_space<vmem>>, vector<1x128x128xf32>
    %68 = vector.shape_cast %67 : vector<1x128x128xf32> to vector<128x128xf32>
    %cst_61 = arith.constant dense<0.000000e+00> : vector<64x128xf32>
    %69 = tpu.matmul %66, %68, %cst_61 {dimension_numbers = #tpu.dot_dimension_numbers<[1], [0], [0], [1], [0, 0, 1, 1], [], []>} : vector<64x128xf32>, vector<128x128xf32>, vector<64x128xf32> -> vector<64x128xf32>
    %c0_62 = arith.constant 0 : index
    %c0_63 = arith.constant 0 : index
    %70 = vector.load %arg10[%c0_62, %c0_63] : memref<64x128xf32, #tpu.memory_space<vmem>>, vector<64x128xf32>
    tpu.vector_store %arg10[%c0_62, %c0_63], %69 {strides = array<i32>} : memref<64x128xf32, #tpu.memory_space<vmem>>, vector<64x128xf32>,
    %c0_i32_64 = arith.constant 0 : i32
    %71 = arith.addi %1, %c0_i32_64 : i32
    %c0_i32_65 = arith.constant 0 : i32
    %72 = arith.addi %71, %c0_i32_65 : i32
    %c0_66 = arith.constant 0 : index
    %73 = arith.index_cast %72 : i32 to index
    %c2_67 = arith.constant 2 : index
    %c0_68 = arith.constant 0 : index
    %74 = vector.load %arg2[%c0_66, %73, %c2_67, %c0_68] : memref<1x18x18x128xf32, #tpu.memory_space<vmem>>, vector<1x4x16x128xf32>
    %75 = vector.shape_cast %74 : vector<1x4x16x128xf32> to vector<4x16x128xf32>
    %76 = vector.shape_cast %75 : vector<4x16x128xf32> to vector<64x128xf32>
    %c5 = arith.constant 5 : index
    %c0_69 = arith.constant 0 : index
    %c0_70 = arith.constant 0 : index
    %77 = vector.load %arg3[%c5, %c0_69, %c0_70] : memref<16x128x128xf32, #tpu.memory_space<vmem>>, vector<1x128x128xf32>
    %78 = vector.shape_cast %77 : vector<1x128x128xf32> to vector<128x128xf32>
    %cst_71 = arith.constant dense<0.000000e+00> : vector<64x128xf32>
    %79 = tpu.matmul %76, %78, %cst_71 {dimension_numbers = #tpu.dot_dimension_numbers<[1], [0], [0], [1], [0, 0, 1, 1], [], []>} : vector<64x128xf32>, vector<128x128xf32>, vector<64x128xf32> -> vector<64x128xf32>
    %c0_72 = arith.constant 0 : index
    %c0_73 = arith.constant 0 : index
    %80 = vector.load %arg10[%c0_72, %c0_73] : memref<64x128xf32, #tpu.memory_space<vmem>>, vector<64x128xf32>
    %81 = arith.addf %80, %79 : vector<64x128xf32>
    %c0_74 = arith.constant 0 : index
    %c0_75 = arith.constant 0 : index
    %82 = vector.load %arg10[%c0_74, %c0_75] : memref<64x128xf32, #tpu.memory_space<vmem>>, vector<64x128xf32>
    tpu.vector_store %arg10[%c0_74, %c0_75], %81 {strides = array<i32>} : memref<64x128xf32, #tpu.memory_space<vmem>>, vector<64x128xf32>,
    %c0_i32_76 = arith.constant 0 : i32
    %83 = arith.addi %1, %c0_i32_76 : i32
    %c1_i32_77 = arith.constant 1 : i32
    %84 = arith.addi %83, %c1_i32_77 : i32
    %c0_78 = arith.constant 0 : index
    %85 = arith.index_cast %84 : i32 to index
    %c1_79 = arith.constant 1 : index
    %c0_80 = arith.constant 0 : index
    %86 = vector.load %arg2[%c0_78, %85, %c1_79, %c0_80] : memref<1x18x18x128xf32, #tpu.memory_space<vmem>>, vector<1x4x16x128xf32>
    %87 = vector.shape_cast %86 : vector<1x4x16x128xf32> to vector<4x16x128xf32>
    %88 = vector.shape_cast %87 : vector<4x16x128xf32> to vector<64x128xf32>
    %c6 = arith.constant 6 : index
    %c0_81 = arith.constant 0 : index
    %c0_82 = arith.constant 0 : index
    %89 = vector.load %arg3[%c6, %c0_81, %c0_82] : memref<16x128x128xf32, #tpu.memory_space<vmem>>, vector<1x128x128xf32>
    %90 = vector.shape_cast %89 : vector<1x128x128xf32> to vector<128x128xf32>
    %cst_83 = arith.constant dense<0.000000e+00> : vector<64x128xf32>
    %91 = tpu.matmul %88, %90, %cst_83 {dimension_numbers = #tpu.dot_dimension_numbers<[1], [0], [0], [1], [0, 0, 1, 1], [], []>} : vector<64x128xf32>, vector<128x128xf32>, vector<64x128xf32> -> vector<64x128xf32>
    %c0_84 = arith.constant 0 : index
    %c0_85 = arith.constant 0 : index
    %92 = vector.load %arg10[%c0_84, %c0_85] : memref<64x128xf32, #tpu.memory_space<vmem>>, vector<64x128xf32>
    %93 = arith.addf %92, %91 : vector<64x128xf32>
    %c0_86 = arith.constant 0 : index
    %c0_87 = arith.constant 0 : index
    %94 = vector.load %arg10[%c0_86, %c0_87] : memref<64x128xf32, #tpu.memory_space<vmem>>, vector<64x128xf32>
    tpu.vector_store %arg10[%c0_86, %c0_87], %93 {strides = array<i32>} : memref<64x128xf32, #tpu.memory_space<vmem>>, vector<64x128xf32>,
    %c0_i32_88 = arith.constant 0 : i32
    %95 = arith.addi %1, %c0_i32_88 : i32
    %c1_i32_89 = arith.constant 1 : i32
    %96 = arith.addi %95, %c1_i32_89 : i32
    %c0_90 = arith.constant 0 : index
    %97 = arith.index_cast %96 : i32 to index
    %c2_91 = arith.constant 2 : index
    %c0_92 = arith.constant 0 : index
    %98 = vector.load %arg2[%c0_90, %97, %c2_91, %c0_92] : memref<1x18x18x128xf32, #tpu.memory_space<vmem>>, vector<1x4x16x128xf32>
    %99 = vector.shape_cast %98 : vector<1x4x16x128xf32> to vector<4x16x128xf32>
    %100 = vector.shape_cast %99 : vector<4x16x128xf32> to vector<64x128xf32>
    %c7 = arith.constant 7 : index
    %c0_93 = arith.constant 0 : index
    %c0_94 = arith.constant 0 : index
    %101 = vector.load %arg3[%c7, %c0_93, %c0_94] : memref<16x128x128xf32, #tpu.memory_space<vmem>>, vector<1x128x128xf32>
    %102 = vector.shape_cast %101 : vector<1x128x128xf32> to vector<128x128xf32>
    %cst_95 = arith.constant dense<0.000000e+00> : vector<64x128xf32>
    %103 = tpu.matmul %100, %102, %cst_95 {dimension_numbers = #tpu.dot_dimension_numbers<[1], [0], [0], [1], [0, 0, 1, 1], [], []>} : vector<64x128xf32>, vector<128x128xf32>, vector<64x128xf32> -> vector<64x128xf32>
    %c0_96 = arith.constant 0 : index
    %c0_97 = arith.constant 0 : index
    %104 = vector.load %arg10[%c0_96, %c0_97] : memref<64x128xf32, #tpu.memory_space<vmem>>, vector<64x128xf32>
    %105 = arith.addf %104, %103 : vector<64x128xf32>
    %c0_98 = arith.constant 0 : index
    %c0_99 = arith.constant 0 : index
    %106 = vector.load %arg10[%c0_98, %c0_99] : memref<64x128xf32, #tpu.memory_space<vmem>>, vector<64x128xf32>
    tpu.vector_store %arg10[%c0_98, %c0_99], %105 {strides = array<i32>} : memref<64x128xf32, #tpu.memory_space<vmem>>, vector<64x128xf32>,
    %c0_100 = arith.constant 0 : index
    %c0_101 = arith.constant 0 : index
    %107 = vector.load %arg10[%c0_100, %c0_101] : memref<64x128xf32, #tpu.memory_space<vmem>>, vector<64x128xf32>
    %108 = vector.broadcast %2 : vector<1x128xf32> to vector<64x128xf32>
    %109 = arith.mulf %107, %108 : vector<64x128xf32>
    %110 = vector.broadcast %3 : vector<1x128xf32> to vector<64x128xf32>
    %111 = arith.addf %109, %110 : vector<64x128xf32>
    %cst_102 = arith.constant 0.000000e+00 : f32
    %112 = vector.broadcast %cst_102 : f32 to vector<64x128xf32>
    %113 = arith.maximumf %111, %112 : vector<64x128xf32>
    %114 = vector.shape_cast %113 : vector<64x128xf32> to vector<4x16x128xf32>
    %c0_103 = arith.constant 0 : index
    %c0_104 = arith.constant 0 : index
    %c0_105 = arith.constant 0 : index
    %c0_106 = arith.constant 0 : index
    %115 = vector.load %arg7[%c0_103, %c0_104, %c0_105, %c0_106] : memref<1x4x16x128xf32, #tpu.memory_space<vmem>>, vector<1x4x16x128xf32>
    %116 = vector.shape_cast %115 : vector<1x4x16x128xf32> to vector<4x16x128xf32>
    %117 = vector.shape_cast %114 : vector<4x16x128xf32> to vector<1x4x16x128xf32>
    tpu.vector_store %arg7[%c0_103, %c0_104, %c0_105, %c0_106], %117 {strides = array<i32>} : memref<1x4x16x128xf32, #tpu.memory_space<vmem>>, vector<1x4x16x128xf32>,
    %c1_i32_107 = arith.constant 1 : i32
    %118 = arith.addi %1, %c1_i32_107 : i32
    %c0_i32_108 = arith.constant 0 : i32
    %119 = arith.addi %118, %c0_i32_108 : i32
    %c0_109 = arith.constant 0 : index
    %120 = arith.index_cast %119 : i32 to index
    %c0_110 = arith.constant 0 : index
    %c0_111 = arith.constant 0 : index
    %121 = vector.load %arg2[%c0_109, %120, %c0_110, %c0_111] : memref<1x18x18x128xf32, #tpu.memory_space<vmem>>, vector<1x4x16x128xf32>
    %122 = vector.shape_cast %121 : vector<1x4x16x128xf32> to vector<4x16x128xf32>
    %123 = vector.shape_cast %122 : vector<4x16x128xf32> to vector<64x128xf32>
    %c8 = arith.constant 8 : index
    %c0_112 = arith.constant 0 : index
    %c0_113 = arith.constant 0 : index
    %124 = vector.load %arg3[%c8, %c0_112, %c0_113] : memref<16x128x128xf32, #tpu.memory_space<vmem>>, vector<1x128x128xf32>
    %125 = vector.shape_cast %124 : vector<1x128x128xf32> to vector<128x128xf32>
    %cst_114 = arith.constant dense<0.000000e+00> : vector<64x128xf32>
    %126 = tpu.matmul %123, %125, %cst_114 {dimension_numbers = #tpu.dot_dimension_numbers<[1], [0], [0], [1], [0, 0, 1, 1], [], []>} : vector<64x128xf32>, vector<128x128xf32>, vector<64x128xf32> -> vector<64x128xf32>
    %c0_115 = arith.constant 0 : index
    %c0_116 = arith.constant 0 : index
    %127 = vector.load %arg10[%c0_115, %c0_116] : memref<64x128xf32, #tpu.memory_space<vmem>>, vector<64x128xf32>
    tpu.vector_store %arg10[%c0_115, %c0_116], %126 {strides = array<i32>} : memref<64x128xf32, #tpu.memory_space<vmem>>, vector<64x128xf32>,
    %c1_i32_117 = arith.constant 1 : i32
    %128 = arith.addi %1, %c1_i32_117 : i32
    %c0_i32_118 = arith.constant 0 : i32
    %129 = arith.addi %128, %c0_i32_118 : i32
    %c0_119 = arith.constant 0 : index
    %130 = arith.index_cast %129 : i32 to index
    %c1_120 = arith.constant 1 : index
    %c0_121 = arith.constant 0 : index
    %131 = vector.load %arg2[%c0_119, %130, %c1_120, %c0_121] : memref<1x18x18x128xf32, #tpu.memory_space<vmem>>, vector<1x4x16x128xf32>
    %132 = vector.shape_cast %131 : vector<1x4x16x128xf32> to vector<4x16x128xf32>
    %133 = vector.shape_cast %132 : vector<4x16x128xf32> to vector<64x128xf32>
    %c9 = arith.constant 9 : index
    %c0_122 = arith.constant 0 : index
    %c0_123 = arith.constant 0 : index
    %134 = vector.load %arg3[%c9, %c0_122, %c0_123] : memref<16x128x128xf32, #tpu.memory_space<vmem>>, vector<1x128x128xf32>
    %135 = vector.shape_cast %134 : vector<1x128x128xf32> to vector<128x128xf32>
    %cst_124 = arith.constant dense<0.000000e+00> : vector<64x128xf32>
    %136 = tpu.matmul %133, %135, %cst_124 {dimension_numbers = #tpu.dot_dimension_numbers<[1], [0], [0], [1], [0, 0, 1, 1], [], []>} : vector<64x128xf32>, vector<128x128xf32>, vector<64x128xf32> -> vector<64x128xf32>
    %c0_125 = arith.constant 0 : index
    %c0_126 = arith.constant 0 : index
    %137 = vector.load %arg10[%c0_125, %c0_126] : memref<64x128xf32, #tpu.memory_space<vmem>>, vector<64x128xf32>
    %138 = arith.addf %137, %136 : vector<64x128xf32>
    %c0_127 = arith.constant 0 : index
    %c0_128 = arith.constant 0 : index
    %139 = vector.load %arg10[%c0_127, %c0_128] : memref<64x128xf32, #tpu.memory_space<vmem>>, vector<64x128xf32>
    tpu.vector_store %arg10[%c0_127, %c0_128], %138 {strides = array<i32>} : memref<64x128xf32, #tpu.memory_space<vmem>>, vector<64x128xf32>,
    %c1_i32_129 = arith.constant 1 : i32
    %140 = arith.addi %1, %c1_i32_129 : i32
    %c1_i32_130 = arith.constant 1 : i32
    %141 = arith.addi %140, %c1_i32_130 : i32
    %c0_131 = arith.constant 0 : index
    %142 = arith.index_cast %141 : i32 to index
    %c0_132 = arith.constant 0 : index
    %c0_133 = arith.constant 0 : index
    %143 = vector.load %arg2[%c0_131, %142, %c0_132, %c0_133] : memref<1x18x18x128xf32, #tpu.memory_space<vmem>>, vector<1x4x16x128xf32>
    %144 = vector.shape_cast %143 : vector<1x4x16x128xf32> to vector<4x16x128xf32>
    %145 = vector.shape_cast %144 : vector<4x16x128xf32> to vector<64x128xf32>
    %c10 = arith.constant 10 : index
    %c0_134 = arith.constant 0 : index
    %c0_135 = arith.constant 0 : index
    %146 = vector.load %arg3[%c10, %c0_134, %c0_135] : memref<16x128x128xf32, #tpu.memory_space<vmem>>, vector<1x128x128xf32>
    %147 = vector.shape_cast %146 : vector<1x128x128xf32> to vector<128x128xf32>
    %cst_136 = arith.constant dense<0.000000e+00> : vector<64x128xf32>
    %148 = tpu.matmul %145, %147, %cst_136 {dimension_numbers = #tpu.dot_dimension_numbers<[1], [0], [0], [1], [0, 0, 1, 1], [], []>} : vector<64x128xf32>, vector<128x128xf32>, vector<64x128xf32> -> vector<64x128xf32>
    %c0_137 = arith.constant 0 : index
    %c0_138 = arith.constant 0 : index
    %149 = vector.load %arg10[%c0_137, %c0_138] : memref<64x128xf32, #tpu.memory_space<vmem>>, vector<64x128xf32>
    %150 = arith.addf %149, %148 : vector<64x128xf32>
    %c0_139 = arith.constant 0 : index
    %c0_140 = arith.constant 0 : index
    %151 = vector.load %arg10[%c0_139, %c0_140] : memref<64x128xf32, #tpu.memory_space<vmem>>, vector<64x128xf32>
    tpu.vector_store %arg10[%c0_139, %c0_140], %150 {strides = array<i32>} : memref<64x128xf32, #tpu.memory_space<vmem>>, vector<64x128xf32>,
    %c1_i32_141 = arith.constant 1 : i32
    %152 = arith.addi %1, %c1_i32_141 : i32
    %c1_i32_142 = arith.constant 1 : i32
    %153 = arith.addi %152, %c1_i32_142 : i32
    %c0_143 = arith.constant 0 : index
    %154 = arith.index_cast %153 : i32 to index
    %c1_144 = arith.constant 1 : index
    %c0_145 = arith.constant 0 : index
    %155 = vector.load %arg2[%c0_143, %154, %c1_144, %c0_145] : memref<1x18x18x128xf32, #tpu.memory_space<vmem>>, vector<1x4x16x128xf32>
    %156 = vector.shape_cast %155 : vector<1x4x16x128xf32> to vector<4x16x128xf32>
    %157 = vector.shape_cast %156 : vector<4x16x128xf32> to vector<64x128xf32>
    %c11 = arith.constant 11 : index
    %c0_146 = arith.constant 0 : index
    %c0_147 = arith.constant 0 : index
    %158 = vector.load %arg3[%c11, %c0_146, %c0_147] : memref<16x128x128xf32, #tpu.memory_space<vmem>>, vector<1x128x128xf32>
    %159 = vector.shape_cast %158 : vector<1x128x128xf32> to vector<128x128xf32>
    %cst_148 = arith.constant dense<0.000000e+00> : vector<64x128xf32>
    %160 = tpu.matmul %157, %159, %cst_148 {dimension_numbers = #tpu.dot_dimension_numbers<[1], [0], [0], [1], [0, 0, 1, 1], [], []>} : vector<64x128xf32>, vector<128x128xf32>, vector<64x128xf32> -> vector<64x128xf32>
    %c0_149 = arith.constant 0 : index
    %c0_150 = arith.constant 0 : index
    %161 = vector.load %arg10[%c0_149, %c0_150] : memref<64x128xf32, #tpu.memory_space<vmem>>, vector<64x128xf32>
    %162 = arith.addf %161, %160 : vector<64x128xf32>
    %c0_151 = arith.constant 0 : index
    %c0_152 = arith.constant 0 : index
    %163 = vector.load %arg10[%c0_151, %c0_152] : memref<64x128xf32, #tpu.memory_space<vmem>>, vector<64x128xf32>
    tpu.vector_store %arg10[%c0_151, %c0_152], %162 {strides = array<i32>} : memref<64x128xf32, #tpu.memory_space<vmem>>, vector<64x128xf32>,
    %c0_153 = arith.constant 0 : index
    %c0_154 = arith.constant 0 : index
    %164 = vector.load %arg10[%c0_153, %c0_154] : memref<64x128xf32, #tpu.memory_space<vmem>>, vector<64x128xf32>
    %165 = vector.broadcast %2 : vector<1x128xf32> to vector<64x128xf32>
    %166 = arith.mulf %164, %165 : vector<64x128xf32>
    %167 = vector.broadcast %3 : vector<1x128xf32> to vector<64x128xf32>
    %168 = arith.addf %166, %167 : vector<64x128xf32>
    %cst_155 = arith.constant 0.000000e+00 : f32
    %169 = vector.broadcast %cst_155 : f32 to vector<64x128xf32>
    %170 = arith.maximumf %168, %169 : vector<64x128xf32>
    %171 = vector.shape_cast %170 : vector<64x128xf32> to vector<4x16x128xf32>
    %c0_156 = arith.constant 0 : index
    %c0_157 = arith.constant 0 : index
    %c0_158 = arith.constant 0 : index
    %c0_159 = arith.constant 0 : index
    %172 = vector.load %arg8[%c0_156, %c0_157, %c0_158, %c0_159] : memref<1x4x16x128xf32, #tpu.memory_space<vmem>>, vector<1x4x16x128xf32>
    %173 = vector.shape_cast %172 : vector<1x4x16x128xf32> to vector<4x16x128xf32>
    %174 = vector.shape_cast %171 : vector<4x16x128xf32> to vector<1x4x16x128xf32>
    tpu.vector_store %arg8[%c0_156, %c0_157, %c0_158, %c0_159], %174 {strides = array<i32>} : memref<1x4x16x128xf32, #tpu.memory_space<vmem>>, vector<1x4x16x128xf32>,
    %c1_i32_160 = arith.constant 1 : i32
    %175 = arith.addi %1, %c1_i32_160 : i32
    %c0_i32_161 = arith.constant 0 : i32
    %176 = arith.addi %175, %c0_i32_161 : i32
    %c0_162 = arith.constant 0 : index
    %177 = arith.index_cast %176 : i32 to index
    %c1_163 = arith.constant 1 : index
    %c0_164 = arith.constant 0 : index
    %178 = vector.load %arg2[%c0_162, %177, %c1_163, %c0_164] : memref<1x18x18x128xf32, #tpu.memory_space<vmem>>, vector<1x4x16x128xf32>
    %179 = vector.shape_cast %178 : vector<1x4x16x128xf32> to vector<4x16x128xf32>
    %180 = vector.shape_cast %179 : vector<4x16x128xf32> to vector<64x128xf32>
    %c12 = arith.constant 12 : index
    %c0_165 = arith.constant 0 : index
    %c0_166 = arith.constant 0 : index
    %181 = vector.load %arg3[%c12, %c0_165, %c0_166] : memref<16x128x128xf32, #tpu.memory_space<vmem>>, vector<1x128x128xf32>
    %182 = vector.shape_cast %181 : vector<1x128x128xf32> to vector<128x128xf32>
    %cst_167 = arith.constant dense<0.000000e+00> : vector<64x128xf32>
    %183 = tpu.matmul %180, %182, %cst_167 {dimension_numbers = #tpu.dot_dimension_numbers<[1], [0], [0], [1], [0, 0, 1, 1], [], []>} : vector<64x128xf32>, vector<128x128xf32>, vector<64x128xf32> -> vector<64x128xf32>
    %c0_168 = arith.constant 0 : index
    %c0_169 = arith.constant 0 : index
    %184 = vector.load %arg10[%c0_168, %c0_169] : memref<64x128xf32, #tpu.memory_space<vmem>>, vector<64x128xf32>
    tpu.vector_store %arg10[%c0_168, %c0_169], %183 {strides = array<i32>} : memref<64x128xf32, #tpu.memory_space<vmem>>, vector<64x128xf32>,
    %c1_i32_170 = arith.constant 1 : i32
    %185 = arith.addi %1, %c1_i32_170 : i32
    %c0_i32_171 = arith.constant 0 : i32
    %186 = arith.addi %185, %c0_i32_171 : i32
    %c0_172 = arith.constant 0 : index
    %187 = arith.index_cast %186 : i32 to index
    %c2_173 = arith.constant 2 : index
    %c0_174 = arith.constant 0 : index
    %188 = vector.load %arg2[%c0_172, %187, %c2_173, %c0_174] : memref<1x18x18x128xf32, #tpu.memory_space<vmem>>, vector<1x4x16x128xf32>
    %189 = vector.shape_cast %188 : vector<1x4x16x128xf32> to vector<4x16x128xf32>
    %190 = vector.shape_cast %189 : vector<4x16x128xf32> to vector<64x128xf32>
    %c13 = arith.constant 13 : index
    %c0_175 = arith.constant 0 : index
    %c0_176 = arith.constant 0 : index
    %191 = vector.load %arg3[%c13, %c0_175, %c0_176] : memref<16x128x128xf32, #tpu.memory_space<vmem>>, vector<1x128x128xf32>
    %192 = vector.shape_cast %191 : vector<1x128x128xf32> to vector<128x128xf32>
    %cst_177 = arith.constant dense<0.000000e+00> : vector<64x128xf32>
    %193 = tpu.matmul %190, %192, %cst_177 {dimension_numbers = #tpu.dot_dimension_numbers<[1], [0], [0], [1], [0, 0, 1, 1], [], []>} : vector<64x128xf32>, vector<128x128xf32>, vector<64x128xf32> -> vector<64x128xf32>
    %c0_178 = arith.constant 0 : index
    %c0_179 = arith.constant 0 : index
    %194 = vector.load %arg10[%c0_178, %c0_179] : memref<64x128xf32, #tpu.memory_space<vmem>>, vector<64x128xf32>
    %195 = arith.addf %194, %193 : vector<64x128xf32>
    %c0_180 = arith.constant 0 : index
    %c0_181 = arith.constant 0 : index
    %196 = vector.load %arg10[%c0_180, %c0_181] : memref<64x128xf32, #tpu.memory_space<vmem>>, vector<64x128xf32>
    tpu.vector_store %arg10[%c0_180, %c0_181], %195 {strides = array<i32>} : memref<64x128xf32, #tpu.memory_space<vmem>>, vector<64x128xf32>,
    %c1_i32_182 = arith.constant 1 : i32
    %197 = arith.addi %1, %c1_i32_182 : i32
    %c1_i32_183 = arith.constant 1 : i32
    %198 = arith.addi %197, %c1_i32_183 : i32
    %c0_184 = arith.constant 0 : index
    %199 = arith.index_cast %198 : i32 to index
    %c1_185 = arith.constant 1 : index
    %c0_186 = arith.constant 0 : index
    %200 = vector.load %arg2[%c0_184, %199, %c1_185, %c0_186] : memref<1x18x18x128xf32, #tpu.memory_space<vmem>>, vector<1x4x16x128xf32>
    %201 = vector.shape_cast %200 : vector<1x4x16x128xf32> to vector<4x16x128xf32>
    %202 = vector.shape_cast %201 : vector<4x16x128xf32> to vector<64x128xf32>
    %c14 = arith.constant 14 : index
    %c0_187 = arith.constant 0 : index
    %c0_188 = arith.constant 0 : index
    %203 = vector.load %arg3[%c14, %c0_187, %c0_188] : memref<16x128x128xf32, #tpu.memory_space<vmem>>, vector<1x128x128xf32>
    %204 = vector.shape_cast %203 : vector<1x128x128xf32> to vector<128x128xf32>
    %cst_189 = arith.constant dense<0.000000e+00> : vector<64x128xf32>
    %205 = tpu.matmul %202, %204, %cst_189 {dimension_numbers = #tpu.dot_dimension_numbers<[1], [0], [0], [1], [0, 0, 1, 1], [], []>} : vector<64x128xf32>, vector<128x128xf32>, vector<64x128xf32> -> vector<64x128xf32>
    %c0_190 = arith.constant 0 : index
    %c0_191 = arith.constant 0 : index
    %206 = vector.load %arg10[%c0_190, %c0_191] : memref<64x128xf32, #tpu.memory_space<vmem>>, vector<64x128xf32>
    %207 = arith.addf %206, %205 : vector<64x128xf32>
    %c0_192 = arith.constant 0 : index
    %c0_193 = arith.constant 0 : index
    %208 = vector.load %arg10[%c0_192, %c0_193] : memref<64x128xf32, #tpu.memory_space<vmem>>, vector<64x128xf32>
    tpu.vector_store %arg10[%c0_192, %c0_193], %207 {strides = array<i32>} : memref<64x128xf32, #tpu.memory_space<vmem>>, vector<64x128xf32>,
    %c1_i32_194 = arith.constant 1 : i32
    %209 = arith.addi %1, %c1_i32_194 : i32
    %c1_i32_195 = arith.constant 1 : i32
    %210 = arith.addi %209, %c1_i32_195 : i32
    %c0_196 = arith.constant 0 : index
    %211 = arith.index_cast %210 : i32 to index
    %c2_197 = arith.constant 2 : index
    %c0_198 = arith.constant 0 : index
    %212 = vector.load %arg2[%c0_196, %211, %c2_197, %c0_198] : memref<1x18x18x128xf32, #tpu.memory_space<vmem>>, vector<1x4x16x128xf32>
    %213 = vector.shape_cast %212 : vector<1x4x16x128xf32> to vector<4x16x128xf32>
    %214 = vector.shape_cast %213 : vector<4x16x128xf32> to vector<64x128xf32>
    %c15 = arith.constant 15 : index
    %c0_199 = arith.constant 0 : index
    %c0_200 = arith.constant 0 : index
    %215 = vector.load %arg3[%c15, %c0_199, %c0_200] : memref<16x128x128xf32, #tpu.memory_space<vmem>>, vector<1x128x128xf32>
    %216 = vector.shape_cast %215 : vector<1x128x128xf32> to vector<128x128xf32>
    %cst_201 = arith.constant dense<0.000000e+00> : vector<64x128xf32>
    %217 = tpu.matmul %214, %216, %cst_201 {dimension_numbers = #tpu.dot_dimension_numbers<[1], [0], [0], [1], [0, 0, 1, 1], [], []>} : vector<64x128xf32>, vector<128x128xf32>, vector<64x128xf32> -> vector<64x128xf32>
    %c0_202 = arith.constant 0 : index
    %c0_203 = arith.constant 0 : index
    %218 = vector.load %arg10[%c0_202, %c0_203] : memref<64x128xf32, #tpu.memory_space<vmem>>, vector<64x128xf32>
    %219 = arith.addf %218, %217 : vector<64x128xf32>
    %c0_204 = arith.constant 0 : index
    %c0_205 = arith.constant 0 : index
    %220 = vector.load %arg10[%c0_204, %c0_205] : memref<64x128xf32, #tpu.memory_space<vmem>>, vector<64x128xf32>
    tpu.vector_store %arg10[%c0_204, %c0_205], %219 {strides = array<i32>} : memref<64x128xf32, #tpu.memory_space<vmem>>, vector<64x128xf32>,
    %c0_206 = arith.constant 0 : index
    %c0_207 = arith.constant 0 : index
    %221 = vector.load %arg10[%c0_206, %c0_207] : memref<64x128xf32, #tpu.memory_space<vmem>>, vector<64x128xf32>
    %222 = vector.broadcast %2 : vector<1x128xf32> to vector<64x128xf32>
    %223 = arith.mulf %221, %222 : vector<64x128xf32>
    %224 = vector.broadcast %3 : vector<1x128xf32> to vector<64x128xf32>
    %225 = arith.addf %223, %224 : vector<64x128xf32>
    %cst_208 = arith.constant 0.000000e+00 : f32
    %226 = vector.broadcast %cst_208 : f32 to vector<64x128xf32>
    %227 = arith.maximumf %225, %226 : vector<64x128xf32>
    %228 = vector.shape_cast %227 : vector<64x128xf32> to vector<4x16x128xf32>
    %c0_209 = arith.constant 0 : index
    %c0_210 = arith.constant 0 : index
    %c0_211 = arith.constant 0 : index
    %c0_212 = arith.constant 0 : index
    %229 = vector.load %arg9[%c0_209, %c0_210, %c0_211, %c0_212] : memref<1x4x16x128xf32, #tpu.memory_space<vmem>>, vector<1x4x16x128xf32>
    %230 = vector.shape_cast %229 : vector<1x4x16x128xf32> to vector<4x16x128xf32>
    %231 = vector.shape_cast %228 : vector<4x16x128xf32> to vector<1x4x16x128xf32>
    tpu.vector_store %arg9[%c0_209, %c0_210, %c0_211, %c0_212], %231 {strides = array<i32>} : memref<1x4x16x128xf32, #tpu.memory_space<vmem>>, vector<1x4x16x128xf32>,
    return
  }
  func.func @transform_0(%arg0: i32, %arg1: i32) -> (i32, i32, i32, i32) {
    %c0_i32 = arith.constant 0 : i32
    %c0_i32_0 = arith.constant 0 : i32
    %c0_i32_1 = arith.constant 0 : i32
    %c0_i32_2 = arith.constant 0 : i32
    return %arg0, %c0_i32, %c0_i32_0, %c0_i32_1 : i32, i32, i32, i32
  }
  func.func @transform_1(%arg0: i32, %arg1: i32) -> (i32, i32, i32) {
    %c0_i32 = arith.constant 0 : i32
    %c0_i32_0 = arith.constant 0 : i32
    %c0_i32_1 = arith.constant 0 : i32
    %c0_i32_2 = arith.constant 0 : i32
    return %c0_i32, %c0_i32_0, %c0_i32_1 : i32, i32, i32
  }
  func.func @transform_2(%arg0: i32, %arg1: i32) -> (i32, i32) {
    %c0_i32 = arith.constant 0 : i32
    %c0_i32_0 = arith.constant 0 : i32
    %c0_i32_1 = arith.constant 0 : i32
    return %c0_i32, %c0_i32_0 : i32, i32
  }
  func.func @transform_3(%arg0: i32, %arg1: i32) -> (i32, i32) {
    %c0_i32 = arith.constant 0 : i32
    %c0_i32_0 = arith.constant 0 : i32
    %c0_i32_1 = arith.constant 0 : i32
    return %c0_i32, %c0_i32_0 : i32, i32
  }
  func.func @transform_4(%arg0: i32, %arg1: i32) -> (i32, i32, i32, i32) {
    %c0_i32 = arith.constant 0 : i32
    %c0_i32_0 = arith.constant 0 : i32
    %c0_i32_1 = arith.constant 0 : i32
    return %arg0, %arg1, %c0_i32, %c0_i32_0 : i32, i32, i32, i32
  }
  func.func @transform_5(%arg0: i32, %arg1: i32) -> (i32, i32, i32, i32) {
    %c0_i32 = arith.constant 0 : i32
    %c0_i32_0 = arith.constant 0 : i32
    %c0_i32_1 = arith.constant 0 : i32
    return %arg0, %arg1, %c0_i32, %c0_i32_0 : i32, i32, i32, i32
  }
  func.func @transform_6(%arg0: i32, %arg1: i32) -> (i32, i32, i32, i32) {
    %c0_i32 = arith.constant 0 : i32
    %c0_i32_0 = arith.constant 0 : i32
    %c0_i32_1 = arith.constant 0 : i32
    return %arg0, %arg1, %c0_i32, %c0_i32_0 : i32, i32, i32, i32
  }
  func.func @transform_7(%arg0: i32, %arg1: i32) -> (i32, i32, i32, i32) {
    %c0_i32 = arith.constant 0 : i32
    %c0_i32_0 = arith.constant 0 : i32
    %c0_i32_1 = arith.constant 0 : i32
    return %arg0, %arg1, %c0_i32, %c0_i32_0 : i32, i32, i32, i32
  }
}

</mosaic_0001>

<llo_original>
// kernel: tpu_custom_call.1
$region0: #{tpu_custom_call.1}
  #allocation0 [shape = 'u32[]', space=smem, size = 0x4, offset = 0x4, fixed_abs, tag = 'smem constant byte address 0x4 - core index']
  #allocation1 [shape = 'u32[144,128]{1,0:T(1,128)}', space=vmem, size = 0x12000, scoped, tag = 'internal scratch']
  #allocation2 [shape = 'f32[64,128]{1,0:T(8,128)}', space=vmem, size = 0x8000, scoped, tag = 'scratch operand']
  %s0 = inlined_call_operand.vmem [shape: f32[2,18,18,128], index: 0, kind: input, shape index: {}]
  %s1 = inlined_call_operand.hbm [shape: f32[16,128,128], index: 1, kind: input, shape index: {}]
  %s2 = inlined_call_operand.vmem [shape: f32[1,128], index: 2, kind: input, shape index: {}]
  %s3 = inlined_call_operand.vmem [shape: f32[1,128], index: 3, kind: input, shape index: {}]
  %s4 = inlined_call_operand.hbm [shape: f32[2,16,16,128], index: 4, kind: output, shape index: {0}]
  %s5 = inlined_call_operand.hbm [shape: f32[2,16,16,128], index: 5, kind: output, shape index: {1}]
  %s6 = inlined_call_operand.hbm [shape: f32[2,16,16,128], index: 6, kind: output, shape index: {2}]
  %s7 = inlined_call_operand.hbm [shape: f32[2,16,16,128], index: 7, kind: output, shape index: {3}]
  %8 = xla_tuple %s4, %s5, %s6, %s7
  %s9 = sld [smem:[#allocation0]]
  $region77: #{tpu_custom_call.1} parent=0
    _
  %s11 = ssub.s32 1, %s9
  %s12 = scalar_select 0, %s11, %s9
  $region1: #{tpu_custom_call.1} parent=0
    #allocation3 [shape = 'u8[1048576]{0}', space=vmem, size = 0x100000, scoped, tag = 'input window, operand 1, single buffered']
    #allocation4 [shape = 's32[2]{0}', space=sflag, size = 0x8, scoped, tag = 'scoped memory for tpu_custom_call.1']
    #allocation5 [shape = 's32[2]{0}', space=sflag, size = 0x8, scoped, tag = 'scoped memory for tpu_custom_call.1']
    #allocation6 [shape = 'u8[65536]{0}', space=vmem, size = 0x10000, scoped, tag = 'output window, operand 0']
    #allocation7 [shape = 'u8[65536]{0}', space=vmem, size = 0x10000, scoped, tag = 'output window, operand 1']
    #allocation8 [shape = 's32[2]{0}', space=sflag, size = 0x8, scoped, tag = 'scoped memory for tpu_custom_call.1']
    #allocation9 [shape = 'u8[65536]{0}', space=vmem, size = 0x10000, scoped, tag = 'output window, operand 2']
    #allocation10 [shape = 'u8[65536]{0}', space=vmem, size = 0x10000, scoped, tag = 'output window, operand 3']
    #allocation11 [shape = 's32[2]{0}', space=sflag, size = 0x8, scoped, tag = 'scoped memory for tpu_custom_call.1']
    %13 = vsyncpa [#allocation4], 0
    %14 = vsyncpa [#allocation5], 0
    %s15 = scalar_lea.sflag [#allocation5], 1
    %16 = vsyncpa %s15, 0
    %17 = vsyncpa [#allocation8], 0
    %s18 = scalar_lea.sflag [#allocation8], 1
    %19 = vsyncpa %s18, 0
    %20 = vsyncpa [#allocation11], 0
    %s21 = scalar_lea.sflag [#allocation11], 1
    %22 = vsyncpa %s21, 0
    loop: start=0, step=1, limit=10
    $region2: #{tpu_custom_call.1} parent=1 // loop_pre_header
      _
    $region3: #{tpu_custom_call.1} parent=1 // loop_header
      %s24 = sphi 0, %s28
      %p25 = scmp.ge.s32.totalorder %s24, 10
      %s31 = sphi 0, %s43
      %s32 = sphi 0, %s39
      %s33 = sphi 0, %s31
      %s34 = sphi 0, %s32
      %s35 = sphi 0, %s33
      %s36 = sphi 0, %s34
      %s46 = sphi 0, %s48
      %s49 = sphi 0, %s46
      %s50 = sphi 0, %s49
      %s66 = sphi 0, %s50
      %s70 = sphi 0, %s70
      %s72 = sphi 0, %s70
      %s73 = sphi 0, %s72
      %s87 = sphi 0, %s73
      %s91 = sphi 0, %s91
      %s93 = sphi 0, %s91
      %s94 = sphi 0, %s93
      %s108 = sphi 0, %s94
      %s112 = sphi 0, %s112
      %s114 = sphi 0, %s112
      %s115 = sphi 0, %s114
      %s129 = sphi 0, %s115
      %s137 = sphi 0, %s139
      %s140 = sphi 0, %s137
      %s141 = sphi 0, %s140
      %s157 = sphi 0, %s141
      %s165 = sphi 0, %s167
      %s168 = sphi 0, %s165
      %s169 = sphi 0, %s168
      %s185 = sphi 0, %s169
      %s193 = sphi 0, %s195
      %s196 = sphi 0, %s193
      %s197 = sphi 0, %s196
      %s213 = sphi 0, %s197
      %s221 = sphi 0, %s223
      %s224 = sphi 0, %s221
      %s225 = sphi 0, %s224
      %s241 = sphi 0, %s225
    $region4: #{tpu_custom_call.1} parent=1 // loop_header_branch
      %27 = sbr.rel (%p25) target = $region8
    $region5: #{tpu_custom_call.1} parent=1 // loop_body
      %s29 = ssub.s32 %s24, 1
      %s30 = ssub.s32 %s24, 2
      %s37 = sadd.s32 1, %s32
      %p38 = scmp.ge.s32.totalorder %s37, 4
      %s39 = scalar_select %p38, 0, %s37
      %s40 = sadd.s32 1, %s31
      %s41 = scalar_select %p38, %s40, %s31
      %p42 = scmp.ge.s32.totalorder %s41, 2
      %s43 = scalar_select %p42, 0, %s41
      %s44 = ssub.s32 %s31, %s43
      %p45 = scmp.eq.s32.totalorder %s44, 0
      %s47 = sadd.s32 %s46, 1
      %s48 = scalar_select %p45, %s46, %s47
      %p51 = pneg %p45
      %p52 = scmp.eq.s32.totalorder %s24, 7
      %p53 = por %p51, %p52
      %p54 = scmp.ne.s32.totalorder %s46, %s49
      %p55 = scmp.eq.s32.totalorder %s24, 0
      %p56 = por %p54, %p55
      %p57 = scmp.ne.s32.totalorder %s46, %s49
      %p58 = scmp.eq.s32.totalorder %s29, 7
      %p59 = por %p57, %p58
      %p60 = scmp.ne.s32.totalorder %s49, %s50
      %p61 = scmp.eq.s32.totalorder %s29, 0
      %p62 = por %p60, %p61
      %p63 = scmp.ne.s32.totalorder %s49, %s50
      %p64 = scmp.eq.s32.totalorder %s30, 7
      %p65 = por %p63, %p64
      %p67 = scmp.ne.s32.totalorder %s50, %s66
      %p68 = scmp.eq.s32.totalorder %s30, 0
      %p69 = por %p67, %p68
      %s71 = sadd.s32 %s70, 1
      %p74 = scmp.eq.s32.totalorder %s24, 7
      %p75 = scmp.ne.s32.totalorder %s70, %s72
      %p76 = scmp.eq.s32.totalorder %s24, 0
      %p77 = por %p75, %p76
      %p78 = scmp.ne.s32.totalorder %s70, %s72
      %p79 = scmp.eq.s32.totalorder %s29, 7
      %p80 = por %p78, %p79
      %p81 = scmp.ne.s32.totalorder %s72, %s73
      %p82 = scmp.eq.s32.totalorder %s29, 0
      %p83 = por %p81, %p82
      %p84 = scmp.ne.s32.totalorder %s72, %s73
      %p85 = scmp.eq.s32.totalorder %s30, 7
      %p86 = por %p84, %p85
      %p88 = scmp.ne.s32.totalorder %s73, %s87
      %p89 = scmp.eq.s32.totalorder %s30, 0
      %p90 = por %p88, %p89
      %s92 = sadd.s32 %s91, 1
      %p95 = scmp.eq.s32.totalorder %s24, 7
      %p96 = scmp.ne.s32.totalorder %s91, %s93
      %p97 = scmp.eq.s32.totalorder %s24, 0
      %p98 = por %p96, %p97
      %p99 = scmp.ne.s32.totalorder %s91, %s93
      %p100 = scmp.eq.s32.totalorder %s29, 7
      %p101 = por %p99, %p100
      %p102 = scmp.ne.s32.totalorder %s93, %s94
      %p103 = scmp.eq.s32.totalorder %s29, 0
      %p104 = por %p102, %p103
      %p105 = scmp.ne.s32.totalorder %s93, %s94
      %p106 = scmp.eq.s32.totalorder %s30, 7
      %p107 = por %p105, %p106
      %p109 = scmp.ne.s32.totalorder %s94, %s108
      %p110 = scmp.eq.s32.totalorder %s30, 0
      %p111 = por %p109, %p110
      %s113 = sadd.s32 %s112, 1
      %p116 = scmp.eq.s32.totalorder %s24, 7
      %p117 = scmp.ne.s32.totalorder %s112, %s114
      %p118 = scmp.eq.s32.totalorder %s24, 0
      %p119 = por %p117, %p118
      %p120 = scmp.ne.s32.totalorder %s112, %s114
      %p121 = scmp.eq.s32.totalorder %s29, 7
      %p122 = por %p120, %p121
      %p123 = scmp.ne.s32.totalorder %s114, %s115
      %p124 = scmp.eq.s32.totalorder %s29, 0
      %p125 = por %p123, %p124
      %p126 = scmp.ne.s32.totalorder %s114, %s115
      %p127 = scmp.eq.s32.totalorder %s30, 7
      %p128 = por %p126, %p127
      %p130 = scmp.ne.s32.totalorder %s115, %s129
      %p131 = scmp.eq.s32.totalorder %s30, 0
      %p132 = por %p130, %p131
      %s133 = ssub.s32 %s31, %s43
      %s134 = ssub.s32 %s32, %s39
      %s135 = sor.u32 %s133, %s134
      %p136 = scmp.eq.s32.totalorder %s135, 0
      %s138 = sadd.s32 %s137, 1
      %s139 = scalar_select %p136, %s137, %s138
      %p142 = pneg %p136
      %p143 = scmp.eq.s32.totalorder %s24, 7
      %p144 = por %p142, %p143
      %p145 = scmp.ne.s32.totalorder %s137, %s140
      %p146 = scmp.eq.s32.totalorder %s24, 0
      %p147 = por %p145, %p146
      %p148 = scmp.ne.s32.totalorder %s137, %s140
      %p149 = scmp.eq.s32.totalorder %s29, 7
      %p150 = por %p148, %p149
      %p151 = scmp.ne.s32.totalorder %s140, %s141
      %p152 = scmp.eq.s32.totalorder %s29, 0
      %p153 = por %p151, %p152
      %p154 = scmp.ne.s32.totalorder %s140, %s141
      %p155 = scmp.eq.s32.totalorder %s30, 7
      %p156 = por %p154, %p155
      %p158 = scmp.ne.s32.totalorder %s141, %s157
      %p159 = scmp.eq.s32.totalorder %s30, 0
      %p160 = por %p158, %p159
      %s161 = ssub.s32 %s31, %s43
      %s162 = ssub.s32 %s32, %s39
      %s163 = sor.u32 %s161, %s162
      %p164 = scmp.eq.s32.totalorder %s163, 0
      %s166 = sadd.s32 %s165, 1
      %s167 = scalar_select %p164, %s165, %s166
      %p170 = pneg %p164
      %p171 = scmp.eq.s32.totalorder %s24, 7
      %p172 = por %p170, %p171
      %p173 = scmp.ne.s32.totalorder %s165, %s168
      %p174 = scmp.eq.s32.totalorder %s24, 0
      %p175 = por %p173, %p174
      %p176 = scmp.ne.s32.totalorder %s165, %s168
      %p177 = scmp.eq.s32.totalorder %s29, 7
      %p178 = por %p176, %p177
      %p179 = scmp.ne.s32.totalorder %s168, %s169
      %p180 = scmp.eq.s32.totalorder %s29, 0
      %p181 = por %p179, %p180
      %p182 = scmp.ne.s32.totalorder %s168, %s169
      %p183 = scmp.eq.s32.totalorder %s30, 7
      %p184 = por %p182, %p183
      %p186 = scmp.ne.s32.totalorder %s169, %s185
      %p187 = scmp.eq.s32.totalorder %s30, 0
      %p188 = por %p186, %p187
      %s189 = ssub.s32 %s31, %s43
      %s190 = ssub.s32 %s32, %s39
      %s191 = sor.u32 %s189, %s190
      %p192 = scmp.eq.s32.totalorder %s191, 0
      %s194 = sadd.s32 %s193, 1
      %s195 = scalar_select %p192, %s193, %s194
      %p198 = pneg %p192
      %p199 = scmp.eq.s32.totalorder %s24, 7
      %p200 = por %p198, %p199
      %p201 = scmp.ne.s32.totalorder %s193, %s196
      %p202 = scmp.eq.s32.totalorder %s24, 0
      %p203 = por %p201, %p202
      %p204 = scmp.ne.s32.totalorder %s193, %s196
      %p205 = scmp.eq.s32.totalorder %s29, 7
      %p206 = por %p204, %p205
      %p207 = scmp.ne.s32.totalorder %s196, %s197
      %p208 = scmp.eq.s32.totalorder %s29, 0
      %p209 = por %p207, %p208
      %p210 = scmp.ne.s32.totalorder %s196, %s197
      %p211 = scmp.eq.s32.totalorder %s30, 7
      %p212 = por %p210, %p211
      %p214 = scmp.ne.s32.totalorder %s197, %s213
      %p215 = scmp.eq.s32.totalorder %s30, 0
      %p216 = por %p214, %p215
      %s217 = ssub.s32 %s31, %s43
      %s218 = ssub.s32 %s32, %s39
      %s219 = sor.u32 %s217, %s218
      %p220 = scmp.eq.s32.totalorder %s219, 0
      %s222 = sadd.s32 %s221, 1
      %s223 = scalar_select %p220, %s221, %s222
      %p226 = pneg %p220
      %p227 = scmp.eq.s32.totalorder %s24, 7
      %p228 = por %p226, %p227
      %p229 = scmp.ne.s32.totalorder %s221, %s224
      %p230 = scmp.eq.s32.totalorder %s24, 0
      %p231 = por %p229, %p230
      %p232 = scmp.ne.s32.totalorder %s221, %s224
      %p233 = scmp.eq.s32.totalorder %s29, 7
      %p234 = por %p232, %p233
      %p235 = scmp.ne.s32.totalorder %s224, %s225
      %p236 = scmp.eq.s32.totalorder %s29, 0
      %p237 = por %p235, %p236
      %p238 = scmp.ne.s32.totalorder %s224, %s225
      %p239 = scmp.eq.s32.totalorder %s30, 7
      %p240 = por %p238, %p239
      %p242 = scmp.ne.s32.totalorder %s225, %s241
      %p243 = scmp.eq.s32.totalorder %s30, 0
      %p244 = por %p242, %p243
      %p245 = scmp.le.s32.totalorder 1, %s24
      %p246 = scmp.lt.s32.totalorder %s24, 9
      %p247 = pnand %p245, %p246
      %p248 = pneg %p247
      // Predicated region
      $region9: #{tpu_custom_call.1} parent=5 // pred_check
        _
      $region10: #{tpu_custom_call.1} parent=5 // pred_check_branch
        %250 = sbr.rel (%p247) target = $region12
      $region11: #{tpu_custom_call.1} parent=5 // pred_region
        %s251 = ssub.s32 %s24, 1
        // Predicated region
        $region13: #{tpu_custom_call.1} parent=11 // pred_check
          %p252 = pneg %p83
        $region14: #{tpu_custom_call.1} parent=11 // pred_check_branch
          %254 = sbr.rel (%p252) target = $region16
        $region15: #{tpu_custom_call.1} parent=11 // pred_region
          %s256 = ssub.s32 32768, 32768
          %257 = vsyncadd [#allocation4], %s256
          %s258 = sshll.u32 [#allocation3], 4
          %s259 = int_to_ptr.vmem [resolvable:$true] %s258
          %264 = dma.hbm_to_vmem [thread:$0]  %s1, 32768, %s259, [#allocation4], 128, 128, 8
        $region16: #{tpu_custom_call.1} parent=11 // pred_fallthru
          _
        // Predicated region
        $region17: #{tpu_custom_call.1} parent=11 // pred_check
          %p265 = pneg %p104
        $region18: #{tpu_custom_call.1} parent=11 // pred_check_branch
          %267 = sbr.rel (%p265) target = $region20
        $region19: #{tpu_custom_call.1} parent=11 // pred_region
          _
        $region20: #{tpu_custom_call.1} parent=11 // pred_fallthru
          _
        // Predicated region
        $region21: #{tpu_custom_call.1} parent=11 // pred_check
          %p268 = pneg %p125
        $region22: #{tpu_custom_call.1} parent=11 // pred_check_branch
          %270 = sbr.rel (%p268) target = $region24
        $region23: #{tpu_custom_call.1} parent=11 // pred_region
          _
        $region24: #{tpu_custom_call.1} parent=11 // pred_fallthru
          _
      $region12: #{tpu_custom_call.1} parent=5 // pred_fallthru
        _
      %p271 = scmp.lt.s32.totalorder %s24, 8
      // Predicated region
      $region25: #{tpu_custom_call.1} parent=5 // pred_check
        %p272 = pneg %p271
      $region26: #{tpu_custom_call.1} parent=5 // pred_check_branch
        %274 = sbr.rel (%p272) target = $region28
      $region27: #{tpu_custom_call.1} parent=5 // pred_region
        // Predicated region
        $region29: #{tpu_custom_call.1} parent=27 // pred_check
          %p275 = pneg %p56
        $region30: #{tpu_custom_call.1} parent=27 // pred_check_branch
          %277 = sbr.rel (%p275) target = $region32
        $region31: #{tpu_custom_call.1} parent=27 // pred_region
          %p278 = scmp.lt.s32.totalorder %s31, 1
          %s279 = scalar_select %p278, %s31, 1
          %s280 = smul.addr %s279, 54
          %s281 = smul.addr %s280, 8
          %s282 = scalar_lea.vmem %s0, %s281
        $region32: #{tpu_custom_call.1} parent=27 // pred_fallthru
          _
      $region28: #{tpu_custom_call.1} parent=5 // pred_fallthru
        _
      %p283 = scmp.le.s32.totalorder 1, %s24
      %p284 = scmp.lt.s32.totalorder %s24, 9
      %p285 = pnand %p283, %p284
      %p286 = pneg %p285
      // Predicated region
      $region33: #{tpu_custom_call.1} parent=5 // pred_check
        _
      $region34: #{tpu_custom_call.1} parent=5 // pred_check_branch
        %288 = sbr.rel (%p285) target = $region36
      $region35: #{tpu_custom_call.1} parent=5 // pred_region
        %s289 = ssub.s32 %s24, 1
        // Predicated region
        $region37: #{tpu_custom_call.1} parent=35 // pred_check
          %p290 = pneg %p83
        $region38: #{tpu_custom_call.1} parent=35 // pred_check_branch
          %292 = sbr.rel (%p290) target = $region40
        $region39: #{tpu_custom_call.1} parent=35 // pred_region
          %293 = dma.done [#allocation4], 32768
        $region40: #{tpu_custom_call.1} parent=35 // pred_fallthru
          _
        %p294 = scmp.lt.s32.totalorder %s33, 1
        %s295 = scalar_select %p294, %s33, 1
        %s296 = smul.addr %s295, 54
        %s297 = smul.addr %s296, 8
        %s298 = scalar_lea.vmem %s0, %s297
        %p299 = pneg %p62
        %p300 = pneg %p59
        %p301 = pneg %p83
        %p302 = pneg %p80
        %p303 = pneg %p104
        %p304 = pneg %p101
        %p305 = pneg %p125
        %p306 = pneg %p122
        %p307 = pneg %p153
        %p308 = pneg %p150
        %s309 = sand.u32 %s140, 1
        %s310 = scalar_lea.sflag [#allocation5], %s309
        %s311 = sand.u32 %s140, 1
        %s312 = smul.addr %s311, 64
        %s313 = scalar_lea.vmem [#allocation6], %s312
        %p314 = pneg %p181
        %p315 = pneg %p178
        %s316 = sand.u32 %s29, 1
        %s317 = scalar_lea.sflag [#allocation8], %s316
        %s318 = sand.u32 %s168, 1
        %s319 = smul.addr %s318, 64
        %s320 = scalar_lea.vmem [#allocation7], %s319
        %p321 = pneg %p209
        %p322 = pneg %p206
        %s323 = sand.u32 %s29, 1
        %s324 = scalar_lea.sflag [#allocation8], %s323
        %s325 = sand.u32 %s196, 1
        %s326 = smul.addr %s325, 64
        %s327 = scalar_lea.vmem [#allocation9], %s326
        %p328 = pneg %p237
        %p329 = pneg %p234
        %s330 = sand.u32 %s224, 1
        %s331 = scalar_lea.sflag [#allocation11], %s330
        %s332 = sand.u32 %s224, 1
        %s333 = smul.addr %s332, 64
        %s334 = scalar_lea.vmem [#allocation10], %s333
        %p335 = scmp.lt.s32.totalorder %s33, 1
        %s336 = scalar_select %p335, %s33, 1
        %s337 = smul.addr %s336, 54
        %s338 = smul.addr %s337, 8
        %s339 = scalar_lea.vmem %s0, %s338
        %s340 = smul.u32 4, %s34
        %s341 = smul.u32 4, %s34
        %s342 = smul.u32 4, %s34
        %s343 = smul.u32 4, %s34
        %s344 = smul.u32 %s34, 4
        %v345 = vld [vmem:[%s2] sm:$0x1]
        %v346 = vld [vmem:[%s3] sm:$0x1]
        %s347 = smul.u32 %s344, 24
        %s348 = scalar_lea.vmem %s339, %s347
        %v349 = vld [vmem:[%s348] sm:$0xff]
        %v350 = vld [vmem:[%s348 + $0x8] sm:$0xff]
        %v351 = vld [vmem:[%s348 + $0x18] sm:$0xff]
        %v352 = vld [vmem:[%s348 + $0x20] sm:$0xff]
        %v353 = vld [vmem:[%s348 + $0x30] sm:$0xff]
        %v354 = vld [vmem:[%s348 + $0x38] sm:$0xff]
        %v355 = vld [vmem:[%s348 + $0x48] sm:$0xff]
        %v356 = vld [vmem:[%s348 + $0x50] sm:$0xff]
        %v357 = vld [vmem:[#allocation3] sm:$0xff]
        %v358 = vld [vmem:[#allocation3 + $0x8] sm:$0xff]
        %v359 = vld [vmem:[#allocation3 + $0x10] sm:$0xff]
        %v360 = vld [vmem:[#allocation3 + $0x18] sm:$0xff]
        %v361 = vld [vmem:[#allocation3 + $0x20] sm:$0xff]
        %v362 = vld [vmem:[#allocation3 + $0x28] sm:$0xff]
        %v363 = vld [vmem:[#allocation3 + $0x30] sm:$0xff]
        %v364 = vld [vmem:[#allocation3 + $0x38] sm:$0xff]
        %v365 = vld [vmem:[#allocation3 + $0x40] sm:$0xff]
        %v366 = vld [vmem:[#allocation3 + $0x48] sm:$0xff]
        %v367 = vld [vmem:[#allocation3 + $0x50] sm:$0xff]
        %v368 = vld [vmem:[#allocation3 + $0x58] sm:$0xff]
        %v369 = vld [vmem:[#allocation3 + $0x60] sm:$0xff]
        %v370 = vld [vmem:[#allocation3 + $0x68] sm:$0xff]
        %v371 = vld [vmem:[#allocation3 + $0x70] sm:$0xff]
        %v372 = vld [vmem:[#allocation3 + $0x78] sm:$0xff]
        %373 = vmatprep.subr.mxu0 0.0
        %374 = vmatpush1.msra.mxu0 %v372
        %375 = vmatprep.subr.mxu0 0.0
        %376 = vmatpush1.msra.mxu0 %v371
        %377 = vmatprep.subr.mxu0 0.0
        %378 = vmatpush1.msra.mxu0 %v370
        %379 = vmatprep.subr.mxu0 0.0
        %380 = vmatpush1.msra.mxu0 %v369
        %381 = vmatprep.subr.mxu0 0.0
        %382 = vmatpush1.msra.mxu0 %v368
        %383 = vmatprep.subr.mxu0 0.0
        %384 = vmatpush1.msra.mxu0 %v367
        %385 = vmatprep.subr.mxu0 0.0
        %386 = vmatpush1.msra.mxu0 %v366
        %387 = vmatprep.subr.mxu0 0.0
        %388 = vmatpush1.msra.mxu0 %v365
        %389 = vmatprep.subr.mxu0 0.0
        %390 = vmatpush1.msra.mxu0 %v364
        %391 = vmatprep.subr.mxu0 0.0
        %392 = vmatpush1.msra.mxu0 %v363
        %393 = vmatprep.subr.mxu0 0.0
        %394 = vmatpush1.msra.mxu0 %v362
        %395 = vmatprep.subr.mxu0 0.0
        %396 = vmatpush1.msra.mxu0 %v361
        %397 = vmatprep.subr.mxu0 0.0
        %398 = vmatpush1.msra.mxu0 %v360
        %399 = vmatprep.subr.mxu0 0.0
        %400 = vmatpush1.msra.mxu0 %v359
        %401 = vmatprep.subr.mxu0 0.0
        %402 = vmatpush1.msra.mxu0 %v358
        %403 = vmatprep.subr.mxu0 0.0
        %404 = vmatpush1.msra.mxu0 %v357
        %405 = vmatprep.subr.mxu0 0.0
        %406 = vmatpush2.msra.mxu0 0.0
        %407 = vmatprep.subr.mxu0 0.0
        %408 = vmatpush2.msra.mxu0 0.0
        %409 = vmatprep.subr.mxu0 0.0
        %410 = vmatpush2.msra.mxu0 0.0
        %411 = vmatprep.subr.mxu0 0.0
        %412 = vmatpush2.msra.mxu0 0.0
        %413 = vmatprep.subr.mxu0 0.0
        %414 = vmatpush2.msra.mxu0 0.0
        %415 = vmatprep.subr.mxu0 0.0
        %416 = vmatpush2.msra.mxu0 0.0
        %417 = vmatprep.subr.mxu0 0.0
        %418 = vmatpush2.msra.mxu0 0.0
        %419 = vmatprep.subr.mxu0 0.0
        %420 = vmatpush2.msra.mxu0 0.0
        %421 = vmatprep.subr.mxu0 0.0
        %422 = vmatpush2.msra.mxu0 0.0
        %423 = vmatprep.subr.mxu0 0.0
        %424 = vmatpush2.msra.mxu0 0.0
        %425 = vmatprep.subr.mxu0 0.0
        %426 = vmatpush2.msra.mxu0 0.0
        %427 = vmatprep.subr.mxu0 0.0
        %428 = vmatpush2.msra.mxu0 0.0
        %429 = vmatprep.subr.mxu0 0.0
        %430 = vmatpush2.msra.mxu0 0.0
        %431 = vmatprep.subr.mxu0 0.0
        %432 = vmatpush2.msra.mxu0 0.0
        %433 = vmatprep.subr.mxu0 0.0
        %434 = vmatpush2.msra.mxu0 0.0
        %435 = vmatprep.subr.mxu0 0.0
        %436 = vmatpush2.msra.mxu0 0.0
        %437 = vmatprep.mubr.f32.mxu0 0.0
        %438 = vmatmul.mubr.f32.gmra.mxu0 %v349
        %v439 = vpop.f32.mrf.mxu0
        %v440 = vadd.f32 0.0, %v439
        %v441 = vpop.f32.mrf.mxu0
        %442 = vmatprep.mubr.f32.mxu0 0.0
        %443 = vmatmul.mubr.f32.gmra.mxu0 %v350
        %v444 = vpop.f32.mrf.mxu0
        %v445 = vadd.f32 0.0, %v444
        %v446 = vpop.f32.mrf.mxu0
        %447 = vmatprep.mubr.f32.mxu0 0.0
        %448 = vmatmul.mubr.f32.gmra.mxu0 %v351
        %v449 = vpop.f32.mrf.mxu0
        %v450 = vadd.f32 0.0, %v449
        %v451 = vpop.f32.mrf.mxu0
        %452 = vmatprep.mubr.f32.mxu0 0.0
        %453 = vmatmul.mubr.f32.gmra.mxu0 %v352
        %v454 = vpop.f32.mrf.mxu0
        %v455 = vadd.f32 0.0, %v454
        %v456 = vpop.f32.mrf.mxu0
        %457 = vmatprep.mubr.f32.mxu0 0.0
        %458 = vmatmul.mubr.f32.gmra.mxu0 %v353
        %v459 = vpop.f32.mrf.mxu0
        %v460 = vadd.f32 0.0, %v459
        %v461 = vpop.f32.mrf.mxu0
        %462 = vmatprep.mubr.f32.mxu0 0.0
        %463 = vmatmul.mubr.f32.gmra.mxu0 %v354
        %v464 = vpop.f32.mrf.mxu0
        %v465 = vadd.f32 0.0, %v464
        %v466 = vpop.f32.mrf.mxu0
        %467 = vmatprep.mubr.f32.mxu0 0.0
        %468 = vmatmul.mubr.f32.gmra.mxu0 %v355
        %v469 = vpop.f32.mrf.mxu0
        %v470 = vadd.f32 0.0, %v469
        %v471 = vpop.f32.mrf.mxu0
        %472 = vmatprep.mubr.f32.mxu0 0.0
        %473 = vmatmul.mubr.f32.gmra.mxu0 %v356
        %v474 = vpop.f32.mrf.mxu0
        %v475 = vadd.f32 0.0, %v474
        %v476 = vpop.f32.mrf.mxu0
        %477 = vdwg.mxu0
        %478 = vst [vmem:[#allocation2] sm:$0xff] %v440
        %479 = vst [vmem:[#allocation2 + $0x8] sm:$0xff] %v445
        %480 = vst [vmem:[#allocation2 + $0x10] sm:$0xff] %v450
        %481 = vst [vmem:[#allocation2 + $0x18] sm:$0xff] %v455
        %482 = vst [vmem:[#allocation2 + $0x20] sm:$0xff] %v460
        %483 = vst [vmem:[#allocation2 + $0x28] sm:$0xff] %v465
        %484 = vst [vmem:[#allocation2 + $0x30] sm:$0xff] %v470
        %485 = vst [vmem:[#allocation2 + $0x38] sm:$0xff] %v475
        %v486 = vld [vmem:[%s348 + $0x1] sm:$0xff]
        %v487 = vld [vmem:[%s348 + $0x9] sm:$0xff]
        %v488 = vld [vmem:[%s348 + $0x19] sm:$0xff]
        %v489 = vld [vmem:[%s348 + $0x21] sm:$0xff]
        %v490 = vld [vmem:[%s348 + $0x31] sm:$0xff]
        %v491 = vld [vmem:[%s348 + $0x39] sm:$0xff]
        %v492 = vld [vmem:[%s348 + $0x49] sm:$0xff]
        %v493 = vld [vmem:[%s348 + $0x51] sm:$0xff]
        %s494 = scalar_lea.vmem [#allocation3], 128
        %v495 = vld [vmem:[%s494] sm:$0xff]
        %v496 = vld [vmem:[%s494 + $0x8] sm:$0xff]
        %v497 = vld [vmem:[%s494 + $0x10] sm:$0xff]
        %v498 = vld [vmem:[%s494 + $0x18] sm:$0xff]
        %v499 = vld [vmem:[%s494 + $0x20] sm:$0xff]
        %v500 = vld [vmem:[%s494 + $0x28] sm:$0xff]
        %v501 = vld [vmem:[%s494 + $0x30] sm:$0xff]
        %v502 = vld [vmem:[%s494 + $0x38] sm:$0xff]
        %v503 = vld [vmem:[%s494 + $0x40] sm:$0xff]
        %v504 = vld [vmem:[%s494 + $0x48] sm:$0xff]
        %v505 = vld [vmem:[%s494 + $0x50] sm:$0xff]
        %v506 = vld [vmem:[%s494 + $0x58] sm:$0xff]
        %v507 = vld [vmem:[%s494 + $0x60] sm:$0xff]
        %v508 = vld [vmem:[%s494 + $0x68] sm:$0xff]
        %v509 = vld [vmem:[%s494 + $0x70] sm:$0xff]
        %v510 = vld [vmem:[%s494 + $0x78] sm:$0xff]
        %511 = vmatprep.subr.mxu0 0.0
        %512 = vmatpush1.msra.mxu0 %v510
        %513 = vmatprep.subr.mxu0 0.0
        %514 = vmatpush1.msra.mxu0 %v509
        %515 = vmatprep.subr.mxu0 0.0
        %516 = vmatpush1.msra.mxu0 %v508
        %517 = vmatprep.subr.mxu0 0.0
        %518 = vmatpush1.msra.mxu0 %v507
        %519 = vmatprep.subr.mxu0 0.0
        %520 = vmatpush1.msra.mxu0 %v506
        %521 = vmatprep.subr.mxu0 0.0
        %522 = vmatpush1.msra.mxu0 %v505
        %523 = vmatprep.subr.mxu0 0.0
        %524 = vmatpush1.msra.mxu0 %v504
        %525 = vmatprep.subr.mxu0 0.0
        %526 = vmatpush1.msra.mxu0 %v503
        %527 = vmatprep.subr.mxu0 0.0
        %528 = vmatpush1.msra.mxu0 %v502
        %529 = vmatprep.subr.mxu0 0.0
        %530 = vmatpush1.msra.mxu0 %v501
        %531 = vmatprep.subr.mxu0 0.0
        %532 = vmatpush1.msra.mxu0 %v500
        %533 = vmatprep.subr.mxu0 0.0
        %534 = vmatpush1.msra.mxu0 %v499
        %535 = vmatprep.subr.mxu0 0.0
        %536 = vmatpush1.msra.mxu0 %v498
        %537 = vmatprep.subr.mxu0 0.0
        %538 = vmatpush1.msra.mxu0 %v497
        %539 = vmatprep.subr.mxu0 0.0
        %540 = vmatpush1.msra.mxu0 %v496
        %541 = vmatprep.subr.mxu0 0.0
        %542 = vmatpush1.msra.mxu0 %v495
        %543 = vmatprep.subr.mxu0 0.0
        %544 = vmatpush2.msra.mxu0 0.0
        %545 = vmatprep.subr.mxu0 0.0
        %546 = vmatpush2.msra.mxu0 0.0
        %547 = vmatprep.subr.mxu0 0.0
        %548 = vmatpush2.msra.mxu0 0.0
        %549 = vmatprep.subr.mxu0 0.0
        %550 = vmatpush2.msra.mxu0 0.0
        %551 = vmatprep.subr.mxu0 0.0
        %552 = vmatpush2.msra.mxu0 0.0
        %553 = vmatprep.subr.mxu0 0.0
        %554 = vmatpush2.msra.mxu0 0.0
        %555 = vmatprep.subr.mxu0 0.0
        %556 = vmatpush2.msra.mxu0 0.0
        %557 = vmatprep.subr.mxu0 0.0
        %558 = vmatpush2.msra.mxu0 0.0
        %559 = vmatprep.subr.mxu0 0.0
        %560 = vmatpush2.msra.mxu0 0.0
        %561 = vmatprep.subr.mxu0 0.0
        %562 = vmatpush2.msra.mxu0 0.0
        %563 = vmatprep.subr.mxu0 0.0
        %564 = vmatpush2.msra.mxu0 0.0
        %565 = vmatprep.subr.mxu0 0.0
        %566 = vmatpush2.msra.mxu0 0.0
        %567 = vmatprep.subr.mxu0 0.0
        %568 = vmatpush2.msra.mxu0 0.0
        %569 = vmatprep.subr.mxu0 0.0
        %570 = vmatpush2.msra.mxu0 0.0
        %571 = vmatprep.subr.mxu0 0.0
        %572 = vmatpush2.msra.mxu0 0.0
        %573 = vmatprep.subr.mxu0 0.0
        %574 = vmatpush2.msra.mxu0 0.0
        %575 = vmatprep.mubr.f32.mxu0 0.0
        %576 = vmatmul.mubr.f32.gmra.mxu0 %v486
        %v577 = vpop.f32.mrf.mxu0
        %v578 = vadd.f32 0.0, %v577
        %v579 = vpop.f32.mrf.mxu0
        %580 = vmatprep.mubr.f32.mxu0 0.0
        %581 = vmatmul.mubr.f32.gmra.mxu0 %v487
        %v582 = vpop.f32.mrf.mxu0
        %v583 = vadd.f32 0.0, %v582
        %v584 = vpop.f32.mrf.mxu0
        %585 = vmatprep.mubr.f32.mxu0 0.0
        %586 = vmatmul.mubr.f32.gmra.mxu0 %v488
        %v587 = vpop.f32.mrf.mxu0
        %v588 = vadd.f32 0.0, %v587
        %v589 = vpop.f32.mrf.mxu0
        %590 = vmatprep.mubr.f32.mxu0 0.0
        %591 = vmatmul.mubr.f32.gmra.mxu0 %v489
        %v592 = vpop.f32.mrf.mxu0
        %v593 = vadd.f32 0.0, %v592
        %v594 = vpop.f32.mrf.mxu0
        %595 = vmatprep.mubr.f32.mxu0 0.0
        %596 = vmatmul.mubr.f32.gmra.mxu0 %v490
        %v597 = vpop.f32.mrf.mxu0
        %v598 = vadd.f32 0.0, %v597
        %v599 = vpop.f32.mrf.mxu0
        %600 = vmatprep.mubr.f32.mxu0 0.0
        %601 = vmatmul.mubr.f32.gmra.mxu0 %v491
        %v602 = vpop.f32.mrf.mxu0
        %v603 = vadd.f32 0.0, %v602
        %v604 = vpop.f32.mrf.mxu0
        %605 = vmatprep.mubr.f32.mxu0 0.0
        %606 = vmatmul.mubr.f32.gmra.mxu0 %v492
        %v607 = vpop.f32.mrf.mxu0
        %v608 = vadd.f32 0.0, %v607
        %v609 = vpop.f32.mrf.mxu0
        %610 = vmatprep.mubr.f32.mxu0 0.0
        %611 = vmatmul.mubr.f32.gmra.mxu0 %v493
        %v612 = vpop.f32.mrf.mxu0
        %v613 = vadd.f32 0.0, %v612
        %v614 = vpop.f32.mrf.mxu0
        %615 = vdwg.mxu0
        %v616 = vld [vmem:[#allocation2] sm:$0xff]
        %v617 = vld [vmem:[#allocation2 + $0x8] sm:$0xff]
        %v618 = vld [vmem:[#allocation2 + $0x10] sm:$0xff]
        %v619 = vld [vmem:[#allocation2 + $0x18] sm:$0xff]
        %v620 = vld [vmem:[#allocation2 + $0x20] sm:$0xff]
        %v621 = vld [vmem:[#allocation2 + $0x28] sm:$0xff]
        %v622 = vld [vmem:[#allocation2 + $0x30] sm:$0xff]
        %v623 = vld [vmem:[#allocation2 + $0x38] sm:$0xff]
        %v624 = vadd.f32 %v616, %v578
        %v625 = vadd.f32 %v617, %v583
        %v626 = vadd.f32 %v618, %v588
        %v627 = vadd.f32 %v619, %v593
        %v628 = vadd.f32 %v620, %v598
        %v629 = vadd.f32 %v621, %v603
        %v630 = vadd.f32 %v622, %v608
        %v631 = vadd.f32 %v623, %v613
        %632 = vst [vmem:[#allocation2] sm:$0xff] %v624
        %633 = vst [vmem:[#allocation2 + $0x8] sm:$0xff] %v625
        %634 = vst [vmem:[#allocation2 + $0x10] sm:$0xff] %v626
        %635 = vst [vmem:[#allocation2 + $0x18] sm:$0xff] %v627
        %636 = vst [vmem:[#allocation2 + $0x20] sm:$0xff] %v628
        %637 = vst [vmem:[#allocation2 + $0x28] sm:$0xff] %v629
        %638 = vst [vmem:[#allocation2 + $0x30] sm:$0xff] %v630
        %639 = vst [vmem:[#allocation2 + $0x38] sm:$0xff] %v631
        %s640 = sadd.s32 %s344, 1
        %s641 = smul.u32 %s640, 24
        %s642 = scalar_lea.vmem %s339, %s641
        %v643 = vld [vmem:[%s642] sm:$0xff]
        %v644 = vld [vmem:[%s642 + $0x8] sm:$0xff]
        %v645 = vld [vmem:[%s642 + $0x18] sm:$0xff]
        %v646 = vld [vmem:[%s642 + $0x20] sm:$0xff]
        %v647 = vld [vmem:[%s642 + $0x30] sm:$0xff]
        %v648 = vld [vmem:[%s642 + $0x38] sm:$0xff]
        %v649 = vld [vmem:[%s642 + $0x48] sm:$0xff]
        %v650 = vld [vmem:[%s642 + $0x50] sm:$0xff]
        %s651 = scalar_lea.vmem [#allocation3], 256
        %v652 = vld [vmem:[%s651] sm:$0xff]
        %v653 = vld [vmem:[%s651 + $0x8] sm:$0xff]
        %v654 = vld [vmem:[%s651 + $0x10] sm:$0xff]
        %v655 = vld [vmem:[%s651 + $0x18] sm:$0xff]
        %v656 = vld [vmem:[%s651 + $0x20] sm:$0xff]
        %v657 = vld [vmem:[%s651 + $0x28] sm:$0xff]
        %v658 = vld [vmem:[%s651 + $0x30] sm:$0xff]
        %v659 = vld [vmem:[%s651 + $0x38] sm:$0xff]
        %v660 = vld [vmem:[%s651 + $0x40] sm:$0xff]
        %v661 = vld [vmem:[%s651 + $0x48] sm:$0xff]
        %v662 = vld [vmem:[%s651 + $0x50] sm:$0xff]
        %v663 = vld [vmem:[%s651 + $0x58] sm:$0xff]
        %v664 = vld [vmem:[%s651 + $0x60] sm:$0xff]
        %v665 = vld [vmem:[%s651 + $0x68] sm:$0xff]
        %v666 = vld [vmem:[%s651 + $0x70] sm:$0xff]
        %v667 = vld [vmem:[%s651 + $0x78] sm:$0xff]
        %668 = vmatprep.subr.mxu0 0.0
        %669 = vmatpush1.msra.mxu0 %v667
        %670 = vmatprep.subr.mxu0 0.0
        %671 = vmatpush1.msra.mxu0 %v666
        %672 = vmatprep.subr.mxu0 0.0
        %673 = vmatpush1.msra.mxu0 %v665
        %674 = vmatprep.subr.mxu0 0.0
        %675 = vmatpush1.msra.mxu0 %v664
        %676 = vmatprep.subr.mxu0 0.0
        %677 = vmatpush1.msra.mxu0 %v663
        %678 = vmatprep.subr.mxu0 0.0
        %679 = vmatpush1.msra.mxu0 %v662
        %680 = vmatprep.subr.mxu0 0.0
        %681 = vmatpush1.msra.mxu0 %v661
        %682 = vmatprep.subr.mxu0 0.0
        %683 = vmatpush1.msra.mxu0 %v660
        %684 = vmatprep.subr.mxu0 0.0
        %685 = vmatpush1.msra.mxu0 %v659
        %686 = vmatprep.subr.mxu0 0.0
        %687 = vmatpush1.msra.mxu0 %v658
        %688 = vmatprep.subr.mxu0 0.0
        %689 = vmatpush1.msra.mxu0 %v657
        %690 = vmatprep.subr.mxu0 0.0
        %691 = vmatpush1.msra.mxu0 %v656
        %692 = vmatprep.subr.mxu0 0.0
        %693 = vmatpush1.msra.mxu0 %v655
        %694 = vmatprep.subr.mxu0 0.0
        %695 = vmatpush1.msra.mxu0 %v654
        %696 = vmatprep.subr.mxu0 0.0
        %697 = vmatpush1.msra.mxu0 %v653
        %698 = vmatprep.subr.mxu0 0.0
        %699 = vmatpush1.msra.mxu0 %v652
        %700 = vmatprep.subr.mxu0 0.0
        %701 = vmatpush2.msra.mxu0 0.0
        %702 = vmatprep.subr.mxu0 0.0
        %703 = vmatpush2.msra.mxu0 0.0
        %704 = vmatprep.subr.mxu0 0.0
        %705 = vmatpush2.msra.mxu0 0.0
        %706 = vmatprep.subr.mxu0 0.0
        %707 = vmatpush2.msra.mxu0 0.0
        %708 = vmatprep.subr.mxu0 0.0
        %709 = vmatpush2.msra.mxu0 0.0
        %710 = vmatprep.subr.mxu0 0.0
        %711 = vmatpush2.msra.mxu0 0.0
        %712 = vmatprep.subr.mxu0 0.0
        %713 = vmatpush2.msra.mxu0 0.0
        %714 = vmatprep.subr.mxu0 0.0
        %715 = vmatpush2.msra.mxu0 0.0
        %716 = vmatprep.subr.mxu0 0.0
        %717 = vmatpush2.msra.mxu0 0.0
        %718 = vmatprep.subr.mxu0 0.0
        %719 = vmatpush2.msra.mxu0 0.0
        %720 = vmatprep.subr.mxu0 0.0
        %721 = vmatpush2.msra.mxu0 0.0
        %722 = vmatprep.subr.mxu0 0.0
        %723 = vmatpush2.msra.mxu0 0.0
        %724 = vmatprep.subr.mxu0 0.0
        %725 = vmatpush2.msra.mxu0 0.0
        %726 = vmatprep.subr.mxu0 0.0
        %727 = vmatpush2.msra.mxu0 0.0
        %728 = vmatprep.subr.mxu0 0.0
        %729 = vmatpush2.msra.mxu0 0.0
        %730 = vmatprep.subr.mxu0 0.0
        %731 = vmatpush2.msra.mxu0 0.0
        %732 = vmatprep.mubr.f32.mxu0 0.0
        %733 = vmatmul.mubr.f32.gmra.mxu0 %v643
        %v734 = vpop.f32.mrf.mxu0
        %v735 = vadd.f32 0.0, %v734
        %v736 = vpop.f32.mrf.mxu0
        %737 = vmatprep.mubr.f32.mxu0 0.0
        %738 = vmatmul.mubr.f32.gmra.mxu0 %v644
        %v739 = vpop.f32.mrf.mxu0
        %v740 = vadd.f32 0.0, %v739
        %v741 = vpop.f32.mrf.mxu0
        %742 = vmatprep.mubr.f32.mxu0 0.0
        %743 = vmatmul.mubr.f32.gmra.mxu0 %v645
        %v744 = vpop.f32.mrf.mxu0
        %v745 = vadd.f32 0.0, %v744
        %v746 = vpop.f32.mrf.mxu0
        %747 = vmatprep.mubr.f32.mxu0 0.0
        %748 = vmatmul.mubr.f32.gmra.mxu0 %v646
        %v749 = vpop.f32.mrf.mxu0
        %v750 = vadd.f32 0.0, %v749
        %v751 = vpop.f32.mrf.mxu0
        %752 = vmatprep.mubr.f32.mxu0 0.0
        %753 = vmatmul.mubr.f32.gmra.mxu0 %v647
        %v754 = vpop.f32.mrf.mxu0
        %v755 = vadd.f32 0.0, %v754
        %v756 = vpop.f32.mrf.mxu0
        %757 = vmatprep.mubr.f32.mxu0 0.0
        %758 = vmatmul.mubr.f32.gmra.mxu0 %v648
        %v759 = vpop.f32.mrf.mxu0
        %v760 = vadd.f32 0.0, %v759
        %v761 = vpop.f32.mrf.mxu0
        %762 = vmatprep.mubr.f32.mxu0 0.0
        %763 = vmatmul.mubr.f32.gmra.mxu0 %v649
        %v764 = vpop.f32.mrf.mxu0
        %v765 = vadd.f32 0.0, %v764
        %v766 = vpop.f32.mrf.mxu0
        %767 = vmatprep.mubr.f32.mxu0 0.0
        %768 = vmatmul.mubr.f32.gmra.mxu0 %v650
        %v769 = vpop.f32.mrf.mxu0
        %v770 = vadd.f32 0.0, %v769
        %v771 = vpop.f32.mrf.mxu0
        %772 = vdwg.mxu0
        %v773 = vld [vmem:[#allocation2] sm:$0xff]
        %v774 = vld [vmem:[#allocation2 + $0x8] sm:$0xff]
        %v775 = vld [vmem:[#allocation2 + $0x10] sm:$0xff]
        %v776 = vld [vmem:[#allocation2 + $0x18] sm:$0xff]
        %v777 = vld [vmem:[#allocation2 + $0x20] sm:$0xff]
        %v778 = vld [vmem:[#allocation2 + $0x28] sm:$0xff]
        %v779 = vld [vmem:[#allocation2 + $0x30] sm:$0xff]
        %v780 = vld [vmem:[#allocation2 + $0x38] sm:$0xff]
        %v781 = vadd.f32 %v773, %v735
        %v782 = vadd.f32 %v774, %v740
        %v783 = vadd.f32 %v775, %v745
        %v784 = vadd.f32 %v776, %v750
        %v785 = vadd.f32 %v777, %v755
        %v786 = vadd.f32 %v778, %v760
        %v787 = vadd.f32 %v779, %v765
        %v788 = vadd.f32 %v780, %v770
        %789 = vst [vmem:[#allocation2] sm:$0xff] %v781
        %790 = vst [vmem:[#allocation2 + $0x8] sm:$0xff] %v782
        %791 = vst [vmem:[#allocation2 + $0x10] sm:$0xff] %v783
        %792 = vst [vmem:[#allocation2 + $0x18] sm:$0xff] %v784
        %793 = vst [vmem:[#allocation2 + $0x20] sm:$0xff] %v785
        %794 = vst [vmem:[#allocation2 + $0x28] sm:$0xff] %v786
        %795 = vst [vmem:[#allocation2 + $0x30] sm:$0xff] %v787
        %796 = vst [vmem:[#allocation2 + $0x38] sm:$0xff] %v788
        %v797 = vld [vmem:[%s642 + $0x1] sm:$0xff]
        %v798 = vld [vmem:[%s642 + $0x9] sm:$0xff]
        %v799 = vld [vmem:[%s642 + $0x19] sm:$0xff]
        %v800 = vld [vmem:[%s642 + $0x21] sm:$0xff]
        %v801 = vld [vmem:[%s642 + $0x31] sm:$0xff]
        %v802 = vld [vmem:[%s642 + $0x39] sm:$0xff]
        %v803 = vld [vmem:[%s642 + $0x49] sm:$0xff]
        %v804 = vld [vmem:[%s642 + $0x51] sm:$0xff]
        %s805 = scalar_lea.vmem [#allocation3], 384
        %v806 = vld [vmem:[%s805] sm:$0xff]
        %v807 = vld [vmem:[%s805 + $0x8] sm:$0xff]
        %v808 = vld [vmem:[%s805 + $0x10] sm:$0xff]
        %v809 = vld [vmem:[%s805 + $0x18] sm:$0xff]
        %v810 = vld [vmem:[%s805 + $0x20] sm:$0xff]
        %v811 = vld [vmem:[%s805 + $0x28] sm:$0xff]
        %v812 = vld [vmem:[%s805 + $0x30] sm:$0xff]
        %v813 = vld [vmem:[%s805 + $0x38] sm:$0xff]
        %v814 = vld [vmem:[%s805 + $0x40] sm:$0xff]
        %v815 = vld [vmem:[%s805 + $0x48] sm:$0xff]
        %v816 = vld [vmem:[%s805 + $0x50] sm:$0xff]
        %v817 = vld [vmem:[%s805 + $0x58] sm:$0xff]
        %v818 = vld [vmem:[%s805 + $0x60] sm:$0xff]
        %v819 = vld [vmem:[%s805 + $0x68] sm:$0xff]
        %v820 = vld [vmem:[%s805 + $0x70] sm:$0xff]
        %v821 = vld [vmem:[%s805 + $0x78] sm:$0xff]
        %822 = vmatprep.subr.mxu0 0.0
        %823 = vmatpush1.msra.mxu0 %v821
        %824 = vmatprep.subr.mxu0 0.0
        %825 = vmatpush1.msra.mxu0 %v820
        %826 = vmatprep.subr.mxu0 0.0
        %827 = vmatpush1.msra.mxu0 %v819
        %828 = vmatprep.subr.mxu0 0.0
        %829 = vmatpush1.msra.mxu0 %v818
        %830 = vmatprep.subr.mxu0 0.0
        %831 = vmatpush1.msra.mxu0 %v817
        %832 = vmatprep.subr.mxu0 0.0
        %833 = vmatpush1.msra.mxu0 %v816
        %834 = vmatprep.subr.mxu0 0.0
        %835 = vmatpush1.msra.mxu0 %v815
        %836 = vmatprep.subr.mxu0 0.0
        %837 = vmatpush1.msra.mxu0 %v814
        %838 = vmatprep.subr.mxu0 0.0
        %839 = vmatpush1.msra.mxu0 %v813
        %840 = vmatprep.subr.mxu0 0.0
        %841 = vmatpush1.msra.mxu0 %v812
        %842 = vmatprep.subr.mxu0 0.0
        %843 = vmatpush1.msra.mxu0 %v811
        %844 = vmatprep.subr.mxu0 0.0
        %845 = vmatpush1.msra.mxu0 %v810
        %846 = vmatprep.subr.mxu0 0.0
        %847 = vmatpush1.msra.mxu0 %v809
        %848 = vmatprep.subr.mxu0 0.0
        %849 = vmatpush1.msra.mxu0 %v808
        %850 = vmatprep.subr.mxu0 0.0
        %851 = vmatpush1.msra.mxu0 %v807
        %852 = vmatprep.subr.mxu0 0.0
        %853 = vmatpush1.msra.mxu0 %v806
        %854 = vmatprep.subr.mxu0 0.0
        %855 = vmatpush2.msra.mxu0 0.0
        %856 = vmatprep.subr.mxu0 0.0
        %857 = vmatpush2.msra.mxu0 0.0
        %858 = vmatprep.subr.mxu0 0.0
        %859 = vmatpush2.msra.mxu0 0.0
        %860 = vmatprep.subr.mxu0 0.0
        %861 = vmatpush2.msra.mxu0 0.0
        %862 = vmatprep.subr.mxu0 0.0
        %863 = vmatpush2.msra.mxu0 0.0
        %864 = vmatprep.subr.mxu0 0.0
        %865 = vmatpush2.msra.mxu0 0.0
        %866 = vmatprep.subr.mxu0 0.0
        %867 = vmatpush2.msra.mxu0 0.0
        %868 = vmatprep.subr.mxu0 0.0
        %869 = vmatpush2.msra.mxu0 0.0
        %870 = vmatprep.subr.mxu0 0.0
        %871 = vmatpush2.msra.mxu0 0.0
        %872 = vmatprep.subr.mxu0 0.0
        %873 = vmatpush2.msra.mxu0 0.0
        %874 = vmatprep.subr.mxu0 0.0
        %875 = vmatpush2.msra.mxu0 0.0
        %876 = vmatprep.subr.mxu0 0.0
        %877 = vmatpush2.msra.mxu0 0.0
        %878 = vmatprep.subr.mxu0 0.0
        %879 = vmatpush2.msra.mxu0 0.0
        %880 = vmatprep.subr.mxu0 0.0
        %881 = vmatpush2.msra.mxu0 0.0
        %882 = vmatprep.subr.mxu0 0.0
        %883 = vmatpush2.msra.mxu0 0.0
        %884 = vmatprep.subr.mxu0 0.0
        %885 = vmatpush2.msra.mxu0 0.0
        %886 = vmatprep.mubr.f32.mxu0 0.0
        %887 = vmatmul.mubr.f32.gmra.mxu0 %v797
        %v888 = vpop.f32.mrf.mxu0
        %v889 = vadd.f32 0.0, %v888
        %v890 = vpop.f32.mrf.mxu0
        %891 = vmatprep.mubr.f32.mxu0 0.0
        %892 = vmatmul.mubr.f32.gmra.mxu0 %v798
        %v893 = vpop.f32.mrf.mxu0
        %v894 = vadd.f32 0.0, %v893
        %v895 = vpop.f32.mrf.mxu0
        %896 = vmatprep.mubr.f32.mxu0 0.0
        %897 = vmatmul.mubr.f32.gmra.mxu0 %v799
        %v898 = vpop.f32.mrf.mxu0
        %v899 = vadd.f32 0.0, %v898
        %v900 = vpop.f32.mrf.mxu0
        %901 = vmatprep.mubr.f32.mxu0 0.0
        %902 = vmatmul.mubr.f32.gmra.mxu0 %v800
        %v903 = vpop.f32.mrf.mxu0
        %v904 = vadd.f32 0.0, %v903
        %v905 = vpop.f32.mrf.mxu0
        %906 = vmatprep.mubr.f32.mxu0 0.0
        %907 = vmatmul.mubr.f32.gmra.mxu0 %v801
        %v908 = vpop.f32.mrf.mxu0
        %v909 = vadd.f32 0.0, %v908
        %v910 = vpop.f32.mrf.mxu0
        %911 = vmatprep.mubr.f32.mxu0 0.0
        %912 = vmatmul.mubr.f32.gmra.mxu0 %v802
        %v913 = vpop.f32.mrf.mxu0
        %v914 = vadd.f32 0.0, %v913
        %v915 = vpop.f32.mrf.mxu0
        %916 = vmatprep.mubr.f32.mxu0 0.0
        %917 = vmatmul.mubr.f32.gmra.mxu0 %v803
        %v918 = vpop.f32.mrf.mxu0
        %v919 = vadd.f32 0.0, %v918
        %v920 = vpop.f32.mrf.mxu0
        %921 = vmatprep.mubr.f32.mxu0 0.0
        %922 = vmatmul.mubr.f32.gmra.mxu0 %v804
        %v923 = vpop.f32.mrf.mxu0
        %v924 = vadd.f32 0.0, %v923
        %v925 = vpop.f32.mrf.mxu0
        %926 = vdwg.mxu0
        %v927 = vld [vmem:[#allocation2] sm:$0xff]
        %v928 = vld [vmem:[#allocation2 + $0x8] sm:$0xff]
        %v929 = vld [vmem:[#allocation2 + $0x10] sm:$0xff]
        %v930 = vld [vmem:[#allocation2 + $0x18] sm:$0xff]
        %v931 = vld [vmem:[#allocation2 + $0x20] sm:$0xff]
        %v932 = vld [vmem:[#allocation2 + $0x28] sm:$0xff]
        %v933 = vld [vmem:[#allocation2 + $0x30] sm:$0xff]
        %v934 = vld [vmem:[#allocation2 + $0x38] sm:$0xff]
        %v935 = vadd.f32 %v927, %v889
        %v936 = vadd.f32 %v928, %v894
        %v937 = vadd.f32 %v929, %v899
        %v938 = vadd.f32 %v930, %v904
        %v939 = vadd.f32 %v931, %v909
        %v940 = vadd.f32 %v932, %v914
        %v941 = vadd.f32 %v933, %v919
        %v942 = vadd.f32 %v934, %v924
        %943 = vst [vmem:[#allocation2] sm:$0xff] %v935
        %944 = vst [vmem:[#allocation2 + $0x8] sm:$0xff] %v936
        %945 = vst [vmem:[#allocation2 + $0x10] sm:$0xff] %v937
        %946 = vst [vmem:[#allocation2 + $0x18] sm:$0xff] %v938
        %947 = vst [vmem:[#allocation2 + $0x20] sm:$0xff] %v939
        %948 = vst [vmem:[#allocation2 + $0x28] sm:$0xff] %v940
        %949 = vst [vmem:[#allocation2 + $0x30] sm:$0xff] %v941
        %950 = vst [vmem:[#allocation2 + $0x38] sm:$0xff] %v942
        %v951 = vld [vmem:[#allocation2] sm:$0xff]
        %v952 = vld [vmem:[#allocation2 + $0x8] sm:$0xff]
        %v953 = vld [vmem:[#allocation2 + $0x10] sm:$0xff]
        %v954 = vld [vmem:[#allocation2 + $0x18] sm:$0xff]
        %v955 = vld [vmem:[#allocation2 + $0x20] sm:$0xff]
        %v956 = vld [vmem:[#allocation2 + $0x28] sm:$0xff]
        %v957 = vld [vmem:[#allocation2 + $0x30] sm:$0xff]
        %v958 = vld [vmem:[#allocation2 + $0x38] sm:$0xff]
        %v960 = vlaneseq
        %v961 = vshrl.u32 %v960, 7
        %v962 = vsub.s32 0, %v961
        %v963 = vrot.slane %v345, %v962
        %v965 = vmul.f32 %v951, %v963
        %v966 = vmul.f32 %v952, %v963
        %v967 = vmul.f32 %v953, %v963
        %v968 = vmul.f32 %v954, %v963
        %v969 = vmul.f32 %v955, %v963
        %v970 = vmul.f32 %v956, %v963
        %v971 = vmul.f32 %v957, %v963
        %v972 = vmul.f32 %v958, %v963
        %v974 = vlaneseq
        %v975 = vshrl.u32 %v974, 7
        %v976 = vsub.s32 0, %v975
        %v977 = vrot.slane %v346, %v976
        %v979 = vadd.f32 %v965, %v977
        %v980 = vadd.f32 %v966, %v977
        %v981 = vadd.f32 %v967, %v977
        %v982 = vadd.f32 %v968, %v977
        %v983 = vadd.f32 %v969, %v977
        %v984 = vadd.f32 %v970, %v977
        %v985 = vadd.f32 %v971, %v977
        %v986 = vadd.f32 %v972, %v977
        %v987 = vmax.f32 %v979, 0.0
        %v988 = vmax.f32 %v980, 0.0
        %v989 = vmax.f32 %v981, 0.0
        %v990 = vmax.f32 %v982, 0.0
        %v991 = vmax.f32 %v983, 0.0
        %v992 = vmax.f32 %v984, 0.0
        %v993 = vmax.f32 %v985, 0.0
        %v994 = vmax.f32 %v986, 0.0
        %995 = vst [vmem:[%s313] sm:$0xff] %v987
        %996 = vst [vmem:[%s313 + $0x8] sm:$0xff] %v988
        %997 = vst [vmem:[%s313 + $0x10] sm:$0xff] %v989
        %998 = vst [vmem:[%s313 + $0x18] sm:$0xff] %v990
        %999 = vst [vmem:[%s313 + $0x20] sm:$0xff] %v991
        %1000 = vst [vmem:[%s313 + $0x28] sm:$0xff] %v992
        %1001 = vst [vmem:[%s313 + $0x30] sm:$0xff] %v993
        %1002 = vst [vmem:[%s313 + $0x38] sm:$0xff] %v994
        %v1003 = vld [vmem:[%s348 + $0x1] sm:$0xff]
        %v1004 = vld [vmem:[%s348 + $0x9] sm:$0xff]
        %v1005 = vld [vmem:[%s348 + $0x19] sm:$0xff]
        %v1006 = vld [vmem:[%s348 + $0x21] sm:$0xff]
        %v1007 = vld [vmem:[%s348 + $0x31] sm:$0xff]
        %v1008 = vld [vmem:[%s348 + $0x39] sm:$0xff]
        %v1009 = vld [vmem:[%s348 + $0x49] sm:$0xff]
        %v1010 = vld [vmem:[%s348 + $0x51] sm:$0xff]
        %s1011 = scalar_lea.vmem [#allocation3], 512
        %v1012 = vld [vmem:[%s1011] sm:$0xff]
        %v1013 = vld [vmem:[%s1011 + $0x8] sm:$0xff]
        %v1014 = vld [vmem:[%s1011 + $0x10] sm:$0xff]
        %v1015 = vld [vmem:[%s1011 + $0x18] sm:$0xff]
        %v1016 = vld [vmem:[%s1011 + $0x20] sm:$0xff]
        %v1017 = vld [vmem:[%s1011 + $0x28] sm:$0xff]
        %v1018 = vld [vmem:[%s1011 + $0x30] sm:$0xff]
        %v1019 = vld [vmem:[%s1011 + $0x38] sm:$0xff]
        %v1020 = vld [vmem:[%s1011 + $0x40] sm:$0xff]
        %v1021 = vld [vmem:[%s1011 + $0x48] sm:$0xff]
        %v1022 = vld [vmem:[%s1011 + $0x50] sm:$0xff]
        %v1023 = vld [vmem:[%s1011 + $0x58] sm:$0xff]
        %v1024 = vld [vmem:[%s1011 + $0x60] sm:$0xff]
        %v1025 = vld [vmem:[%s1011 + $0x68] sm:$0xff]
        %v1026 = vld [vmem:[%s1011 + $0x70] sm:$0xff]
        %v1027 = vld [vmem:[%s1011 + $0x78] sm:$0xff]
        %1028 = vmatprep.subr.mxu0 0.0
        %1029 = vmatpush1.msra.mxu0 %v1027
        %1030 = vmatprep.subr.mxu0 0.0
        %1031 = vmatpush1.msra.mxu0 %v1026
        %1032 = vmatprep.subr.mxu0 0.0
        %1033 = vmatpush1.msra.mxu0 %v1025
        %1034 = vmatprep.subr.mxu0 0.0
        %1035 = vmatpush1.msra.mxu0 %v1024
        %1036 = vmatprep.subr.mxu0 0.0
        %1037 = vmatpush1.msra.mxu0 %v1023
        %1038 = vmatprep.subr.mxu0 0.0
        %1039 = vmatpush1.msra.mxu0 %v1022
        %1040 = vmatprep.subr.mxu0 0.0
        %1041 = vmatpush1.msra.mxu0 %v1021
        %1042 = vmatprep.subr.mxu0 0.0
        %1043 = vmatpush1.msra.mxu0 %v1020
        %1044 = vmatprep.subr.mxu0 0.0
        %1045 = vmatpush1.msra.mxu0 %v1019
        %1046 = vmatprep.subr.mxu0 0.0
        %1047 = vmatpush1.msra.mxu0 %v1018
        %1048 = vmatprep.subr.mxu0 0.0
        %1049 = vmatpush1.msra.mxu0 %v1017
        %1050 = vmatprep.subr.mxu0 0.0
        %1051 = vmatpush1.msra.mxu0 %v1016
        %1052 = vmatprep.subr.mxu0 0.0
        %1053 = vmatpush1.msra.mxu0 %v1015
        %1054 = vmatprep.subr.mxu0 0.0
        %1055 = vmatpush1.msra.mxu0 %v1014
        %1056 = vmatprep.subr.mxu0 0.0
        %1057 = vmatpush1.msra.mxu0 %v1013
        %1058 = vmatprep.subr.mxu0 0.0
        %1059 = vmatpush1.msra.mxu0 %v1012
        %1060 = vmatprep.subr.mxu0 0.0
        %1061 = vmatpush2.msra.mxu0 0.0
        %1062 = vmatprep.subr.mxu0 0.0
        %1063 = vmatpush2.msra.mxu0 0.0
        %1064 = vmatprep.subr.mxu0 0.0
        %1065 = vmatpush2.msra.mxu0 0.0
        %1066 = vmatprep.subr.mxu0 0.0
        %1067 = vmatpush2.msra.mxu0 0.0
        %1068 = vmatprep.subr.mxu0 0.0
        %1069 = vmatpush2.msra.mxu0 0.0
        %1070 = vmatprep.subr.mxu0 0.0
        %1071 = vmatpush2.msra.mxu0 0.0
        %1072 = vmatprep.subr.mxu0 0.0
        %1073 = vmatpush2.msra.mxu0 0.0
        %1074 = vmatprep.subr.mxu0 0.0
        %1075 = vmatpush2.msra.mxu0 0.0
        %1076 = vmatprep.subr.mxu0 0.0
        %1077 = vmatpush2.msra.mxu0 0.0
        %1078 = vmatprep.subr.mxu0 0.0
        %1079 = vmatpush2.msra.mxu0 0.0
        %1080 = vmatprep.subr.mxu0 0.0
        %1081 = vmatpush2.msra.mxu0 0.0
        %1082 = vmatprep.subr.mxu0 0.0
        %1083 = vmatpush2.msra.mxu0 0.0
        %1084 = vmatprep.subr.mxu0 0.0
        %1085 = vmatpush2.msra.mxu0 0.0
        %1086 = vmatprep.subr.mxu0 0.0
        %1087 = vmatpush2.msra.mxu0 0.0
        %1088 = vmatprep.subr.mxu0 0.0
        %1089 = vmatpush2.msra.mxu0 0.0
        %1090 = vmatprep.subr.mxu0 0.0
        %1091 = vmatpush2.msra.mxu0 0.0
        %1092 = vmatprep.mubr.f32.mxu0 0.0
        %1093 = vmatmul.mubr.f32.gmra.mxu0 %v1003
        %v1094 = vpop.f32.mrf.mxu0
        %v1095 = vadd.f32 0.0, %v1094
        %v1096 = vpop.f32.mrf.mxu0
        %1097 = vmatprep.mubr.f32.mxu0 0.0
        %1098 = vmatmul.mubr.f32.gmra.mxu0 %v1004
        %v1099 = vpop.f32.mrf.mxu0
        %v1100 = vadd.f32 0.0, %v1099
        %v1101 = vpop.f32.mrf.mxu0
        %1102 = vmatprep.mubr.f32.mxu0 0.0
        %1103 = vmatmul.mubr.f32.gmra.mxu0 %v1005
        %v1104 = vpop.f32.mrf.mxu0
        %v1105 = vadd.f32 0.0, %v1104
        %v1106 = vpop.f32.mrf.mxu0
        %1107 = vmatprep.mubr.f32.mxu0 0.0
        %1108 = vmatmul.mubr.f32.gmra.mxu0 %v1006
        %v1109 = vpop.f32.mrf.mxu0
        %v1110 = vadd.f32 0.0, %v1109
        %v1111 = vpop.f32.mrf.mxu0
        %1112 = vmatprep.mubr.f32.mxu0 0.0
        %1113 = vmatmul.mubr.f32.gmra.mxu0 %v1007
        %v1114 = vpop.f32.mrf.mxu0
        %v1115 = vadd.f32 0.0, %v1114
        %v1116 = vpop.f32.mrf.mxu0
        %1117 = vmatprep.mubr.f32.mxu0 0.0
        %1118 = vmatmul.mubr.f32.gmra.mxu0 %v1008
        %v1119 = vpop.f32.mrf.mxu0
        %v1120 = vadd.f32 0.0, %v1119
        %v1121 = vpop.f32.mrf.mxu0
        %1122 = vmatprep.mubr.f32.mxu0 0.0
        %1123 = vmatmul.mubr.f32.gmra.mxu0 %v1009
        %v1124 = vpop.f32.mrf.mxu0
        %v1125 = vadd.f32 0.0, %v1124
        %v1126 = vpop.f32.mrf.mxu0
        %1127 = vmatprep.mubr.f32.mxu0 0.0
        %1128 = vmatmul.mubr.f32.gmra.mxu0 %v1010
        %v1129 = vpop.f32.mrf.mxu0
        %v1130 = vadd.f32 0.0, %v1129
        %v1131 = vpop.f32.mrf.mxu0
        %1132 = vdwg.mxu0
        %1133 = vst [vmem:[#allocation2] sm:$0xff] %v1095
        %1134 = vst [vmem:[#allocation2 + $0x8] sm:$0xff] %v1100
        %1135 = vst [vmem:[#allocation2 + $0x10] sm:$0xff] %v1105
        %1136 = vst [vmem:[#allocation2 + $0x18] sm:$0xff] %v1110
        %1137 = vst [vmem:[#allocation2 + $0x20] sm:$0xff] %v1115
        %1138 = vst [vmem:[#allocation2 + $0x28] sm:$0xff] %v1120
        %1139 = vst [vmem:[#allocation2 + $0x30] sm:$0xff] %v1125
        %1140 = vst [vmem:[#allocation2 + $0x38] sm:$0xff] %v1130
        %v1141 = vld [vmem:[%s348 + $0x2] sm:$0xff]
        %v1142 = vld [vmem:[%s348 + $0xa] sm:$0xff]
        %v1143 = vld [vmem:[%s348 + $0x1a] sm:$0xff]
        %v1144 = vld [vmem:[%s348 + $0x22] sm:$0xff]
        %v1145 = vld [vmem:[%s348 + $0x32] sm:$0xff]
        %v1146 = vld [vmem:[%s348 + $0x3a] sm:$0xff]
        %v1147 = vld [vmem:[%s348 + $0x4a] sm:$0xff]
        %v1148 = vld [vmem:[%s348 + $0x52] sm:$0xff]
        %s1149 = scalar_lea.vmem [#allocation3], 640
        %v1150 = vld [vmem:[%s1149] sm:$0xff]
        %v1151 = vld [vmem:[%s1149 + $0x8] sm:$0xff]
        %v1152 = vld [vmem:[%s1149 + $0x10] sm:$0xff]
        %v1153 = vld [vmem:[%s1149 + $0x18] sm:$0xff]
        %v1154 = vld [vmem:[%s1149 + $0x20] sm:$0xff]
        %v1155 = vld [vmem:[%s1149 + $0x28] sm:$0xff]
        %v1156 = vld [vmem:[%s1149 + $0x30] sm:$0xff]
        %v1157 = vld [vmem:[%s1149 + $0x38] sm:$0xff]
        %v1158 = vld [vmem:[%s1149 + $0x40] sm:$0xff]
        %v1159 = vld [vmem:[%s1149 + $0x48] sm:$0xff]
        %v1160 = vld [vmem:[%s1149 + $0x50] sm:$0xff]
        %v1161 = vld [vmem:[%s1149 + $0x58] sm:$0xff]
        %v1162 = vld [vmem:[%s1149 + $0x60] sm:$0xff]
        %v1163 = vld [vmem:[%s1149 + $0x68] sm:$0xff]
        %v1164 = vld [vmem:[%s1149 + $0x70] sm:$0xff]
        %v1165 = vld [vmem:[%s1149 + $0x78] sm:$0xff]
        %1166 = vmatprep.subr.mxu0 0.0
        %1167 = vmatpush1.msra.mxu0 %v1165
        %1168 = vmatprep.subr.mxu0 0.0
        %1169 = vmatpush1.msra.mxu0 %v1164
        %1170 = vmatprep.subr.mxu0 0.0
        %1171 = vmatpush1.msra.mxu0 %v1163
        %1172 = vmatprep.subr.mxu0 0.0
        %1173 = vmatpush1.msra.mxu0 %v1162
        %1174 = vmatprep.subr.mxu0 0.0
        %1175 = vmatpush1.msra.mxu0 %v1161
        %1176 = vmatprep.subr.mxu0 0.0
        %1177 = vmatpush1.msra.mxu0 %v1160
        %1178 = vmatprep.subr.mxu0 0.0
        %1179 = vmatpush1.msra.mxu0 %v1159
        %1180 = vmatprep.subr.mxu0 0.0
        %1181 = vmatpush1.msra.mxu0 %v1158
        %1182 = vmatprep.subr.mxu0 0.0
        %1183 = vmatpush1.msra.mxu0 %v1157
        %1184 = vmatprep.subr.mxu0 0.0
        %1185 = vmatpush1.msra.mxu0 %v1156
        %1186 = vmatprep.subr.mxu0 0.0
        %1187 = vmatpush1.msra.mxu0 %v1155
        %1188 = vmatprep.subr.mxu0 0.0
        %1189 = vmatpush1.msra.mxu0 %v1154
        %1190 = vmatprep.subr.mxu0 0.0
        %1191 = vmatpush1.msra.mxu0 %v1153
        %1192 = vmatprep.subr.mxu0 0.0
        %1193 = vmatpush1.msra.mxu0 %v1152
        %1194 = vmatprep.subr.mxu0 0.0
        %1195 = vmatpush1.msra.mxu0 %v1151
        %1196 = vmatprep.subr.mxu0 0.0
        %1197 = vmatpush1.msra.mxu0 %v1150
        %1198 = vmatprep.subr.mxu0 0.0
        %1199 = vmatpush2.msra.mxu0 0.0
        %1200 = vmatprep.subr.mxu0 0.0
        %1201 = vmatpush2.msra.mxu0 0.0
        %1202 = vmatprep.subr.mxu0 0.0
        %1203 = vmatpush2.msra.mxu0 0.0
        %1204 = vmatprep.subr.mxu0 0.0
        %1205 = vmatpush2.msra.mxu0 0.0
        %1206 = vmatprep.subr.mxu0 0.0
        %1207 = vmatpush2.msra.mxu0 0.0
        %1208 = vmatprep.subr.mxu0 0.0
        %1209 = vmatpush2.msra.mxu0 0.0
        %1210 = vmatprep.subr.mxu0 0.0
        %1211 = vmatpush2.msra.mxu0 0.0
        %1212 = vmatprep.subr.mxu0 0.0
        %1213 = vmatpush2.msra.mxu0 0.0
        %1214 = vmatprep.subr.mxu0 0.0
        %1215 = vmatpush2.msra.mxu0 0.0
        %1216 = vmatprep.subr.mxu0 0.0
        %1217 = vmatpush2.msra.mxu0 0.0
        %1218 = vmatprep.subr.mxu0 0.0
        %1219 = vmatpush2.msra.mxu0 0.0
        %1220 = vmatprep.subr.mxu0 0.0
        %1221 = vmatpush2.msra.mxu0 0.0
        %1222 = vmatprep.subr.mxu0 0.0
        %1223 = vmatpush2.msra.mxu0 0.0
        %1224 = vmatprep.subr.mxu0 0.0
        %1225 = vmatpush2.msra.mxu0 0.0
        %1226 = vmatprep.subr.mxu0 0.0
        %1227 = vmatpush2.msra.mxu0 0.0
        %1228 = vmatprep.subr.mxu0 0.0
        %1229 = vmatpush2.msra.mxu0 0.0
        %1230 = vmatprep.mubr.f32.mxu0 0.0
        %1231 = vmatmul.mubr.f32.gmra.mxu0 %v1141
        %v1232 = vpop.f32.mrf.mxu0
        %v1233 = vadd.f32 0.0, %v1232
        %v1234 = vpop.f32.mrf.mxu0
        %1235 = vmatprep.mubr.f32.mxu0 0.0
        %1236 = vmatmul.mubr.f32.gmra.mxu0 %v1142
        %v1237 = vpop.f32.mrf.mxu0
        %v1238 = vadd.f32 0.0, %v1237
        %v1239 = vpop.f32.mrf.mxu0
        %1240 = vmatprep.mubr.f32.mxu0 0.0
        %1241 = vmatmul.mubr.f32.gmra.mxu0 %v1143
        %v1242 = vpop.f32.mrf.mxu0
        %v1243 = vadd.f32 0.0, %v1242
        %v1244 = vpop.f32.mrf.mxu0
        %1245 = vmatprep.mubr.f32.mxu0 0.0
        %1246 = vmatmul.mubr.f32.gmra.mxu0 %v1144
        %v1247 = vpop.f32.mrf.mxu0
        %v1248 = vadd.f32 0.0, %v1247
        %v1249 = vpop.f32.mrf.mxu0
        %1250 = vmatprep.mubr.f32.mxu0 0.0
        %1251 = vmatmul.mubr.f32.gmra.mxu0 %v1145
        %v1252 = vpop.f32.mrf.mxu0
        %v1253 = vadd.f32 0.0, %v1252
        %v1254 = vpop.f32.mrf.mxu0
        %1255 = vmatprep.mubr.f32.mxu0 0.0
        %1256 = vmatmul.mubr.f32.gmra.mxu0 %v1146
        %v1257 = vpop.f32.mrf.mxu0
        %v1258 = vadd.f32 0.0, %v1257
        %v1259 = vpop.f32.mrf.mxu0
        %1260 = vmatprep.mubr.f32.mxu0 0.0
        %1261 = vmatmul.mubr.f32.gmra.mxu0 %v1147
        %v1262 = vpop.f32.mrf.mxu0
        %v1263 = vadd.f32 0.0, %v1262
        %v1264 = vpop.f32.mrf.mxu0
        %1265 = vmatprep.mubr.f32.mxu0 0.0
        %1266 = vmatmul.mubr.f32.gmra.mxu0 %v1148
        %v1267 = vpop.f32.mrf.mxu0
        %v1268 = vadd.f32 0.0, %v1267
        %v1269 = vpop.f32.mrf.mxu0
        %1270 = vdwg.mxu0
        %v1271 = vld [vmem:[#allocation2] sm:$0xff]
        %v1272 = vld [vmem:[#allocation2 + $0x8] sm:$0xff]
        %v1273 = vld [vmem:[#allocation2 + $0x10] sm:$0xff]
        %v1274 = vld [vmem:[#allocation2 + $0x18] sm:$0xff]
        %v1275 = vld [vmem:[#allocation2 + $0x20] sm:$0xff]
        %v1276 = vld [vmem:[#allocation2 + $0x28] sm:$0xff]
        %v1277 = vld [vmem:[#allocation2 + $0x30] sm:$0xff]
        %v1278 = vld [vmem:[#allocation2 + $0x38] sm:$0xff]
        %v1279 = vadd.f32 %v1271, %v1233
        %v1280 = vadd.f32 %v1272, %v1238
        %v1281 = vadd.f32 %v1273, %v1243
        %v1282 = vadd.f32 %v1274, %v1248
        %v1283 = vadd.f32 %v1275, %v1253
        %v1284 = vadd.f32 %v1276, %v1258
        %v1285 = vadd.f32 %v1277, %v1263
        %v1286 = vadd.f32 %v1278, %v1268
        %1287 = vst [vmem:[#allocation2] sm:$0xff] %v1279
        %1288 = vst [vmem:[#allocation2 + $0x8] sm:$0xff] %v1280
        %1289 = vst [vmem:[#allocation2 + $0x10] sm:$0xff] %v1281
        %1290 = vst [vmem:[#allocation2 + $0x18] sm:$0xff] %v1282
        %1291 = vst [vmem:[#allocation2 + $0x20] sm:$0xff] %v1283
        %1292 = vst [vmem:[#allocation2 + $0x28] sm:$0xff] %v1284
        %1293 = vst [vmem:[#allocation2 + $0x30] sm:$0xff] %v1285
        %1294 = vst [vmem:[#allocation2 + $0x38] sm:$0xff] %v1286
        %v1295 = vld [vmem:[%s642 + $0x1] sm:$0xff]
        %v1296 = vld [vmem:[%s642 + $0x9] sm:$0xff]
        %v1297 = vld [vmem:[%s642 + $0x19] sm:$0xff]
        %v1298 = vld [vmem:[%s642 + $0x21] sm:$0xff]
        %v1299 = vld [vmem:[%s642 + $0x31] sm:$0xff]
        %v1300 = vld [vmem:[%s642 + $0x39] sm:$0xff]
        %v1301 = vld [vmem:[%s642 + $0x49] sm:$0xff]
        %v1302 = vld [vmem:[%s642 + $0x51] sm:$0xff]
        %s1303 = scalar_lea.vmem [#allocation3], 768
        %v1304 = vld [vmem:[%s1303] sm:$0xff]
        %v1305 = vld [vmem:[%s1303 + $0x8] sm:$0xff]
        %v1306 = vld [vmem:[%s1303 + $0x10] sm:$0xff]
        %v1307 = vld [vmem:[%s1303 + $0x18] sm:$0xff]
        %v1308 = vld [vmem:[%s1303 + $0x20] sm:$0xff]
        %v1309 = vld [vmem:[%s1303 + $0x28] sm:$0xff]
        %v1310 = vld [vmem:[%s1303 + $0x30] sm:$0xff]
        %v1311 = vld [vmem:[%s1303 + $0x38] sm:$0xff]
        %v1312 = vld [vmem:[%s1303 + $0x40] sm:$0xff]
        %v1313 = vld [vmem:[%s1303 + $0x48] sm:$0xff]
        %v1314 = vld [vmem:[%s1303 + $0x50] sm:$0xff]
        %v1315 = vld [vmem:[%s1303 + $0x58] sm:$0xff]
        %v1316 = vld [vmem:[%s1303 + $0x60] sm:$0xff]
        %v1317 = vld [vmem:[%s1303 + $0x68] sm:$0xff]
        %v1318 = vld [vmem:[%s1303 + $0x70] sm:$0xff]
        %v1319 = vld [vmem:[%s1303 + $0x78] sm:$0xff]
        %1320 = vmatprep.subr.mxu0 0.0
        %1321 = vmatpush1.msra.mxu0 %v1319
        %1322 = vmatprep.subr.mxu0 0.0
        %1323 = vmatpush1.msra.mxu0 %v1318
        %1324 = vmatprep.subr.mxu0 0.0
        %1325 = vmatpush1.msra.mxu0 %v1317
        %1326 = vmatprep.subr.mxu0 0.0
        %1327 = vmatpush1.msra.mxu0 %v1316
        %1328 = vmatprep.subr.mxu0 0.0
        %1329 = vmatpush1.msra.mxu0 %v1315
        %1330 = vmatprep.subr.mxu0 0.0
        %1331 = vmatpush1.msra.mxu0 %v1314
        %1332 = vmatprep.subr.mxu0 0.0
        %1333 = vmatpush1.msra.mxu0 %v1313
        %1334 = vmatprep.subr.mxu0 0.0
        %1335 = vmatpush1.msra.mxu0 %v1312
        %1336 = vmatprep.subr.mxu0 0.0
        %1337 = vmatpush1.msra.mxu0 %v1311
        %1338 = vmatprep.subr.mxu0 0.0
        %1339 = vmatpush1.msra.mxu0 %v1310
        %1340 = vmatprep.subr.mxu0 0.0
        %1341 = vmatpush1.msra.mxu0 %v1309
        %1342 = vmatprep.subr.mxu0 0.0
        %1343 = vmatpush1.msra.mxu0 %v1308
        %1344 = vmatprep.subr.mxu0 0.0
        %1345 = vmatpush1.msra.mxu0 %v1307
        %1346 = vmatprep.subr.mxu0 0.0
        %1347 = vmatpush1.msra.mxu0 %v1306
        %1348 = vmatprep.subr.mxu0 0.0
        %1349 = vmatpush1.msra.mxu0 %v1305
        %1350 = vmatprep.subr.mxu0 0.0
        %1351 = vmatpush1.msra.mxu0 %v1304
        %1352 = vmatprep.subr.mxu0 0.0
        %1353 = vmatpush2.msra.mxu0 0.0
        %1354 = vmatprep.subr.mxu0 0.0
        %1355 = vmatpush2.msra.mxu0 0.0
        %1356 = vmatprep.subr.mxu0 0.0
        %1357 = vmatpush2.msra.mxu0 0.0
        %1358 = vmatprep.subr.mxu0 0.0
        %1359 = vmatpush2.msra.mxu0 0.0
        %1360 = vmatprep.subr.mxu0 0.0
        %1361 = vmatpush2.msra.mxu0 0.0
        %1362 = vmatprep.subr.mxu0 0.0
        %1363 = vmatpush2.msra.mxu0 0.0
        %1364 = vmatprep.subr.mxu0 0.0
        %1365 = vmatpush2.msra.mxu0 0.0
        %1366 = vmatprep.subr.mxu0 0.0
        %1367 = vmatpush2.msra.mxu0 0.0
        %1368 = vmatprep.subr.mxu0 0.0
        %1369 = vmatpush2.msra.mxu0 0.0
        %1370 = vmatprep.subr.mxu0 0.0
        %1371 = vmatpush2.msra.mxu0 0.0
        %1372 = vmatprep.subr.mxu0 0.0
        %1373 = vmatpush2.msra.mxu0 0.0
        %1374 = vmatprep.subr.mxu0 0.0
        %1375 = vmatpush2.msra.mxu0 0.0
        %1376 = vmatprep.subr.mxu0 0.0
        %1377 = vmatpush2.msra.mxu0 0.0
        %1378 = vmatprep.subr.mxu0 0.0
        %1379 = vmatpush2.msra.mxu0 0.0
        %1380 = vmatprep.subr.mxu0 0.0
        %1381 = vmatpush2.msra.mxu0 0.0
        %1382 = vmatprep.subr.mxu0 0.0
        %1383 = vmatpush2.msra.mxu0 0.0
        %1384 = vmatprep.mubr.f32.mxu0 0.0
        %1385 = vmatmul.mubr.f32.gmra.mxu0 %v1295
        %v1386 = vpop.f32.mrf.mxu0
        %v1387 = vadd.f32 0.0, %v1386
        %v1388 = vpop.f32.mrf.mxu0
        %1389 = vmatprep.mubr.f32.mxu0 0.0
        %1390 = vmatmul.mubr.f32.gmra.mxu0 %v1296
        %v1391 = vpop.f32.mrf.mxu0
        %v1392 = vadd.f32 0.0, %v1391
        %v1393 = vpop.f32.mrf.mxu0
        %1394 = vmatprep.mubr.f32.mxu0 0.0
        %1395 = vmatmul.mubr.f32.gmra.mxu0 %v1297
        %v1396 = vpop.f32.mrf.mxu0
        %v1397 = vadd.f32 0.0, %v1396
        %v1398 = vpop.f32.mrf.mxu0
        %1399 = vmatprep.mubr.f32.mxu0 0.0
        %1400 = vmatmul.mubr.f32.gmra.mxu0 %v1298
        %v1401 = vpop.f32.mrf.mxu0
        %v1402 = vadd.f32 0.0, %v1401
        %v1403 = vpop.f32.mrf.mxu0
        %1404 = vmatprep.mubr.f32.mxu0 0.0
        %1405 = vmatmul.mubr.f32.gmra.mxu0 %v1299
        %v1406 = vpop.f32.mrf.mxu0
        %v1407 = vadd.f32 0.0, %v1406
        %v1408 = vpop.f32.mrf.mxu0
        %1409 = vmatprep.mubr.f32.mxu0 0.0
        %1410 = vmatmul.mubr.f32.gmra.mxu0 %v1300
        %v1411 = vpop.f32.mrf.mxu0
        %v1412 = vadd.f32 0.0, %v1411
        %v1413 = vpop.f32.mrf.mxu0
        %1414 = vmatprep.mubr.f32.mxu0 0.0
        %1415 = vmatmul.mubr.f32.gmra.mxu0 %v1301
        %v1416 = vpop.f32.mrf.mxu0
        %v1417 = vadd.f32 0.0, %v1416
        %v1418 = vpop.f32.mrf.mxu0
        %1419 = vmatprep.mubr.f32.mxu0 0.0
        %1420 = vmatmul.mubr.f32.gmra.mxu0 %v1302
        %v1421 = vpop.f32.mrf.mxu0
        %v1422 = vadd.f32 0.0, %v1421
        %v1423 = vpop.f32.mrf.mxu0
        %1424 = vdwg.mxu0
        %v1425 = vld [vmem:[#allocation2] sm:$0xff]
        %v1426 = vld [vmem:[#allocation2 + $0x8] sm:$0xff]
        %v1427 = vld [vmem:[#allocation2 + $0x10] sm:$0xff]
        %v1428 = vld [vmem:[#allocation2 + $0x18] sm:$0xff]
        %v1429 = vld [vmem:[#allocation2 + $0x20] sm:$0xff]
        %v1430 = vld [vmem:[#allocation2 + $0x28] sm:$0xff]
        %v1431 = vld [vmem:[#allocation2 + $0x30] sm:$0xff]
        %v1432 = vld [vmem:[#allocation2 + $0x38] sm:$0xff]
        %v1433 = vadd.f32 %v1425, %v1387
        %v1434 = vadd.f32 %v1426, %v1392
        %v1435 = vadd.f32 %v1427, %v1397
        %v1436 = vadd.f32 %v1428, %v1402
        %v1437 = vadd.f32 %v1429, %v1407
        %v1438 = vadd.f32 %v1430, %v1412
        %v1439 = vadd.f32 %v1431, %v1417
        %v1440 = vadd.f32 %v1432, %v1422
        %1441 = vst [vmem:[#allocation2] sm:$0xff] %v1433
        %1442 = vst [vmem:[#allocation2 + $0x8] sm:$0xff] %v1434
        %1443 = vst [vmem:[#allocation2 + $0x10] sm:$0xff] %v1435
        %1444 = vst [vmem:[#allocation2 + $0x18] sm:$0xff] %v1436
        %1445 = vst [vmem:[#allocation2 + $0x20] sm:$0xff] %v1437
        %1446 = vst [vmem:[#allocation2 + $0x28] sm:$0xff] %v1438
        %1447 = vst [vmem:[#allocation2 + $0x30] sm:$0xff] %v1439
        %1448 = vst [vmem:[#allocation2 + $0x38] sm:$0xff] %v1440
        %v1449 = vld [vmem:[%s642 + $0x2] sm:$0xff]
        %v1450 = vld [vmem:[%s642 + $0xa] sm:$0xff]
        %v1451 = vld [vmem:[%s642 + $0x1a] sm:$0xff]
        %v1452 = vld [vmem:[%s642 + $0x22] sm:$0xff]
        %v1453 = vld [vmem:[%s642 + $0x32] sm:$0xff]
        %v1454 = vld [vmem:[%s642 + $0x3a] sm:$0xff]
        %v1455 = vld [vmem:[%s642 + $0x4a] sm:$0xff]
        %v1456 = vld [vmem:[%s642 + $0x52] sm:$0xff]
        %s1457 = scalar_lea.vmem [#allocation3], 896
        %v1458 = vld [vmem:[%s1457] sm:$0xff]
        %v1459 = vld [vmem:[%s1457 + $0x8] sm:$0xff]
        %v1460 = vld [vmem:[%s1457 + $0x10] sm:$0xff]
        %v1461 = vld [vmem:[%s1457 + $0x18] sm:$0xff]
        %v1462 = vld [vmem:[%s1457 + $0x20] sm:$0xff]
        %v1463 = vld [vmem:[%s1457 + $0x28] sm:$0xff]
        %v1464 = vld [vmem:[%s1457 + $0x30] sm:$0xff]
        %v1465 = vld [vmem:[%s1457 + $0x38] sm:$0xff]
        %v1466 = vld [vmem:[%s1457 + $0x40] sm:$0xff]
        %v1467 = vld [vmem:[%s1457 + $0x48] sm:$0xff]
        %v1468 = vld [vmem:[%s1457 + $0x50] sm:$0xff]
        %v1469 = vld [vmem:[%s1457 + $0x58] sm:$0xff]
        %v1470 = vld [vmem:[%s1457 + $0x60] sm:$0xff]
        %v1471 = vld [vmem:[%s1457 + $0x68] sm:$0xff]
        %v1472 = vld [vmem:[%s1457 + $0x70] sm:$0xff]
        %v1473 = vld [vmem:[%s1457 + $0x78] sm:$0xff]
        %1474 = vmatprep.subr.mxu0 0.0
        %1475 = vmatpush1.msra.mxu0 %v1473
        %1476 = vmatprep.subr.mxu0 0.0
        %1477 = vmatpush1.msra.mxu0 %v1472
        %1478 = vmatprep.subr.mxu0 0.0
        %1479 = vmatpush1.msra.mxu0 %v1471
        %1480 = vmatprep.subr.mxu0 0.0
        %1481 = vmatpush1.msra.mxu0 %v1470
        %1482 = vmatprep.subr.mxu0 0.0
        %1483 = vmatpush1.msra.mxu0 %v1469
        %1484 = vmatprep.subr.mxu0 0.0
        %1485 = vmatpush1.msra.mxu0 %v1468
        %1486 = vmatprep.subr.mxu0 0.0
        %1487 = vmatpush1.msra.mxu0 %v1467
        %1488 = vmatprep.subr.mxu0 0.0
        %1489 = vmatpush1.msra.mxu0 %v1466
        %1490 = vmatprep.subr.mxu0 0.0
        %1491 = vmatpush1.msra.mxu0 %v1465
        %1492 = vmatprep.subr.mxu0 0.0
        %1493 = vmatpush1.msra.mxu0 %v1464
        %1494 = vmatprep.subr.mxu0 0.0
        %1495 = vmatpush1.msra.mxu0 %v1463
        %1496 = vmatprep.subr.mxu0 0.0
        %1497 = vmatpush1.msra.mxu0 %v1462
        %1498 = vmatprep.subr.mxu0 0.0
        %1499 = vmatpush1.msra.mxu0 %v1461
        %1500 = vmatprep.subr.mxu0 0.0
        %1501 = vmatpush1.msra.mxu0 %v1460
        %1502 = vmatprep.subr.mxu0 0.0
        %1503 = vmatpush1.msra.mxu0 %v1459
        %1504 = vmatprep.subr.mxu0 0.0
        %1505 = vmatpush1.msra.mxu0 %v1458
        %1506 = vmatprep.subr.mxu0 0.0
        %1507 = vmatpush2.msra.mxu0 0.0
        %1508 = vmatprep.subr.mxu0 0.0
        %1509 = vmatpush2.msra.mxu0 0.0
        %1510 = vmatprep.subr.mxu0 0.0
        %1511 = vmatpush2.msra.mxu0 0.0
        %1512 = vmatprep.subr.mxu0 0.0
        %1513 = vmatpush2.msra.mxu0 0.0
        %1514 = vmatprep.subr.mxu0 0.0
        %1515 = vmatpush2.msra.mxu0 0.0
        %1516 = vmatprep.subr.mxu0 0.0
        %1517 = vmatpush2.msra.mxu0 0.0
        %1518 = vmatprep.subr.mxu0 0.0
        %1519 = vmatpush2.msra.mxu0 0.0
        %1520 = vmatprep.subr.mxu0 0.0
        %1521 = vmatpush2.msra.mxu0 0.0
        %1522 = vmatprep.subr.mxu0 0.0
        %1523 = vmatpush2.msra.mxu0 0.0
        %1524 = vmatprep.subr.mxu0 0.0
        %1525 = vmatpush2.msra.mxu0 0.0
        %1526 = vmatprep.subr.mxu0 0.0
        %1527 = vmatpush2.msra.mxu0 0.0
        %1528 = vmatprep.subr.mxu0 0.0
        %1529 = vmatpush2.msra.mxu0 0.0
        %1530 = vmatprep.subr.mxu0 0.0
        %1531 = vmatpush2.msra.mxu0 0.0
        %1532 = vmatprep.subr.mxu0 0.0
        %1533 = vmatpush2.msra.mxu0 0.0
        %1534 = vmatprep.subr.mxu0 0.0
        %1535 = vmatpush2.msra.mxu0 0.0
        %1536 = vmatprep.subr.mxu0 0.0
        %1537 = vmatpush2.msra.mxu0 0.0
        %1538 = vmatprep.mubr.f32.mxu0 0.0
        %1539 = vmatmul.mubr.f32.gmra.mxu0 %v1449
        %v1540 = vpop.f32.mrf.mxu0
        %v1541 = vadd.f32 0.0, %v1540
        %v1542 = vpop.f32.mrf.mxu0
        %1543 = vmatprep.mubr.f32.mxu0 0.0
        %1544 = vmatmul.mubr.f32.gmra.mxu0 %v1450
        %v1545 = vpop.f32.mrf.mxu0
        %v1546 = vadd.f32 0.0, %v1545
        %v1547 = vpop.f32.mrf.mxu0
        %1548 = vmatprep.mubr.f32.mxu0 0.0
        %1549 = vmatmul.mubr.f32.gmra.mxu0 %v1451
        %v1550 = vpop.f32.mrf.mxu0
        %v1551 = vadd.f32 0.0, %v1550
        %v1552 = vpop.f32.mrf.mxu0
        %1553 = vmatprep.mubr.f32.mxu0 0.0
        %1554 = vmatmul.mubr.f32.gmra.mxu0 %v1452
        %v1555 = vpop.f32.mrf.mxu0
        %v1556 = vadd.f32 0.0, %v1555
        %v1557 = vpop.f32.mrf.mxu0
        %1558 = vmatprep.mubr.f32.mxu0 0.0
        %1559 = vmatmul.mubr.f32.gmra.mxu0 %v1453
        %v1560 = vpop.f32.mrf.mxu0
        %v1561 = vadd.f32 0.0, %v1560
        %v1562 = vpop.f32.mrf.mxu0
        %1563 = vmatprep.mubr.f32.mxu0 0.0
        %1564 = vmatmul.mubr.f32.gmra.mxu0 %v1454
        %v1565 = vpop.f32.mrf.mxu0
        %v1566 = vadd.f32 0.0, %v1565
        %v1567 = vpop.f32.mrf.mxu0
        %1568 = vmatprep.mubr.f32.mxu0 0.0
        %1569 = vmatmul.mubr.f32.gmra.mxu0 %v1455
        %v1570 = vpop.f32.mrf.mxu0
        %v1571 = vadd.f32 0.0, %v1570
        %v1572 = vpop.f32.mrf.mxu0
        %1573 = vmatprep.mubr.f32.mxu0 0.0
        %1574 = vmatmul.mubr.f32.gmra.mxu0 %v1456
        %v1575 = vpop.f32.mrf.mxu0
        %v1576 = vadd.f32 0.0, %v1575
        %v1577 = vpop.f32.mrf.mxu0
        %1578 = vdwg.mxu0
        %v1579 = vld [vmem:[#allocation2] sm:$0xff]
        %v1580 = vld [vmem:[#allocation2 + $0x8] sm:$0xff]
        %v1581 = vld [vmem:[#allocation2 + $0x10] sm:$0xff]
        %v1582 = vld [vmem:[#allocation2 + $0x18] sm:$0xff]
        %v1583 = vld [vmem:[#allocation2 + $0x20] sm:$0xff]
        %v1584 = vld [vmem:[#allocation2 + $0x28] sm:$0xff]
        %v1585 = vld [vmem:[#allocation2 + $0x30] sm:$0xff]
        %v1586 = vld [vmem:[#allocation2 + $0x38] sm:$0xff]
        %v1587 = vadd.f32 %v1579, %v1541
        %v1588 = vadd.f32 %v1580, %v1546
        %v1589 = vadd.f32 %v1581, %v1551
        %v1590 = vadd.f32 %v1582, %v1556
        %v1591 = vadd.f32 %v1583, %v1561
        %v1592 = vadd.f32 %v1584, %v1566
        %v1593 = vadd.f32 %v1585, %v1571
        %v1594 = vadd.f32 %v1586, %v1576
        %1595 = vst [vmem:[#allocation2] sm:$0xff] %v1587
        %1596 = vst [vmem:[#allocation2 + $0x8] sm:$0xff] %v1588
        %1597 = vst [vmem:[#allocation2 + $0x10] sm:$0xff] %v1589
        %1598 = vst [vmem:[#allocation2 + $0x18] sm:$0xff] %v1590
        %1599 = vst [vmem:[#allocation2 + $0x20] sm:$0xff] %v1591
        %1600 = vst [vmem:[#allocation2 + $0x28] sm:$0xff] %v1592
        %1601 = vst [vmem:[#allocation2 + $0x30] sm:$0xff] %v1593
        %1602 = vst [vmem:[#allocation2 + $0x38] sm:$0xff] %v1594
        %v1603 = vld [vmem:[#allocation2] sm:$0xff]
        %v1604 = vld [vmem:[#allocation2 + $0x8] sm:$0xff]
        %v1605 = vld [vmem:[#allocation2 + $0x10] sm:$0xff]
        %v1606 = vld [vmem:[#allocation2 + $0x18] sm:$0xff]
        %v1607 = vld [vmem:[#allocation2 + $0x20] sm:$0xff]
        %v1608 = vld [vmem:[#allocation2 + $0x28] sm:$0xff]
        %v1609 = vld [vmem:[#allocation2 + $0x30] sm:$0xff]
        %v1610 = vld [vmem:[#allocation2 + $0x38] sm:$0xff]
        %v1611 = vmul.f32 %v1603, %v963
        %v1612 = vmul.f32 %v1604, %v963
        %v1613 = vmul.f32 %v1605, %v963
        %v1614 = vmul.f32 %v1606, %v963
        %v1615 = vmul.f32 %v1607, %v963
        %v1616 = vmul.f32 %v1608, %v963
        %v1617 = vmul.f32 %v1609, %v963
        %v1618 = vmul.f32 %v1610, %v963
        %v1619 = vadd.f32 %v1611, %v977
        %v1620 = vadd.f32 %v1612, %v977
        %v1621 = vadd.f32 %v1613, %v977
        %v1622 = vadd.f32 %v1614, %v977
        %v1623 = vadd.f32 %v1615, %v977
        %v1624 = vadd.f32 %v1616, %v977
        %v1625 = vadd.f32 %v1617, %v977
        %v1626 = vadd.f32 %v1618, %v977
        %v1627 = vmax.f32 %v1619, 0.0
        %v1628 = vmax.f32 %v1620, 0.0
        %v1629 = vmax.f32 %v1621, 0.0
        %v1630 = vmax.f32 %v1622, 0.0
        %v1631 = vmax.f32 %v1623, 0.0
        %v1632 = vmax.f32 %v1624, 0.0
        %v1633 = vmax.f32 %v1625, 0.0
        %v1634 = vmax.f32 %v1626, 0.0
        %1635 = vst [vmem:[%s320] sm:$0xff] %v1627
        %1636 = vst [vmem:[%s320 + $0x8] sm:$0xff] %v1628
        %1637 = vst [vmem:[%s320 + $0x10] sm:$0xff] %v1629
        %1638 = vst [vmem:[%s320 + $0x18] sm:$0xff] %v1630
        %1639 = vst [vmem:[%s320 + $0x20] sm:$0xff] %v1631
        %1640 = vst [vmem:[%s320 + $0x28] sm:$0xff] %v1632
        %1641 = vst [vmem:[%s320 + $0x30] sm:$0xff] %v1633
        %1642 = vst [vmem:[%s320 + $0x38] sm:$0xff] %v1634
        %v1643 = vld [vmem:[%s642] sm:$0xff]
        %v1644 = vld [vmem:[%s642 + $0x8] sm:$0xff]
        %v1645 = vld [vmem:[%s642 + $0x18] sm:$0xff]
        %v1646 = vld [vmem:[%s642 + $0x20] sm:$0xff]
        %v1647 = vld [vmem:[%s642 + $0x30] sm:$0xff]
        %v1648 = vld [vmem:[%s642 + $0x38] sm:$0xff]
        %v1649 = vld [vmem:[%s642 + $0x48] sm:$0xff]
        %v1650 = vld [vmem:[%s642 + $0x50] sm:$0xff]
        %s1651 = scalar_lea.vmem [#allocation3], 1024
        %v1652 = vld [vmem:[%s1651] sm:$0xff]
        %v1653 = vld [vmem:[%s1651 + $0x8] sm:$0xff]
        %v1654 = vld [vmem:[%s1651 + $0x10] sm:$0xff]
        %v1655 = vld [vmem:[%s1651 + $0x18] sm:$0xff]
        %v1656 = vld [vmem:[%s1651 + $0x20] sm:$0xff]
        %v1657 = vld [vmem:[%s1651 + $0x28] sm:$0xff]
        %v1658 = vld [vmem:[%s1651 + $0x30] sm:$0xff]
        %v1659 = vld [vmem:[%s1651 + $0x38] sm:$0xff]
        %v1660 = vld [vmem:[%s1651 + $0x40] sm:$0xff]
        %v1661 = vld [vmem:[%s1651 + $0x48] sm:$0xff]
        %v1662 = vld [vmem:[%s1651 + $0x50] sm:$0xff]
        %v1663 = vld [vmem:[%s1651 + $0x58] sm:$0xff]
        %v1664 = vld [vmem:[%s1651 + $0x60] sm:$0xff]
        %v1665 = vld [vmem:[%s1651 + $0x68] sm:$0xff]
        %v1666 = vld [vmem:[%s1651 + $0x70] sm:$0xff]
        %v1667 = vld [vmem:[%s1651 + $0x78] sm:$0xff]
        %1668 = vmatprep.subr.mxu0 0.0
        %1669 = vmatpush1.msra.mxu0 %v1667
        %1670 = vmatprep.subr.mxu0 0.0
        %1671 = vmatpush1.msra.mxu0 %v1666
        %1672 = vmatprep.subr.mxu0 0.0
        %1673 = vmatpush1.msra.mxu0 %v1665
        %1674 = vmatprep.subr.mxu0 0.0
        %1675 = vmatpush1.msra.mxu0 %v1664
        %1676 = vmatprep.subr.mxu0 0.0
        %1677 = vmatpush1.msra.mxu0 %v1663
        %1678 = vmatprep.subr.mxu0 0.0
        %1679 = vmatpush1.msra.mxu0 %v1662
        %1680 = vmatprep.subr.mxu0 0.0
        %1681 = vmatpush1.msra.mxu0 %v1661
        %1682 = vmatprep.subr.mxu0 0.0
        %1683 = vmatpush1.msra.mxu0 %v1660
        %1684 = vmatprep.subr.mxu0 0.0
        %1685 = vmatpush1.msra.mxu0 %v1659
        %1686 = vmatprep.subr.mxu0 0.0
        %1687 = vmatpush1.msra.mxu0 %v1658
        %1688 = vmatprep.subr.mxu0 0.0
        %1689 = vmatpush1.msra.mxu0 %v1657
        %1690 = vmatprep.subr.mxu0 0.0
        %1691 = vmatpush1.msra.mxu0 %v1656
        %1692 = vmatprep.subr.mxu0 0.0
        %1693 = vmatpush1.msra.mxu0 %v1655
        %1694 = vmatprep.subr.mxu0 0.0
        %1695 = vmatpush1.msra.mxu0 %v1654
        %1696 = vmatprep.subr.mxu0 0.0
        %1697 = vmatpush1.msra.mxu0 %v1653
        %1698 = vmatprep.subr.mxu0 0.0
        %1699 = vmatpush1.msra.mxu0 %v1652
        %1700 = vmatprep.subr.mxu0 0.0
        %1701 = vmatpush2.msra.mxu0 0.0
        %1702 = vmatprep.subr.mxu0 0.0
        %1703 = vmatpush2.msra.mxu0 0.0
        %1704 = vmatprep.subr.mxu0 0.0
        %1705 = vmatpush2.msra.mxu0 0.0
        %1706 = vmatprep.subr.mxu0 0.0
        %1707 = vmatpush2.msra.mxu0 0.0
        %1708 = vmatprep.subr.mxu0 0.0
        %1709 = vmatpush2.msra.mxu0 0.0
        %1710 = vmatprep.subr.mxu0 0.0
        %1711 = vmatpush2.msra.mxu0 0.0
        %1712 = vmatprep.subr.mxu0 0.0
        %1713 = vmatpush2.msra.mxu0 0.0
        %1714 = vmatprep.subr.mxu0 0.0
        %1715 = vmatpush2.msra.mxu0 0.0
        %1716 = vmatprep.subr.mxu0 0.0
        %1717 = vmatpush2.msra.mxu0 0.0
        %1718 = vmatprep.subr.mxu0 0.0
        %1719 = vmatpush2.msra.mxu0 0.0
        %1720 = vmatprep.subr.mxu0 0.0
        %1721 = vmatpush2.msra.mxu0 0.0
        %1722 = vmatprep.subr.mxu0 0.0
        %1723 = vmatpush2.msra.mxu0 0.0
        %1724 = vmatprep.subr.mxu0 0.0
        %1725 = vmatpush2.msra.mxu0 0.0
        %1726 = vmatprep.subr.mxu0 0.0
        %1727 = vmatpush2.msra.mxu0 0.0
        %1728 = vmatprep.subr.mxu0 0.0
        %1729 = vmatpush2.msra.mxu0 0.0
        %1730 = vmatprep.subr.mxu0 0.0
        %1731 = vmatpush2.msra.mxu0 0.0
        %1732 = vmatprep.mubr.f32.mxu0 0.0
        %1733 = vmatmul.mubr.f32.gmra.mxu0 %v1643
        %v1734 = vpop.f32.mrf.mxu0
        %v1735 = vadd.f32 0.0, %v1734
        %v1736 = vpop.f32.mrf.mxu0
        %1737 = vmatprep.mubr.f32.mxu0 0.0
        %1738 = vmatmul.mubr.f32.gmra.mxu0 %v1644
        %v1739 = vpop.f32.mrf.mxu0
        %v1740 = vadd.f32 0.0, %v1739
        %v1741 = vpop.f32.mrf.mxu0
        %1742 = vmatprep.mubr.f32.mxu0 0.0
        %1743 = vmatmul.mubr.f32.gmra.mxu0 %v1645
        %v1744 = vpop.f32.mrf.mxu0
        %v1745 = vadd.f32 0.0, %v1744
        %v1746 = vpop.f32.mrf.mxu0
        %1747 = vmatprep.mubr.f32.mxu0 0.0
        %1748 = vmatmul.mubr.f32.gmra.mxu0 %v1646
        %v1749 = vpop.f32.mrf.mxu0
        %v1750 = vadd.f32 0.0, %v1749
        %v1751 = vpop.f32.mrf.mxu0
        %1752 = vmatprep.mubr.f32.mxu0 0.0
        %1753 = vmatmul.mubr.f32.gmra.mxu0 %v1647
        %v1754 = vpop.f32.mrf.mxu0
        %v1755 = vadd.f32 0.0, %v1754
        %v1756 = vpop.f32.mrf.mxu0
        %1757 = vmatprep.mubr.f32.mxu0 0.0
        %1758 = vmatmul.mubr.f32.gmra.mxu0 %v1648
        %v1759 = vpop.f32.mrf.mxu0
        %v1760 = vadd.f32 0.0, %v1759
        %v1761 = vpop.f32.mrf.mxu0
        %1762 = vmatprep.mubr.f32.mxu0 0.0
        %1763 = vmatmul.mubr.f32.gmra.mxu0 %v1649
        %v1764 = vpop.f32.mrf.mxu0
        %v1765 = vadd.f32 0.0, %v1764
        %v1766 = vpop.f32.mrf.mxu0
        %1767 = vmatprep.mubr.f32.mxu0 0.0
        %1768 = vmatmul.mubr.f32.gmra.mxu0 %v1650
        %v1769 = vpop.f32.mrf.mxu0
        %v1770 = vadd.f32 0.0, %v1769
        %v1771 = vpop.f32.mrf.mxu0
        %1772 = vdwg.mxu0
        %1773 = vst [vmem:[#allocation2] sm:$0xff] %v1735
        %1774 = vst [vmem:[#allocation2 + $0x8] sm:$0xff] %v1740
        %1775 = vst [vmem:[#allocation2 + $0x10] sm:$0xff] %v1745
        %1776 = vst [vmem:[#allocation2 + $0x18] sm:$0xff] %v1750
        %1777 = vst [vmem:[#allocation2 + $0x20] sm:$0xff] %v1755
        %1778 = vst [vmem:[#allocation2 + $0x28] sm:$0xff] %v1760
        %1779 = vst [vmem:[#allocation2 + $0x30] sm:$0xff] %v1765
        %1780 = vst [vmem:[#allocation2 + $0x38] sm:$0xff] %v1770
        %v1781 = vld [vmem:[%s642 + $0x1] sm:$0xff]
        %v1782 = vld [vmem:[%s642 + $0x9] sm:$0xff]
        %v1783 = vld [vmem:[%s642 + $0x19] sm:$0xff]
        %v1784 = vld [vmem:[%s642 + $0x21] sm:$0xff]
        %v1785 = vld [vmem:[%s642 + $0x31] sm:$0xff]
        %v1786 = vld [vmem:[%s642 + $0x39] sm:$0xff]
        %v1787 = vld [vmem:[%s642 + $0x49] sm:$0xff]
        %v1788 = vld [vmem:[%s642 + $0x51] sm:$0xff]
        %s1789 = scalar_lea.vmem [#allocation3], 1152
        %v1790 = vld [vmem:[%s1789] sm:$0xff]
        %v1791 = vld [vmem:[%s1789 + $0x8] sm:$0xff]
        %v1792 = vld [vmem:[%s1789 + $0x10] sm:$0xff]
        %v1793 = vld [vmem:[%s1789 + $0x18] sm:$0xff]
        %v1794 = vld [vmem:[%s1789 + $0x20] sm:$0xff]
        %v1795 = vld [vmem:[%s1789 + $0x28] sm:$0xff]
        %v1796 = vld [vmem:[%s1789 + $0x30] sm:$0xff]
        %v1797 = vld [vmem:[%s1789 + $0x38] sm:$0xff]
        %v1798 = vld [vmem:[%s1789 + $0x40] sm:$0xff]
        %v1799 = vld [vmem:[%s1789 + $0x48] sm:$0xff]
        %v1800 = vld [vmem:[%s1789 + $0x50] sm:$0xff]
        %v1801 = vld [vmem:[%s1789 + $0x58] sm:$0xff]
        %v1802 = vld [vmem:[%s1789 + $0x60] sm:$0xff]
        %v1803 = vld [vmem:[%s1789 + $0x68] sm:$0xff]
        %v1804 = vld [vmem:[%s1789 + $0x70] sm:$0xff]
        %v1805 = vld [vmem:[%s1789 + $0x78] sm:$0xff]
        %1806 = vmatprep.subr.mxu0 0.0
        %1807 = vmatpush1.msra.mxu0 %v1805
        %1808 = vmatprep.subr.mxu0 0.0
        %1809 = vmatpush1.msra.mxu0 %v1804
        %1810 = vmatprep.subr.mxu0 0.0
        %1811 = vmatpush1.msra.mxu0 %v1803
        %1812 = vmatprep.subr.mxu0 0.0
        %1813 = vmatpush1.msra.mxu0 %v1802
        %1814 = vmatprep.subr.mxu0 0.0
        %1815 = vmatpush1.msra.mxu0 %v1801
        %1816 = vmatprep.subr.mxu0 0.0
        %1817 = vmatpush1.msra.mxu0 %v1800
        %1818 = vmatprep.subr.mxu0 0.0
        %1819 = vmatpush1.msra.mxu0 %v1799
        %1820 = vmatprep.subr.mxu0 0.0
        %1821 = vmatpush1.msra.mxu0 %v1798
        %1822 = vmatprep.subr.mxu0 0.0
        %1823 = vmatpush1.msra.mxu0 %v1797
        %1824 = vmatprep.subr.mxu0 0.0
        %1825 = vmatpush1.msra.mxu0 %v1796
        %1826 = vmatprep.subr.mxu0 0.0
        %1827 = vmatpush1.msra.mxu0 %v1795
        %1828 = vmatprep.subr.mxu0 0.0
        %1829 = vmatpush1.msra.mxu0 %v1794
        %1830 = vmatprep.subr.mxu0 0.0
        %1831 = vmatpush1.msra.mxu0 %v1793
        %1832 = vmatprep.subr.mxu0 0.0
        %1833 = vmatpush1.msra.mxu0 %v1792
        %1834 = vmatprep.subr.mxu0 0.0
        %1835 = vmatpush1.msra.mxu0 %v1791
        %1836 = vmatprep.subr.mxu0 0.0
        %1837 = vmatpush1.msra.mxu0 %v1790
        %1838 = vmatprep.subr.mxu0 0.0
        %1839 = vmatpush2.msra.mxu0 0.0
        %1840 = vmatprep.subr.mxu0 0.0
        %1841 = vmatpush2.msra.mxu0 0.0
        %1842 = vmatprep.subr.mxu0 0.0
        %1843 = vmatpush2.msra.mxu0 0.0
        %1844 = vmatprep.subr.mxu0 0.0
        %1845 = vmatpush2.msra.mxu0 0.0
        %1846 = vmatprep.subr.mxu0 0.0
        %1847 = vmatpush2.msra.mxu0 0.0
        %1848 = vmatprep.subr.mxu0 0.0
        %1849 = vmatpush2.msra.mxu0 0.0
        %1850 = vmatprep.subr.mxu0 0.0
        %1851 = vmatpush2.msra.mxu0 0.0
        %1852 = vmatprep.subr.mxu0 0.0
        %1853 = vmatpush2.msra.mxu0 0.0
        %1854 = vmatprep.subr.mxu0 0.0
        %1855 = vmatpush2.msra.mxu0 0.0
        %1856 = vmatprep.subr.mxu0 0.0
        %1857 = vmatpush2.msra.mxu0 0.0
        %1858 = vmatprep.subr.mxu0 0.0
        %1859 = vmatpush2.msra.mxu0 0.0
        %1860 = vmatprep.subr.mxu0 0.0
        %1861 = vmatpush2.msra.mxu0 0.0
        %1862 = vmatprep.subr.mxu0 0.0
        %1863 = vmatpush2.msra.mxu0 0.0
        %1864 = vmatprep.subr.mxu0 0.0
        %1865 = vmatpush2.msra.mxu0 0.0
        %1866 = vmatprep.subr.mxu0 0.0
        %1867 = vmatpush2.msra.mxu0 0.0
        %1868 = vmatprep.subr.mxu0 0.0
        %1869 = vmatpush2.msra.mxu0 0.0
        %1870 = vmatprep.mubr.f32.mxu0 0.0
        %1871 = vmatmul.mubr.f32.gmra.mxu0 %v1781
        %v1872 = vpop.f32.mrf.mxu0
        %v1873 = vadd.f32 0.0, %v1872
        %v1874 = vpop.f32.mrf.mxu0
        %1875 = vmatprep.mubr.f32.mxu0 0.0
        %1876 = vmatmul.mubr.f32.gmra.mxu0 %v1782
        %v1877 = vpop.f32.mrf.mxu0
        %v1878 = vadd.f32 0.0, %v1877
        %v1879 = vpop.f32.mrf.mxu0
        %1880 = vmatprep.mubr.f32.mxu0 0.0
        %1881 = vmatmul.mubr.f32.gmra.mxu0 %v1783
        %v1882 = vpop.f32.mrf.mxu0
        %v1883 = vadd.f32 0.0, %v1882
        %v1884 = vpop.f32.mrf.mxu0
        %1885 = vmatprep.mubr.f32.mxu0 0.0
        %1886 = vmatmul.mubr.f32.gmra.mxu0 %v1784
        %v1887 = vpop.f32.mrf.mxu0
        %v1888 = vadd.f32 0.0, %v1887
        %v1889 = vpop.f32.mrf.mxu0
        %1890 = vmatprep.mubr.f32.mxu0 0.0
        %1891 = vmatmul.mubr.f32.gmra.mxu0 %v1785
        %v1892 = vpop.f32.mrf.mxu0
        %v1893 = vadd.f32 0.0, %v1892
        %v1894 = vpop.f32.mrf.mxu0
        %1895 = vmatprep.mubr.f32.mxu0 0.0
        %1896 = vmatmul.mubr.f32.gmra.mxu0 %v1786
        %v1897 = vpop.f32.mrf.mxu0
        %v1898 = vadd.f32 0.0, %v1897
        %v1899 = vpop.f32.mrf.mxu0
        %1900 = vmatprep.mubr.f32.mxu0 0.0
        %1901 = vmatmul.mubr.f32.gmra.mxu0 %v1787
        %v1902 = vpop.f32.mrf.mxu0
        %v1903 = vadd.f32 0.0, %v1902
        %v1904 = vpop.f32.mrf.mxu0
        %1905 = vmatprep.mubr.f32.mxu0 0.0
        %1906 = vmatmul.mubr.f32.gmra.mxu0 %v1788
        %v1907 = vpop.f32.mrf.mxu0
        %v1908 = vadd.f32 0.0, %v1907
        %v1909 = vpop.f32.mrf.mxu0
        %1910 = vdwg.mxu0
        %v1911 = vld [vmem:[#allocation2] sm:$0xff]
        %v1912 = vld [vmem:[#allocation2 + $0x8] sm:$0xff]
        %v1913 = vld [vmem:[#allocation2 + $0x10] sm:$0xff]
        %v1914 = vld [vmem:[#allocation2 + $0x18] sm:$0xff]
        %v1915 = vld [vmem:[#allocation2 + $0x20] sm:$0xff]
        %v1916 = vld [vmem:[#allocation2 + $0x28] sm:$0xff]
        %v1917 = vld [vmem:[#allocation2 + $0x30] sm:$0xff]
        %v1918 = vld [vmem:[#allocation2 + $0x38] sm:$0xff]
        %v1919 = vadd.f32 %v1911, %v1873
        %v1920 = vadd.f32 %v1912, %v1878
        %v1921 = vadd.f32 %v1913, %v1883
        %v1922 = vadd.f32 %v1914, %v1888
        %v1923 = vadd.f32 %v1915, %v1893
        %v1924 = vadd.f32 %v1916, %v1898
        %v1925 = vadd.f32 %v1917, %v1903
        %v1926 = vadd.f32 %v1918, %v1908
        %1927 = vst [vmem:[#allocation2] sm:$0xff] %v1919
        %1928 = vst [vmem:[#allocation2 + $0x8] sm:$0xff] %v1920
        %1929 = vst [vmem:[#allocation2 + $0x10] sm:$0xff] %v1921
        %1930 = vst [vmem:[#allocation2 + $0x18] sm:$0xff] %v1922
        %1931 = vst [vmem:[#allocation2 + $0x20] sm:$0xff] %v1923
        %1932 = vst [vmem:[#allocation2 + $0x28] sm:$0xff] %v1924
        %1933 = vst [vmem:[#allocation2 + $0x30] sm:$0xff] %v1925
        %1934 = vst [vmem:[#allocation2 + $0x38] sm:$0xff] %v1926
        %s1935 = sadd.s32 %s344, 2
        %s1936 = smul.u32 %s1935, 24
        %s1937 = scalar_lea.vmem %s339, %s1936
        %v1938 = vld [vmem:[%s1937] sm:$0xff]
        %v1939 = vld [vmem:[%s1937 + $0x8] sm:$0xff]
        %v1940 = vld [vmem:[%s1937 + $0x18] sm:$0xff]
        %v1941 = vld [vmem:[%s1937 + $0x20] sm:$0xff]
        %v1942 = vld [vmem:[%s1937 + $0x30] sm:$0xff]
        %v1943 = vld [vmem:[%s1937 + $0x38] sm:$0xff]
        %v1944 = vld [vmem:[%s1937 + $0x48] sm:$0xff]
        %v1945 = vld [vmem:[%s1937 + $0x50] sm:$0xff]
        %s1946 = scalar_lea.vmem [#allocation3], 1280
        %v1947 = vld [vmem:[%s1946] sm:$0xff]
        %v1948 = vld [vmem:[%s1946 + $0x8] sm:$0xff]
        %v1949 = vld [vmem:[%s1946 + $0x10] sm:$0xff]
        %v1950 = vld [vmem:[%s1946 + $0x18] sm:$0xff]
        %v1951 = vld [vmem:[%s1946 + $0x20] sm:$0xff]
        %v1952 = vld [vmem:[%s1946 + $0x28] sm:$0xff]
        %v1953 = vld [vmem:[%s1946 + $0x30] sm:$0xff]
        %v1954 = vld [vmem:[%s1946 + $0x38] sm:$0xff]
        %v1955 = vld [vmem:[%s1946 + $0x40] sm:$0xff]
        %v1956 = vld [vmem:[%s1946 + $0x48] sm:$0xff]
        %v1957 = vld [vmem:[%s1946 + $0x50] sm:$0xff]
        %v1958 = vld [vmem:[%s1946 + $0x58] sm:$0xff]
        %v1959 = vld [vmem:[%s1946 + $0x60] sm:$0xff]
        %v1960 = vld [vmem:[%s1946 + $0x68] sm:$0xff]
        %v1961 = vld [vmem:[%s1946 + $0x70] sm:$0xff]
        %v1962 = vld [vmem:[%s1946 + $0x78] sm:$0xff]
        %1963 = vmatprep.subr.mxu0 0.0
        %1964 = vmatpush1.msra.mxu0 %v1962
        %1965 = vmatprep.subr.mxu0 0.0
        %1966 = vmatpush1.msra.mxu0 %v1961
        %1967 = vmatprep.subr.mxu0 0.0
        %1968 = vmatpush1.msra.mxu0 %v1960
        %1969 = vmatprep.subr.mxu0 0.0
        %1970 = vmatpush1.msra.mxu0 %v1959
        %1971 = vmatprep.subr.mxu0 0.0
        %1972 = vmatpush1.msra.mxu0 %v1958
        %1973 = vmatprep.subr.mxu0 0.0
        %1974 = vmatpush1.msra.mxu0 %v1957
        %1975 = vmatprep.subr.mxu0 0.0
        %1976 = vmatpush1.msra.mxu0 %v1956
        %1977 = vmatprep.subr.mxu0 0.0
        %1978 = vmatpush1.msra.mxu0 %v1955
        %1979 = vmatprep.subr.mxu0 0.0
        %1980 = vmatpush1.msra.mxu0 %v1954
        %1981 = vmatprep.subr.mxu0 0.0
        %1982 = vmatpush1.msra.mxu0 %v1953
        %1983 = vmatprep.subr.mxu0 0.0
        %1984 = vmatpush1.msra.mxu0 %v1952
        %1985 = vmatprep.subr.mxu0 0.0
        %1986 = vmatpush1.msra.mxu0 %v1951
        %1987 = vmatprep.subr.mxu0 0.0
        %1988 = vmatpush1.msra.mxu0 %v1950
        %1989 = vmatprep.subr.mxu0 0.0
        %1990 = vmatpush1.msra.mxu0 %v1949
        %1991 = vmatprep.subr.mxu0 0.0
        %1992 = vmatpush1.msra.mxu0 %v1948
        %1993 = vmatprep.subr.mxu0 0.0
        %1994 = vmatpush1.msra.mxu0 %v1947
        %1995 = vmatprep.subr.mxu0 0.0
        %1996 = vmatpush2.msra.mxu0 0.0
        %1997 = vmatprep.subr.mxu0 0.0
        %1998 = vmatpush2.msra.mxu0 0.0
        %1999 = vmatprep.subr.mxu0 0.0
        %2000 = vmatpush2.msra.mxu0 0.0
        %2001 = vmatprep.subr.mxu0 0.0
        %2002 = vmatpush2.msra.mxu0 0.0
        %2003 = vmatprep.subr.mxu0 0.0
        %2004 = vmatpush2.msra.mxu0 0.0
        %2005 = vmatprep.subr.mxu0 0.0
        %2006 = vmatpush2.msra.mxu0 0.0
        %2007 = vmatprep.subr.mxu0 0.0
        %2008 = vmatpush2.msra.mxu0 0.0
        %2009 = vmatprep.subr.mxu0 0.0
        %2010 = vmatpush2.msra.mxu0 0.0
        %2011 = vmatprep.subr.mxu0 0.0
        %2012 = vmatpush2.msra.mxu0 0.0
        %2013 = vmatprep.subr.mxu0 0.0
        %2014 = vmatpush2.msra.mxu0 0.0
        %2015 = vmatprep.subr.mxu0 0.0
        %2016 = vmatpush2.msra.mxu0 0.0
        %2017 = vmatprep.subr.mxu0 0.0
        %2018 = vmatpush2.msra.mxu0 0.0
        %2019 = vmatprep.subr.mxu0 0.0
        %2020 = vmatpush2.msra.mxu0 0.0
        %2021 = vmatprep.subr.mxu0 0.0
        %2022 = vmatpush2.msra.mxu0 0.0
        %2023 = vmatprep.subr.mxu0 0.0
        %2024 = vmatpush2.msra.mxu0 0.0
        %2025 = vmatprep.subr.mxu0 0.0
        %2026 = vmatpush2.msra.mxu0 0.0
        %2027 = vmatprep.mubr.f32.mxu0 0.0
        %2028 = vmatmul.mubr.f32.gmra.mxu0 %v1938
        %v2029 = vpop.f32.mrf.mxu0
        %v2030 = vadd.f32 0.0, %v2029
        %v2031 = vpop.f32.mrf.mxu0
        %2032 = vmatprep.mubr.f32.mxu0 0.0
        %2033 = vmatmul.mubr.f32.gmra.mxu0 %v1939
        %v2034 = vpop.f32.mrf.mxu0
        %v2035 = vadd.f32 0.0, %v2034
        %v2036 = vpop.f32.mrf.mxu0
        %2037 = vmatprep.mubr.f32.mxu0 0.0
        %2038 = vmatmul.mubr.f32.gmra.mxu0 %v1940
        %v2039 = vpop.f32.mrf.mxu0
        %v2040 = vadd.f32 0.0, %v2039
        %v2041 = vpop.f32.mrf.mxu0
        %2042 = vmatprep.mubr.f32.mxu0 0.0
        %2043 = vmatmul.mubr.f32.gmra.mxu0 %v1941
        %v2044 = vpop.f32.mrf.mxu0
        %v2045 = vadd.f32 0.0, %v2044
        %v2046 = vpop.f32.mrf.mxu0
        %2047 = vmatprep.mubr.f32.mxu0 0.0
        %2048 = vmatmul.mubr.f32.gmra.mxu0 %v1942
        %v2049 = vpop.f32.mrf.mxu0
        %v2050 = vadd.f32 0.0, %v2049
        %v2051 = vpop.f32.mrf.mxu0
        %2052 = vmatprep.mubr.f32.mxu0 0.0
        %2053 = vmatmul.mubr.f32.gmra.mxu0 %v1943
        %v2054 = vpop.f32.mrf.mxu0
        %v2055 = vadd.f32 0.0, %v2054
        %v2056 = vpop.f32.mrf.mxu0
        %2057 = vmatprep.mubr.f32.mxu0 0.0
        %2058 = vmatmul.mubr.f32.gmra.mxu0 %v1944
        %v2059 = vpop.f32.mrf.mxu0
        %v2060 = vadd.f32 0.0, %v2059
        %v2061 = vpop.f32.mrf.mxu0
        %2062 = vmatprep.mubr.f32.mxu0 0.0
        %2063 = vmatmul.mubr.f32.gmra.mxu0 %v1945
        %v2064 = vpop.f32.mrf.mxu0
        %v2065 = vadd.f32 0.0, %v2064
        %v2066 = vpop.f32.mrf.mxu0
        %2067 = vdwg.mxu0
        %v2068 = vld [vmem:[#allocation2] sm:$0xff]
        %v2069 = vld [vmem:[#allocation2 + $0x8] sm:$0xff]
        %v2070 = vld [vmem:[#allocation2 + $0x10] sm:$0xff]
        %v2071 = vld [vmem:[#allocation2 + $0x18] sm:$0xff]
        %v2072 = vld [vmem:[#allocation2 + $0x20] sm:$0xff]
        %v2073 = vld [vmem:[#allocation2 + $0x28] sm:$0xff]
        %v2074 = vld [vmem:[#allocation2 + $0x30] sm:$0xff]
        %v2075 = vld [vmem:[#allocation2 + $0x38] sm:$0xff]
        %v2076 = vadd.f32 %v2068, %v2030
        %v2077 = vadd.f32 %v2069, %v2035
        %v2078 = vadd.f32 %v2070, %v2040
        %v2079 = vadd.f32 %v2071, %v2045
        %v2080 = vadd.f32 %v2072, %v2050
        %v2081 = vadd.f32 %v2073, %v2055
        %v2082 = vadd.f32 %v2074, %v2060
        %v2083 = vadd.f32 %v2075, %v2065
        %2084 = vst [vmem:[#allocation2] sm:$0xff] %v2076
        %2085 = vst [vmem:[#allocation2 + $0x8] sm:$0xff] %v2077
        %2086 = vst [vmem:[#allocation2 + $0x10] sm:$0xff] %v2078
        %2087 = vst [vmem:[#allocation2 + $0x18] sm:$0xff] %v2079
        %2088 = vst [vmem:[#allocation2 + $0x20] sm:$0xff] %v2080
        %2089 = vst [vmem:[#allocation2 + $0x28] sm:$0xff] %v2081
        %2090 = vst [vmem:[#allocation2 + $0x30] sm:$0xff] %v2082
        %2091 = vst [vmem:[#allocation2 + $0x38] sm:$0xff] %v2083
        %v2092 = vld [vmem:[%s1937 + $0x1] sm:$0xff]
        %v2093 = vld [vmem:[%s1937 + $0x9] sm:$0xff]
        %v2094 = vld [vmem:[%s1937 + $0x19] sm:$0xff]
        %v2095 = vld [vmem:[%s1937 + $0x21] sm:$0xff]
        %v2096 = vld [vmem:[%s1937 + $0x31] sm:$0xff]
        %v2097 = vld [vmem:[%s1937 + $0x39] sm:$0xff]
        %v2098 = vld [vmem:[%s1937 + $0x49] sm:$0xff]
        %v2099 = vld [vmem:[%s1937 + $0x51] sm:$0xff]
        %s2100 = scalar_lea.vmem [#allocation3], 1408
        %v2101 = vld [vmem:[%s2100] sm:$0xff]
        %v2102 = vld [vmem:[%s2100 + $0x8] sm:$0xff]
        %v2103 = vld [vmem:[%s2100 + $0x10] sm:$0xff]
        %v2104 = vld [vmem:[%s2100 + $0x18] sm:$0xff]
        %v2105 = vld [vmem:[%s2100 + $0x20] sm:$0xff]
        %v2106 = vld [vmem:[%s2100 + $0x28] sm:$0xff]
        %v2107 = vld [vmem:[%s2100 + $0x30] sm:$0xff]
        %v2108 = vld [vmem:[%s2100 + $0x38] sm:$0xff]
        %v2109 = vld [vmem:[%s2100 + $0x40] sm:$0xff]
        %v2110 = vld [vmem:[%s2100 + $0x48] sm:$0xff]
        %v2111 = vld [vmem:[%s2100 + $0x50] sm:$0xff]
        %v2112 = vld [vmem:[%s2100 + $0x58] sm:$0xff]
        %v2113 = vld [vmem:[%s2100 + $0x60] sm:$0xff]
        %v2114 = vld [vmem:[%s2100 + $0x68] sm:$0xff]
        %v2115 = vld [vmem:[%s2100 + $0x70] sm:$0xff]
        %v2116 = vld [vmem:[%s2100 + $0x78] sm:$0xff]
        %2117 = vmatprep.subr.mxu0 0.0
        %2118 = vmatpush1.msra.mxu0 %v2116
        %2119 = vmatprep.subr.mxu0 0.0
        %2120 = vmatpush1.msra.mxu0 %v2115
        %2121 = vmatprep.subr.mxu0 0.0
        %2122 = vmatpush1.msra.mxu0 %v2114
        %2123 = vmatprep.subr.mxu0 0.0
        %2124 = vmatpush1.msra.mxu0 %v2113
        %2125 = vmatprep.subr.mxu0 0.0
        %2126 = vmatpush1.msra.mxu0 %v2112
        %2127 = vmatprep.subr.mxu0 0.0
        %2128 = vmatpush1.msra.mxu0 %v2111
        %2129 = vmatprep.subr.mxu0 0.0
        %2130 = vmatpush1.msra.mxu0 %v2110
        %2131 = vmatprep.subr.mxu0 0.0
        %2132 = vmatpush1.msra.mxu0 %v2109
        %2133 = vmatprep.subr.mxu0 0.0
        %2134 = vmatpush1.msra.mxu0 %v2108
        %2135 = vmatprep.subr.mxu0 0.0
        %2136 = vmatpush1.msra.mxu0 %v2107
        %2137 = vmatprep.subr.mxu0 0.0
        %2138 = vmatpush1.msra.mxu0 %v2106
        %2139 = vmatprep.subr.mxu0 0.0
        %2140 = vmatpush1.msra.mxu0 %v2105
        %2141 = vmatprep.subr.mxu0 0.0
        %2142 = vmatpush1.msra.mxu0 %v2104
        %2143 = vmatprep.subr.mxu0 0.0
        %2144 = vmatpush1.msra.mxu0 %v2103
        %2145 = vmatprep.subr.mxu0 0.0
        %2146 = vmatpush1.msra.mxu0 %v2102
        %2147 = vmatprep.subr.mxu0 0.0
        %2148 = vmatpush1.msra.mxu0 %v2101
        %2149 = vmatprep.subr.mxu0 0.0
        %2150 = vmatpush2.msra.mxu0 0.0
        %2151 = vmatprep.subr.mxu0 0.0
        %2152 = vmatpush2.msra.mxu0 0.0
        %2153 = vmatprep.subr.mxu0 0.0
        %2154 = vmatpush2.msra.mxu0 0.0
        %2155 = vmatprep.subr.mxu0 0.0
        %2156 = vmatpush2.msra.mxu0 0.0
        %2157 = vmatprep.subr.mxu0 0.0
        %2158 = vmatpush2.msra.mxu0 0.0
        %2159 = vmatprep.subr.mxu0 0.0
        %2160 = vmatpush2.msra.mxu0 0.0
        %2161 = vmatprep.subr.mxu0 0.0
        %2162 = vmatpush2.msra.mxu0 0.0
        %2163 = vmatprep.subr.mxu0 0.0
        %2164 = vmatpush2.msra.mxu0 0.0
        %2165 = vmatprep.subr.mxu0 0.0
        %2166 = vmatpush2.msra.mxu0 0.0
        %2167 = vmatprep.subr.mxu0 0.0
        %2168 = vmatpush2.msra.mxu0 0.0
        %2169 = vmatprep.subr.mxu0 0.0
        %2170 = vmatpush2.msra.mxu0 0.0
        %2171 = vmatprep.subr.mxu0 0.0
        %2172 = vmatpush2.msra.mxu0 0.0
        %2173 = vmatprep.subr.mxu0 0.0
        %2174 = vmatpush2.msra.mxu0 0.0
        %2175 = vmatprep.subr.mxu0 0.0
        %2176 = vmatpush2.msra.mxu0 0.0
        %2177 = vmatprep.subr.mxu0 0.0
        %2178 = vmatpush2.msra.mxu0 0.0
        %2179 = vmatprep.subr.mxu0 0.0
        %2180 = vmatpush2.msra.mxu0 0.0
        %2181 = vmatprep.mubr.f32.mxu0 0.0
        %2182 = vmatmul.mubr.f32.gmra.mxu0 %v2092
        %v2183 = vpop.f32.mrf.mxu0
        %v2184 = vadd.f32 0.0, %v2183
        %v2185 = vpop.f32.mrf.mxu0
        %2186 = vmatprep.mubr.f32.mxu0 0.0
        %2187 = vmatmul.mubr.f32.gmra.mxu0 %v2093
        %v2188 = vpop.f32.mrf.mxu0
        %v2189 = vadd.f32 0.0, %v2188
        %v2190 = vpop.f32.mrf.mxu0
        %2191 = vmatprep.mubr.f32.mxu0 0.0
        %2192 = vmatmul.mubr.f32.gmra.mxu0 %v2094
        %v2193 = vpop.f32.mrf.mxu0
        %v2194 = vadd.f32 0.0, %v2193
        %v2195 = vpop.f32.mrf.mxu0
        %2196 = vmatprep.mubr.f32.mxu0 0.0
        %2197 = vmatmul.mubr.f32.gmra.mxu0 %v2095
        %v2198 = vpop.f32.mrf.mxu0
        %v2199 = vadd.f32 0.0, %v2198
        %v2200 = vpop.f32.mrf.mxu0
        %2201 = vmatprep.mubr.f32.mxu0 0.0
        %2202 = vmatmul.mubr.f32.gmra.mxu0 %v2096
        %v2203 = vpop.f32.mrf.mxu0
        %v2204 = vadd.f32 0.0, %v2203
        %v2205 = vpop.f32.mrf.mxu0
        %2206 = vmatprep.mubr.f32.mxu0 0.0
        %2207 = vmatmul.mubr.f32.gmra.mxu0 %v2097
        %v2208 = vpop.f32.mrf.mxu0
        %v2209 = vadd.f32 0.0, %v2208
        %v2210 = vpop.f32.mrf.mxu0
        %2211 = vmatprep.mubr.f32.mxu0 0.0
        %2212 = vmatmul.mubr.f32.gmra.mxu0 %v2098
        %v2213 = vpop.f32.mrf.mxu0
        %v2214 = vadd.f32 0.0, %v2213
        %v2215 = vpop.f32.mrf.mxu0
        %2216 = vmatprep.mubr.f32.mxu0 0.0
        %2217 = vmatmul.mubr.f32.gmra.mxu0 %v2099
        %v2218 = vpop.f32.mrf.mxu0
        %v2219 = vadd.f32 0.0, %v2218
        %v2220 = vpop.f32.mrf.mxu0
        %2221 = vdwg.mxu0
        %v2222 = vld [vmem:[#allocation2] sm:$0xff]
        %v2223 = vld [vmem:[#allocation2 + $0x8] sm:$0xff]
        %v2224 = vld [vmem:[#allocation2 + $0x10] sm:$0xff]
        %v2225 = vld [vmem:[#allocation2 + $0x18] sm:$0xff]
        %v2226 = vld [vmem:[#allocation2 + $0x20] sm:$0xff]
        %v2227 = vld [vmem:[#allocation2 + $0x28] sm:$0xff]
        %v2228 = vld [vmem:[#allocation2 + $0x30] sm:$0xff]
        %v2229 = vld [vmem:[#allocation2 + $0x38] sm:$0xff]
        %v2230 = vadd.f32 %v2222, %v2184
        %v2231 = vadd.f32 %v2223, %v2189
        %v2232 = vadd.f32 %v2224, %v2194
        %v2233 = vadd.f32 %v2225, %v2199
        %v2234 = vadd.f32 %v2226, %v2204
        %v2235 = vadd.f32 %v2227, %v2209
        %v2236 = vadd.f32 %v2228, %v2214
        %v2237 = vadd.f32 %v2229, %v2219
        %2238 = vst [vmem:[#allocation2] sm:$0xff] %v2230
        %2239 = vst [vmem:[#allocation2 + $0x8] sm:$0xff] %v2231
        %2240 = vst [vmem:[#allocation2 + $0x10] sm:$0xff] %v2232
        %2241 = vst [vmem:[#allocation2 + $0x18] sm:$0xff] %v2233
        %2242 = vst [vmem:[#allocation2 + $0x20] sm:$0xff] %v2234
        %2243 = vst [vmem:[#allocation2 + $0x28] sm:$0xff] %v2235
        %2244 = vst [vmem:[#allocation2 + $0x30] sm:$0xff] %v2236
        %2245 = vst [vmem:[#allocation2 + $0x38] sm:$0xff] %v2237
        %v2246 = vld [vmem:[#allocation2] sm:$0xff]
        %v2247 = vld [vmem:[#allocation2 + $0x8] sm:$0xff]
        %v2248 = vld [vmem:[#allocation2 + $0x10] sm:$0xff]
        %v2249 = vld [vmem:[#allocation2 + $0x18] sm:$0xff]
        %v2250 = vld [vmem:[#allocation2 + $0x20] sm:$0xff]
        %v2251 = vld [vmem:[#allocation2 + $0x28] sm:$0xff]
        %v2252 = vld [vmem:[#allocation2 + $0x30] sm:$0xff]
        %v2253 = vld [vmem:[#allocation2 + $0x38] sm:$0xff]
        %v2254 = vmul.f32 %v2246, %v963
        %v2255 = vmul.f32 %v2247, %v963
        %v2256 = vmul.f32 %v2248, %v963
        %v2257 = vmul.f32 %v2249, %v963
        %v2258 = vmul.f32 %v2250, %v963
        %v2259 = vmul.f32 %v2251, %v963
        %v2260 = vmul.f32 %v2252, %v963
        %v2261 = vmul.f32 %v2253, %v963
        %v2262 = vadd.f32 %v2254, %v977
        %v2263 = vadd.f32 %v2255, %v977
        %v2264 = vadd.f32 %v2256, %v977
        %v2265 = vadd.f32 %v2257, %v977
        %v2266 = vadd.f32 %v2258, %v977
        %v2267 = vadd.f32 %v2259, %v977
        %v2268 = vadd.f32 %v2260, %v977
        %v2269 = vadd.f32 %v2261, %v977
        %v2270 = vmax.f32 %v2262, 0.0
        %v2271 = vmax.f32 %v2263, 0.0
        %v2272 = vmax.f32 %v2264, 0.0
        %v2273 = vmax.f32 %v2265, 0.0
        %v2274 = vmax.f32 %v2266, 0.0
        %v2275 = vmax.f32 %v2267, 0.0
        %v2276 = vmax.f32 %v2268, 0.0
        %v2277 = vmax.f32 %v2269, 0.0
        %2278 = vst [vmem:[%s327] sm:$0xff] %v2270
        %2279 = vst [vmem:[%s327 + $0x8] sm:$0xff] %v2271
        %2280 = vst [vmem:[%s327 + $0x10] sm:$0xff] %v2272
        %2281 = vst [vmem:[%s327 + $0x18] sm:$0xff] %v2273
        %2282 = vst [vmem:[%s327 + $0x20] sm:$0xff] %v2274
        %2283 = vst [vmem:[%s327 + $0x28] sm:$0xff] %v2275
        %2284 = vst [vmem:[%s327 + $0x30] sm:$0xff] %v2276
        %2285 = vst [vmem:[%s327 + $0x38] sm:$0xff] %v2277
        %v2286 = vld [vmem:[%s642 + $0x1] sm:$0xff]
        %v2287 = vld [vmem:[%s642 + $0x9] sm:$0xff]
        %v2288 = vld [vmem:[%s642 + $0x19] sm:$0xff]
        %v2289 = vld [vmem:[%s642 + $0x21] sm:$0xff]
        %v2290 = vld [vmem:[%s642 + $0x31] sm:$0xff]
        %v2291 = vld [vmem:[%s642 + $0x39] sm:$0xff]
        %v2292 = vld [vmem:[%s642 + $0x49] sm:$0xff]
        %v2293 = vld [vmem:[%s642 + $0x51] sm:$0xff]
        %s2294 = scalar_lea.vmem [#allocation3], 1536
        %v2295 = vld [vmem:[%s2294] sm:$0xff]
        %v2296 = vld [vmem:[%s2294 + $0x8] sm:$0xff]
        %v2297 = vld [vmem:[%s2294 + $0x10] sm:$0xff]
        %v2298 = vld [vmem:[%s2294 + $0x18] sm:$0xff]
        %v2299 = vld [vmem:[%s2294 + $0x20] sm:$0xff]
        %v2300 = vld [vmem:[%s2294 + $0x28] sm:$0xff]
        %v2301 = vld [vmem:[%s2294 + $0x30] sm:$0xff]
        %v2302 = vld [vmem:[%s2294 + $0x38] sm:$0xff]
        %v2303 = vld [vmem:[%s2294 + $0x40] sm:$0xff]
        %v2304 = vld [vmem:[%s2294 + $0x48] sm:$0xff]
        %v2305 = vld [vmem:[%s2294 + $0x50] sm:$0xff]
        %v2306 = vld [vmem:[%s2294 + $0x58] sm:$0xff]
        %v2307 = vld [vmem:[%s2294 + $0x60] sm:$0xff]
        %v2308 = vld [vmem:[%s2294 + $0x68] sm:$0xff]
        %v2309 = vld [vmem:[%s2294 + $0x70] sm:$0xff]
        %v2310 = vld [vmem:[%s2294 + $0x78] sm:$0xff]
        %2311 = vmatprep.subr.mxu0 0.0
        %2312 = vmatpush1.msra.mxu0 %v2310
        %2313 = vmatprep.subr.mxu0 0.0
        %2314 = vmatpush1.msra.mxu0 %v2309
        %2315 = vmatprep.subr.mxu0 0.0
        %2316 = vmatpush1.msra.mxu0 %v2308
        %2317 = vmatprep.subr.mxu0 0.0
        %2318 = vmatpush1.msra.mxu0 %v2307
        %2319 = vmatprep.subr.mxu0 0.0
        %2320 = vmatpush1.msra.mxu0 %v2306
        %2321 = vmatprep.subr.mxu0 0.0
        %2322 = vmatpush1.msra.mxu0 %v2305
        %2323 = vmatprep.subr.mxu0 0.0
        %2324 = vmatpush1.msra.mxu0 %v2304
        %2325 = vmatprep.subr.mxu0 0.0
        %2326 = vmatpush1.msra.mxu0 %v2303
        %2327 = vmatprep.subr.mxu0 0.0
        %2328 = vmatpush1.msra.mxu0 %v2302
        %2329 = vmatprep.subr.mxu0 0.0
        %2330 = vmatpush1.msra.mxu0 %v2301
        %2331 = vmatprep.subr.mxu0 0.0
        %2332 = vmatpush1.msra.mxu0 %v2300
        %2333 = vmatprep.subr.mxu0 0.0
        %2334 = vmatpush1.msra.mxu0 %v2299
        %2335 = vmatprep.subr.mxu0 0.0
        %2336 = vmatpush1.msra.mxu0 %v2298
        %2337 = vmatprep.subr.mxu0 0.0
        %2338 = vmatpush1.msra.mxu0 %v2297
        %2339 = vmatprep.subr.mxu0 0.0
        %2340 = vmatpush1.msra.mxu0 %v2296
        %2341 = vmatprep.subr.mxu0 0.0
        %2342 = vmatpush1.msra.mxu0 %v2295
        %2343 = vmatprep.subr.mxu0 0.0
        %2344 = vmatpush2.msra.mxu0 0.0
        %2345 = vmatprep.subr.mxu0 0.0
        %2346 = vmatpush2.msra.mxu0 0.0
        %2347 = vmatprep.subr.mxu0 0.0
        %2348 = vmatpush2.msra.mxu0 0.0
        %2349 = vmatprep.subr.mxu0 0.0
        %2350 = vmatpush2.msra.mxu0 0.0
        %2351 = vmatprep.subr.mxu0 0.0
        %2352 = vmatpush2.msra.mxu0 0.0
        %2353 = vmatprep.subr.mxu0 0.0
        %2354 = vmatpush2.msra.mxu0 0.0
        %2355 = vmatprep.subr.mxu0 0.0
        %2356 = vmatpush2.msra.mxu0 0.0
        %2357 = vmatprep.subr.mxu0 0.0
        %2358 = vmatpush2.msra.mxu0 0.0
        %2359 = vmatprep.subr.mxu0 0.0
        %2360 = vmatpush2.msra.mxu0 0.0
        %2361 = vmatprep.subr.mxu0 0.0
        %2362 = vmatpush2.msra.mxu0 0.0
        %2363 = vmatprep.subr.mxu0 0.0
        %2364 = vmatpush2.msra.mxu0 0.0
        %2365 = vmatprep.subr.mxu0 0.0
        %2366 = vmatpush2.msra.mxu0 0.0
        %2367 = vmatprep.subr.mxu0 0.0
        %2368 = vmatpush2.msra.mxu0 0.0
        %2369 = vmatprep.subr.mxu0 0.0
        %2370 = vmatpush2.msra.mxu0 0.0
        %2371 = vmatprep.subr.mxu0 0.0
        %2372 = vmatpush2.msra.mxu0 0.0
        %2373 = vmatprep.subr.mxu0 0.0
        %2374 = vmatpush2.msra.mxu0 0.0
        %2375 = vmatprep.mubr.f32.mxu0 0.0
        %2376 = vmatmul.mubr.f32.gmra.mxu0 %v2286
        %v2377 = vpop.f32.mrf.mxu0
        %v2378 = vadd.f32 0.0, %v2377
        %v2379 = vpop.f32.mrf.mxu0
        %2380 = vmatprep.mubr.f32.mxu0 0.0
        %2381 = vmatmul.mubr.f32.gmra.mxu0 %v2287
        %v2382 = vpop.f32.mrf.mxu0
        %v2383 = vadd.f32 0.0, %v2382
        %v2384 = vpop.f32.mrf.mxu0
        %2385 = vmatprep.mubr.f32.mxu0 0.0
        %2386 = vmatmul.mubr.f32.gmra.mxu0 %v2288
        %v2387 = vpop.f32.mrf.mxu0
        %v2388 = vadd.f32 0.0, %v2387
        %v2389 = vpop.f32.mrf.mxu0
        %2390 = vmatprep.mubr.f32.mxu0 0.0
        %2391 = vmatmul.mubr.f32.gmra.mxu0 %v2289
        %v2392 = vpop.f32.mrf.mxu0
        %v2393 = vadd.f32 0.0, %v2392
        %v2394 = vpop.f32.mrf.mxu0
        %2395 = vmatprep.mubr.f32.mxu0 0.0
        %2396 = vmatmul.mubr.f32.gmra.mxu0 %v2290
        %v2397 = vpop.f32.mrf.mxu0
        %v2398 = vadd.f32 0.0, %v2397
        %v2399 = vpop.f32.mrf.mxu0
        %2400 = vmatprep.mubr.f32.mxu0 0.0
        %2401 = vmatmul.mubr.f32.gmra.mxu0 %v2291
        %v2402 = vpop.f32.mrf.mxu0
        %v2403 = vadd.f32 0.0, %v2402
        %v2404 = vpop.f32.mrf.mxu0
        %2405 = vmatprep.mubr.f32.mxu0 0.0
        %2406 = vmatmul.mubr.f32.gmra.mxu0 %v2292
        %v2407 = vpop.f32.mrf.mxu0
        %v2408 = vadd.f32 0.0, %v2407
        %v2409 = vpop.f32.mrf.mxu0
        %2410 = vmatprep.mubr.f32.mxu0 0.0
        %2411 = vmatmul.mubr.f32.gmra.mxu0 %v2293
        %v2412 = vpop.f32.mrf.mxu0
        %v2413 = vadd.f32 0.0, %v2412
        %v2414 = vpop.f32.mrf.mxu0
        %2415 = vdwg.mxu0
        %2416 = vst [vmem:[#allocation2] sm:$0xff] %v2378
        %2417 = vst [vmem:[#allocation2 + $0x8] sm:$0xff] %v2383
        %2418 = vst [vmem:[#allocation2 + $0x10] sm:$0xff] %v2388
        %2419 = vst [vmem:[#allocation2 + $0x18] sm:$0xff] %v2393
        %2420 = vst [vmem:[#allocation2 + $0x20] sm:$0xff] %v2398
        %2421 = vst [vmem:[#allocation2 + $0x28] sm:$0xff] %v2403
        %2422 = vst [vmem:[#allocation2 + $0x30] sm:$0xff] %v2408
        %2423 = vst [vmem:[#allocation2 + $0x38] sm:$0xff] %v2413
        %v2424 = vld [vmem:[%s642 + $0x2] sm:$0xff]
        %v2425 = vld [vmem:[%s642 + $0xa] sm:$0xff]
        %v2426 = vld [vmem:[%s642 + $0x1a] sm:$0xff]
        %v2427 = vld [vmem:[%s642 + $0x22] sm:$0xff]
        %v2428 = vld [vmem:[%s642 + $0x32] sm:$0xff]
        %v2429 = vld [vmem:[%s642 + $0x3a] sm:$0xff]
        %v2430 = vld [vmem:[%s642 + $0x4a] sm:$0xff]
        %v2431 = vld [vmem:[%s642 + $0x52] sm:$0xff]
        %s2432 = scalar_lea.vmem [#allocation3], 1664
        %v2433 = vld [vmem:[%s2432] sm:$0xff]
        %v2434 = vld [vmem:[%s2432 + $0x8] sm:$0xff]
        %v2435 = vld [vmem:[%s2432 + $0x10] sm:$0xff]
        %v2436 = vld [vmem:[%s2432 + $0x18] sm:$0xff]
        %v2437 = vld [vmem:[%s2432 + $0x20] sm:$0xff]
        %v2438 = vld [vmem:[%s2432 + $0x28] sm:$0xff]
        %v2439 = vld [vmem:[%s2432 + $0x30] sm:$0xff]
        %v2440 = vld [vmem:[%s2432 + $0x38] sm:$0xff]
        %v2441 = vld [vmem:[%s2432 + $0x40] sm:$0xff]
        %v2442 = vld [vmem:[%s2432 + $0x48] sm:$0xff]
        %v2443 = vld [vmem:[%s2432 + $0x50] sm:$0xff]
        %v2444 = vld [vmem:[%s2432 + $0x58] sm:$0xff]
        %v2445 = vld [vmem:[%s2432 + $0x60] sm:$0xff]
        %v2446 = vld [vmem:[%s2432 + $0x68] sm:$0xff]
        %v2447 = vld [vmem:[%s2432 + $0x70] sm:$0xff]
        %v2448 = vld [vmem:[%s2432 + $0x78] sm:$0xff]
        %2449 = vmatprep.subr.mxu0 0.0
        %2450 = vmatpush1.msra.mxu0 %v2448
        %2451 = vmatprep.subr.mxu0 0.0
        %2452 = vmatpush1.msra.mxu0 %v2447
        %2453 = vmatprep.subr.mxu0 0.0
        %2454 = vmatpush1.msra.mxu0 %v2446
        %2455 = vmatprep.subr.mxu0 0.0
        %2456 = vmatpush1.msra.mxu0 %v2445
        %2457 = vmatprep.subr.mxu0 0.0
        %2458 = vmatpush1.msra.mxu0 %v2444
        %2459 = vmatprep.subr.mxu0 0.0
        %2460 = vmatpush1.msra.mxu0 %v2443
        %2461 = vmatprep.subr.mxu0 0.0
        %2462 = vmatpush1.msra.mxu0 %v2442
        %2463 = vmatprep.subr.mxu0 0.0
        %2464 = vmatpush1.msra.mxu0 %v2441
        %2465 = vmatprep.subr.mxu0 0.0
        %2466 = vmatpush1.msra.mxu0 %v2440
        %2467 = vmatprep.subr.mxu0 0.0
        %2468 = vmatpush1.msra.mxu0 %v2439
        %2469 = vmatprep.subr.mxu0 0.0
        %2470 = vmatpush1.msra.mxu0 %v2438
        %2471 = vmatprep.subr.mxu0 0.0
        %2472 = vmatpush1.msra.mxu0 %v2437
        %2473 = vmatprep.subr.mxu0 0.0
        %2474 = vmatpush1.msra.mxu0 %v2436
        %2475 = vmatprep.subr.mxu0 0.0
        %2476 = vmatpush1.msra.mxu0 %v2435
        %2477 = vmatprep.subr.mxu0 0.0
        %2478 = vmatpush1.msra.mxu0 %v2434
        %2479 = vmatprep.subr.mxu0 0.0
        %2480 = vmatpush1.msra.mxu0 %v2433
        %2481 = vmatprep.subr.mxu0 0.0
        %2482 = vmatpush2.msra.mxu0 0.0
        %2483 = vmatprep.subr.mxu0 0.0
        %2484 = vmatpush2.msra.mxu0 0.0
        %2485 = vmatprep.subr.mxu0 0.0
        %2486 = vmatpush2.msra.mxu0 0.0
        %2487 = vmatprep.subr.mxu0 0.0
        %2488 = vmatpush2.msra.mxu0 0.0
        %2489 = vmatprep.subr.mxu0 0.0
        %2490 = vmatpush2.msra.mxu0 0.0
        %2491 = vmatprep.subr.mxu0 0.0
        %2492 = vmatpush2.msra.mxu0 0.0
        %2493 = vmatprep.subr.mxu0 0.0
        %2494 = vmatpush2.msra.mxu0 0.0
        %2495 = vmatprep.subr.mxu0 0.0
        %2496 = vmatpush2.msra.mxu0 0.0
        %2497 = vmatprep.subr.mxu0 0.0
        %2498 = vmatpush2.msra.mxu0 0.0
        %2499 = vmatprep.subr.mxu0 0.0
        %2500 = vmatpush2.msra.mxu0 0.0
        %2501 = vmatprep.subr.mxu0 0.0
        %2502 = vmatpush2.msra.mxu0 0.0
        %2503 = vmatprep.subr.mxu0 0.0
        %2504 = vmatpush2.msra.mxu0 0.0
        %2505 = vmatprep.subr.mxu0 0.0
        %2506 = vmatpush2.msra.mxu0 0.0
        %2507 = vmatprep.subr.mxu0 0.0
        %2508 = vmatpush2.msra.mxu0 0.0
        %2509 = vmatprep.subr.mxu0 0.0
        %2510 = vmatpush2.msra.mxu0 0.0
        %2511 = vmatprep.subr.mxu0 0.0
        %2512 = vmatpush2.msra.mxu0 0.0
        %2513 = vmatprep.mubr.f32.mxu0 0.0
        %2514 = vmatmul.mubr.f32.gmra.mxu0 %v2424
        %v2515 = vpop.f32.mrf.mxu0
        %v2516 = vadd.f32 0.0, %v2515
        %v2517 = vpop.f32.mrf.mxu0
        %2518 = vmatprep.mubr.f32.mxu0 0.0
        %2519 = vmatmul.mubr.f32.gmra.mxu0 %v2425
        %v2520 = vpop.f32.mrf.mxu0
        %v2521 = vadd.f32 0.0, %v2520
        %v2522 = vpop.f32.mrf.mxu0
        %2523 = vmatprep.mubr.f32.mxu0 0.0
        %2524 = vmatmul.mubr.f32.gmra.mxu0 %v2426
        %v2525 = vpop.f32.mrf.mxu0
        %v2526 = vadd.f32 0.0, %v2525
        %v2527 = vpop.f32.mrf.mxu0
        %2528 = vmatprep.mubr.f32.mxu0 0.0
        %2529 = vmatmul.mubr.f32.gmra.mxu0 %v2427
        %v2530 = vpop.f32.mrf.mxu0
        %v2531 = vadd.f32 0.0, %v2530
        %v2532 = vpop.f32.mrf.mxu0
        %2533 = vmatprep.mubr.f32.mxu0 0.0
        %2534 = vmatmul.mubr.f32.gmra.mxu0 %v2428
        %v2535 = vpop.f32.mrf.mxu0
        %v2536 = vadd.f32 0.0, %v2535
        %v2537 = vpop.f32.mrf.mxu0
        %2538 = vmatprep.mubr.f32.mxu0 0.0
        %2539 = vmatmul.mubr.f32.gmra.mxu0 %v2429
        %v2540 = vpop.f32.mrf.mxu0
        %v2541 = vadd.f32 0.0, %v2540
        %v2542 = vpop.f32.mrf.mxu0
        %2543 = vmatprep.mubr.f32.mxu0 0.0
        %2544 = vmatmul.mubr.f32.gmra.mxu0 %v2430
        %v2545 = vpop.f32.mrf.mxu0
        %v2546 = vadd.f32 0.0, %v2545
        %v2547 = vpop.f32.mrf.mxu0
        %2548 = vmatprep.mubr.f32.mxu0 0.0
        %2549 = vmatmul.mubr.f32.gmra.mxu0 %v2431
        %v2550 = vpop.f32.mrf.mxu0
        %v2551 = vadd.f32 0.0, %v2550
        %v2552 = vpop.f32.mrf.mxu0
        %2553 = vdwg.mxu0
        %v2554 = vld [vmem:[#allocation2] sm:$0xff]
        %v2555 = vld [vmem:[#allocation2 + $0x8] sm:$0xff]
        %v2556 = vld [vmem:[#allocation2 + $0x10] sm:$0xff]
        %v2557 = vld [vmem:[#allocation2 + $0x18] sm:$0xff]
        %v2558 = vld [vmem:[#allocation2 + $0x20] sm:$0xff]
        %v2559 = vld [vmem:[#allocation2 + $0x28] sm:$0xff]
        %v2560 = vld [vmem:[#allocation2 + $0x30] sm:$0xff]
        %v2561 = vld [vmem:[#allocation2 + $0x38] sm:$0xff]
        %v2562 = vadd.f32 %v2554, %v2516
        %v2563 = vadd.f32 %v2555, %v2521
        %v2564 = vadd.f32 %v2556, %v2526
        %v2565 = vadd.f32 %v2557, %v2531
        %v2566 = vadd.f32 %v2558, %v2536
        %v2567 = vadd.f32 %v2559, %v2541
        %v2568 = vadd.f32 %v2560, %v2546
        %v2569 = vadd.f32 %v2561, %v2551
        %2570 = vst [vmem:[#allocation2] sm:$0xff] %v2562
        %2571 = vst [vmem:[#allocation2 + $0x8] sm:$0xff] %v2563
        %2572 = vst [vmem:[#allocation2 + $0x10] sm:$0xff] %v2564
        %2573 = vst [vmem:[#allocation2 + $0x18] sm:$0xff] %v2565
        %2574 = vst [vmem:[#allocation2 + $0x20] sm:$0xff] %v2566
        %2575 = vst [vmem:[#allocation2 + $0x28] sm:$0xff] %v2567
        %2576 = vst [vmem:[#allocation2 + $0x30] sm:$0xff] %v2568
        %2577 = vst [vmem:[#allocation2 + $0x38] sm:$0xff] %v2569
        %v2578 = vld [vmem:[%s1937 + $0x1] sm:$0xff]
        %v2579 = vld [vmem:[%s1937 + $0x9] sm:$0xff]
        %v2580 = vld [vmem:[%s1937 + $0x19] sm:$0xff]
        %v2581 = vld [vmem:[%s1937 + $0x21] sm:$0xff]
        %v2582 = vld [vmem:[%s1937 + $0x31] sm:$0xff]
        %v2583 = vld [vmem:[%s1937 + $0x39] sm:$0xff]
        %v2584 = vld [vmem:[%s1937 + $0x49] sm:$0xff]
        %v2585 = vld [vmem:[%s1937 + $0x51] sm:$0xff]
        %s2586 = scalar_lea.vmem [#allocation3], 1792
        %v2587 = vld [vmem:[%s2586] sm:$0xff]
        %v2588 = vld [vmem:[%s2586 + $0x8] sm:$0xff]
        %v2589 = vld [vmem:[%s2586 + $0x10] sm:$0xff]
        %v2590 = vld [vmem:[%s2586 + $0x18] sm:$0xff]
        %v2591 = vld [vmem:[%s2586 + $0x20] sm:$0xff]
        %v2592 = vld [vmem:[%s2586 + $0x28] sm:$0xff]
        %v2593 = vld [vmem:[%s2586 + $0x30] sm:$0xff]
        %v2594 = vld [vmem:[%s2586 + $0x38] sm:$0xff]
        %v2595 = vld [vmem:[%s2586 + $0x40] sm:$0xff]
        %v2596 = vld [vmem:[%s2586 + $0x48] sm:$0xff]
        %v2597 = vld [vmem:[%s2586 + $0x50] sm:$0xff]
        %v2598 = vld [vmem:[%s2586 + $0x58] sm:$0xff]
        %v2599 = vld [vmem:[%s2586 + $0x60] sm:$0xff]
        %v2600 = vld [vmem:[%s2586 + $0x68] sm:$0xff]
        %v2601 = vld [vmem:[%s2586 + $0x70] sm:$0xff]
        %v2602 = vld [vmem:[%s2586 + $0x78] sm:$0xff]
        %2603 = vmatprep.subr.mxu0 0.0
        %2604 = vmatpush1.msra.mxu0 %v2602
        %2605 = vmatprep.subr.mxu0 0.0
        %2606 = vmatpush1.msra.mxu0 %v2601
        %2607 = vmatprep.subr.mxu0 0.0
        %2608 = vmatpush1.msra.mxu0 %v2600
        %2609 = vmatprep.subr.mxu0 0.0
        %2610 = vmatpush1.msra.mxu0 %v2599
        %2611 = vmatprep.subr.mxu0 0.0
        %2612 = vmatpush1.msra.mxu0 %v2598
        %2613 = vmatprep.subr.mxu0 0.0
        %2614 = vmatpush1.msra.mxu0 %v2597
        %2615 = vmatprep.subr.mxu0 0.0
        %2616 = vmatpush1.msra.mxu0 %v2596
        %2617 = vmatprep.subr.mxu0 0.0
        %2618 = vmatpush1.msra.mxu0 %v2595
        %2619 = vmatprep.subr.mxu0 0.0
        %2620 = vmatpush1.msra.mxu0 %v2594
        %2621 = vmatprep.subr.mxu0 0.0
        %2622 = vmatpush1.msra.mxu0 %v2593
        %2623 = vmatprep.subr.mxu0 0.0
        %2624 = vmatpush1.msra.mxu0 %v2592
        %2625 = vmatprep.subr.mxu0 0.0
        %2626 = vmatpush1.msra.mxu0 %v2591
        %2627 = vmatprep.subr.mxu0 0.0
        %2628 = vmatpush1.msra.mxu0 %v2590
        %2629 = vmatprep.subr.mxu0 0.0
        %2630 = vmatpush1.msra.mxu0 %v2589
        %2631 = vmatprep.subr.mxu0 0.0
        %2632 = vmatpush1.msra.mxu0 %v2588
        %2633 = vmatprep.subr.mxu0 0.0
        %2634 = vmatpush1.msra.mxu0 %v2587
        %2635 = vmatprep.subr.mxu0 0.0
        %2636 = vmatpush2.msra.mxu0 0.0
        %2637 = vmatprep.subr.mxu0 0.0
        %2638 = vmatpush2.msra.mxu0 0.0
        %2639 = vmatprep.subr.mxu0 0.0
        %2640 = vmatpush2.msra.mxu0 0.0
        %2641 = vmatprep.subr.mxu0 0.0
        %2642 = vmatpush2.msra.mxu0 0.0
        %2643 = vmatprep.subr.mxu0 0.0
        %2644 = vmatpush2.msra.mxu0 0.0
        %2645 = vmatprep.subr.mxu0 0.0
        %2646 = vmatpush2.msra.mxu0 0.0
        %2647 = vmatprep.subr.mxu0 0.0
        %2648 = vmatpush2.msra.mxu0 0.0
        %2649 = vmatprep.subr.mxu0 0.0
        %2650 = vmatpush2.msra.mxu0 0.0
        %2651 = vmatprep.subr.mxu0 0.0
        %2652 = vmatpush2.msra.mxu0 0.0
        %2653 = vmatprep.subr.mxu0 0.0
        %2654 = vmatpush2.msra.mxu0 0.0
        %2655 = vmatprep.subr.mxu0 0.0
        %2656 = vmatpush2.msra.mxu0 0.0
        %2657 = vmatprep.subr.mxu0 0.0
        %2658 = vmatpush2.msra.mxu0 0.0
        %2659 = vmatprep.subr.mxu0 0.0
        %2660 = vmatpush2.msra.mxu0 0.0
        %2661 = vmatprep.subr.mxu0 0.0
        %2662 = vmatpush2.msra.mxu0 0.0
        %2663 = vmatprep.subr.mxu0 0.0
        %2664 = vmatpush2.msra.mxu0 0.0
        %2665 = vmatprep.subr.mxu0 0.0
        %2666 = vmatpush2.msra.mxu0 0.0
        %2667 = vmatprep.mubr.f32.mxu0 0.0
        %2668 = vmatmul.mubr.f32.gmra.mxu0 %v2578
        %v2669 = vpop.f32.mrf.mxu0
        %v2670 = vadd.f32 0.0, %v2669
        %v2671 = vpop.f32.mrf.mxu0
        %2672 = vmatprep.mubr.f32.mxu0 0.0
        %2673 = vmatmul.mubr.f32.gmra.mxu0 %v2579
        %v2674 = vpop.f32.mrf.mxu0
        %v2675 = vadd.f32 0.0, %v2674
        %v2676 = vpop.f32.mrf.mxu0
        %2677 = vmatprep.mubr.f32.mxu0 0.0
        %2678 = vmatmul.mubr.f32.gmra.mxu0 %v2580
        %v2679 = vpop.f32.mrf.mxu0
        %v2680 = vadd.f32 0.0, %v2679
        %v2681 = vpop.f32.mrf.mxu0
        %2682 = vmatprep.mubr.f32.mxu0 0.0
        %2683 = vmatmul.mubr.f32.gmra.mxu0 %v2581
        %v2684 = vpop.f32.mrf.mxu0
        %v2685 = vadd.f32 0.0, %v2684
        %v2686 = vpop.f32.mrf.mxu0
        %2687 = vmatprep.mubr.f32.mxu0 0.0
        %2688 = vmatmul.mubr.f32.gmra.mxu0 %v2582
        %v2689 = vpop.f32.mrf.mxu0
        %v2690 = vadd.f32 0.0, %v2689
        %v2691 = vpop.f32.mrf.mxu0
        %2692 = vmatprep.mubr.f32.mxu0 0.0
        %2693 = vmatmul.mubr.f32.gmra.mxu0 %v2583
        %v2694 = vpop.f32.mrf.mxu0
        %v2695 = vadd.f32 0.0, %v2694
        %v2696 = vpop.f32.mrf.mxu0
        %2697 = vmatprep.mubr.f32.mxu0 0.0
        %2698 = vmatmul.mubr.f32.gmra.mxu0 %v2584
        %v2699 = vpop.f32.mrf.mxu0
        %v2700 = vadd.f32 0.0, %v2699
        %v2701 = vpop.f32.mrf.mxu0
        %2702 = vmatprep.mubr.f32.mxu0 0.0
        %2703 = vmatmul.mubr.f32.gmra.mxu0 %v2585
        %v2704 = vpop.f32.mrf.mxu0
        %v2705 = vadd.f32 0.0, %v2704
        %v2706 = vpop.f32.mrf.mxu0
        %2707 = vdwg.mxu0
        %v2708 = vld [vmem:[#allocation2] sm:$0xff]
        %v2709 = vld [vmem:[#allocation2 + $0x8] sm:$0xff]
        %v2710 = vld [vmem:[#allocation2 + $0x10] sm:$0xff]
        %v2711 = vld [vmem:[#allocation2 + $0x18] sm:$0xff]
        %v2712 = vld [vmem:[#allocation2 + $0x20] sm:$0xff]
        %v2713 = vld [vmem:[#allocation2 + $0x28] sm:$0xff]
        %v2714 = vld [vmem:[#allocation2 + $0x30] sm:$0xff]
        %v2715 = vld [vmem:[#allocation2 + $0x38] sm:$0xff]
        %v2716 = vadd.f32 %v2708, %v2670
        %v2717 = vadd.f32 %v2709, %v2675
        %v2718 = vadd.f32 %v2710, %v2680
        %v2719 = vadd.f32 %v2711, %v2685
        %v2720 = vadd.f32 %v2712, %v2690
        %v2721 = vadd.f32 %v2713, %v2695
        %v2722 = vadd.f32 %v2714, %v2700
        %v2723 = vadd.f32 %v2715, %v2705
        %2724 = vst [vmem:[#allocation2] sm:$0xff] %v2716
        %2725 = vst [vmem:[#allocation2 + $0x8] sm:$0xff] %v2717
        %2726 = vst [vmem:[#allocation2 + $0x10] sm:$0xff] %v2718
        %2727 = vst [vmem:[#allocation2 + $0x18] sm:$0xff] %v2719
        %2728 = vst [vmem:[#allocation2 + $0x20] sm:$0xff] %v2720
        %2729 = vst [vmem:[#allocation2 + $0x28] sm:$0xff] %v2721
        %2730 = vst [vmem:[#allocation2 + $0x30] sm:$0xff] %v2722
        %2731 = vst [vmem:[#allocation2 + $0x38] sm:$0xff] %v2723
        %v2732 = vld [vmem:[%s1937 + $0x2] sm:$0xff]
        %v2733 = vld [vmem:[%s1937 + $0xa] sm:$0xff]
        %v2734 = vld [vmem:[%s1937 + $0x1a] sm:$0xff]
        %v2735 = vld [vmem:[%s1937 + $0x22] sm:$0xff]
        %v2736 = vld [vmem:[%s1937 + $0x32] sm:$0xff]
        %v2737 = vld [vmem:[%s1937 + $0x3a] sm:$0xff]
        %v2738 = vld [vmem:[%s1937 + $0x4a] sm:$0xff]
        %v2739 = vld [vmem:[%s1937 + $0x52] sm:$0xff]
        %s2740 = scalar_lea.vmem [#allocation3], 1920
        %v2741 = vld [vmem:[%s2740] sm:$0xff]
        %v2742 = vld [vmem:[%s2740 + $0x8] sm:$0xff]
        %v2743 = vld [vmem:[%s2740 + $0x10] sm:$0xff]
        %v2744 = vld [vmem:[%s2740 + $0x18] sm:$0xff]
        %v2745 = vld [vmem:[%s2740 + $0x20] sm:$0xff]
        %v2746 = vld [vmem:[%s2740 + $0x28] sm:$0xff]
        %v2747 = vld [vmem:[%s2740 + $0x30] sm:$0xff]
        %v2748 = vld [vmem:[%s2740 + $0x38] sm:$0xff]
        %v2749 = vld [vmem:[%s2740 + $0x40] sm:$0xff]
        %v2750 = vld [vmem:[%s2740 + $0x48] sm:$0xff]
        %v2751 = vld [vmem:[%s2740 + $0x50] sm:$0xff]
        %v2752 = vld [vmem:[%s2740 + $0x58] sm:$0xff]
        %v2753 = vld [vmem:[%s2740 + $0x60] sm:$0xff]
        %v2754 = vld [vmem:[%s2740 + $0x68] sm:$0xff]
        %v2755 = vld [vmem:[%s2740 + $0x70] sm:$0xff]
        %v2756 = vld [vmem:[%s2740 + $0x78] sm:$0xff]
        %2757 = vmatprep.subr.mxu0 0.0
        %2758 = vmatpush1.msra.mxu0 %v2756
        %2759 = vmatprep.subr.mxu0 0.0
        %2760 = vmatpush1.msra.mxu0 %v2755
        %2761 = vmatprep.subr.mxu0 0.0
        %2762 = vmatpush1.msra.mxu0 %v2754
        %2763 = vmatprep.subr.mxu0 0.0
        %2764 = vmatpush1.msra.mxu0 %v2753
        %2765 = vmatprep.subr.mxu0 0.0
        %2766 = vmatpush1.msra.mxu0 %v2752
        %2767 = vmatprep.subr.mxu0 0.0
        %2768 = vmatpush1.msra.mxu0 %v2751
        %2769 = vmatprep.subr.mxu0 0.0
        %2770 = vmatpush1.msra.mxu0 %v2750
        %2771 = vmatprep.subr.mxu0 0.0
        %2772 = vmatpush1.msra.mxu0 %v2749
        %2773 = vmatprep.subr.mxu0 0.0
        %2774 = vmatpush1.msra.mxu0 %v2748
        %2775 = vmatprep.subr.mxu0 0.0
        %2776 = vmatpush1.msra.mxu0 %v2747
        %2777 = vmatprep.subr.mxu0 0.0
        %2778 = vmatpush1.msra.mxu0 %v2746
        %2779 = vmatprep.subr.mxu0 0.0
        %2780 = vmatpush1.msra.mxu0 %v2745
        %2781 = vmatprep.subr.mxu0 0.0
        %2782 = vmatpush1.msra.mxu0 %v2744
        %2783 = vmatprep.subr.mxu0 0.0
        %2784 = vmatpush1.msra.mxu0 %v2743
        %2785 = vmatprep.subr.mxu0 0.0
        %2786 = vmatpush1.msra.mxu0 %v2742
        %2787 = vmatprep.subr.mxu0 0.0
        %2788 = vmatpush1.msra.mxu0 %v2741
        %2789 = vmatprep.subr.mxu0 0.0
        %2790 = vmatpush2.msra.mxu0 0.0
        %2791 = vmatprep.subr.mxu0 0.0
        %2792 = vmatpush2.msra.mxu0 0.0
        %2793 = vmatprep.subr.mxu0 0.0
        %2794 = vmatpush2.msra.mxu0 0.0
        %2795 = vmatprep.subr.mxu0 0.0
        %2796 = vmatpush2.msra.mxu0 0.0
        %2797 = vmatprep.subr.mxu0 0.0
        %2798 = vmatpush2.msra.mxu0 0.0
        %2799 = vmatprep.subr.mxu0 0.0
        %2800 = vmatpush2.msra.mxu0 0.0
        %2801 = vmatprep.subr.mxu0 0.0
        %2802 = vmatpush2.msra.mxu0 0.0
        %2803 = vmatprep.subr.mxu0 0.0
        %2804 = vmatpush2.msra.mxu0 0.0
        %2805 = vmatprep.subr.mxu0 0.0
        %2806 = vmatpush2.msra.mxu0 0.0
        %2807 = vmatprep.subr.mxu0 0.0
        %2808 = vmatpush2.msra.mxu0 0.0
        %2809 = vmatprep.subr.mxu0 0.0
        %2810 = vmatpush2.msra.mxu0 0.0
        %2811 = vmatprep.subr.mxu0 0.0
        %2812 = vmatpush2.msra.mxu0 0.0
        %2813 = vmatprep.subr.mxu0 0.0
        %2814 = vmatpush2.msra.mxu0 0.0
        %2815 = vmatprep.subr.mxu0 0.0
        %2816 = vmatpush2.msra.mxu0 0.0
        %2817 = vmatprep.subr.mxu0 0.0
        %2818 = vmatpush2.msra.mxu0 0.0
        %2819 = vmatprep.subr.mxu0 0.0
        %2820 = vmatpush2.msra.mxu0 0.0
        %2821 = vmatprep.mubr.f32.mxu0 0.0
        %2822 = vmatmul.mubr.f32.gmra.mxu0 %v2732
        %v2823 = vpop.f32.mrf.mxu0
        %v2824 = vadd.f32 0.0, %v2823
        %v2825 = vpop.f32.mrf.mxu0
        %2826 = vmatprep.mubr.f32.mxu0 0.0
        %2827 = vmatmul.mubr.f32.gmra.mxu0 %v2733
        %v2828 = vpop.f32.mrf.mxu0
        %v2829 = vadd.f32 0.0, %v2828
        %v2830 = vpop.f32.mrf.mxu0
        %2831 = vmatprep.mubr.f32.mxu0 0.0
        %2832 = vmatmul.mubr.f32.gmra.mxu0 %v2734
        %v2833 = vpop.f32.mrf.mxu0
        %v2834 = vadd.f32 0.0, %v2833
        %v2835 = vpop.f32.mrf.mxu0
        %2836 = vmatprep.mubr.f32.mxu0 0.0
        %2837 = vmatmul.mubr.f32.gmra.mxu0 %v2735
        %v2838 = vpop.f32.mrf.mxu0
        %v2839 = vadd.f32 0.0, %v2838
        %v2840 = vpop.f32.mrf.mxu0
        %2841 = vmatprep.mubr.f32.mxu0 0.0
        %2842 = vmatmul.mubr.f32.gmra.mxu0 %v2736
        %v2843 = vpop.f32.mrf.mxu0
        %v2844 = vadd.f32 0.0, %v2843
        %v2845 = vpop.f32.mrf.mxu0
        %2846 = vmatprep.mubr.f32.mxu0 0.0
        %2847 = vmatmul.mubr.f32.gmra.mxu0 %v2737
        %v2848 = vpop.f32.mrf.mxu0
        %v2849 = vadd.f32 0.0, %v2848
        %v2850 = vpop.f32.mrf.mxu0
        %2851 = vmatprep.mubr.f32.mxu0 0.0
        %2852 = vmatmul.mubr.f32.gmra.mxu0 %v2738
        %v2853 = vpop.f32.mrf.mxu0
        %v2854 = vadd.f32 0.0, %v2853
        %v2855 = vpop.f32.mrf.mxu0
        %2856 = vmatprep.mubr.f32.mxu0 0.0
        %2857 = vmatmul.mubr.f32.gmra.mxu0 %v2739
        %v2858 = vpop.f32.mrf.mxu0
        %v2859 = vadd.f32 0.0, %v2858
        %v2860 = vpop.f32.mrf.mxu0
        %2861 = vdwg.mxu0
        %v2862 = vld [vmem:[#allocation2] sm:$0xff]
        %v2863 = vld [vmem:[#allocation2 + $0x8] sm:$0xff]
        %v2864 = vld [vmem:[#allocation2 + $0x10] sm:$0xff]
        %v2865 = vld [vmem:[#allocation2 + $0x18] sm:$0xff]
        %v2866 = vld [vmem:[#allocation2 + $0x20] sm:$0xff]
        %v2867 = vld [vmem:[#allocation2 + $0x28] sm:$0xff]
        %v2868 = vld [vmem:[#allocation2 + $0x30] sm:$0xff]
        %v2869 = vld [vmem:[#allocation2 + $0x38] sm:$0xff]
        %v2870 = vadd.f32 %v2862, %v2824
        %v2871 = vadd.f32 %v2863, %v2829
        %v2872 = vadd.f32 %v2864, %v2834
        %v2873 = vadd.f32 %v2865, %v2839
        %v2874 = vadd.f32 %v2866, %v2844
        %v2875 = vadd.f32 %v2867, %v2849
        %v2876 = vadd.f32 %v2868, %v2854
        %v2877 = vadd.f32 %v2869, %v2859
        %2878 = vst [vmem:[#allocation2] sm:$0xff] %v2870
        %2879 = vst [vmem:[#allocation2 + $0x8] sm:$0xff] %v2871
        %2880 = vst [vmem:[#allocation2 + $0x10] sm:$0xff] %v2872
        %2881 = vst [vmem:[#allocation2 + $0x18] sm:$0xff] %v2873
        %2882 = vst [vmem:[#allocation2 + $0x20] sm:$0xff] %v2874
        %2883 = vst [vmem:[#allocation2 + $0x28] sm:$0xff] %v2875
        %2884 = vst [vmem:[#allocation2 + $0x30] sm:$0xff] %v2876
        %2885 = vst [vmem:[#allocation2 + $0x38] sm:$0xff] %v2877
        %v2886 = vld [vmem:[#allocation2] sm:$0xff]
        %v2887 = vld [vmem:[#allocation2 + $0x8] sm:$0xff]
        %v2888 = vld [vmem:[#allocation2 + $0x10] sm:$0xff]
        %v2889 = vld [vmem:[#allocation2 + $0x18] sm:$0xff]
        %v2890 = vld [vmem:[#allocation2 + $0x20] sm:$0xff]
        %v2891 = vld [vmem:[#allocation2 + $0x28] sm:$0xff]
        %v2892 = vld [vmem:[#allocation2 + $0x30] sm:$0xff]
        %v2893 = vld [vmem:[#allocation2 + $0x38] sm:$0xff]
        %v2894 = vmul.f32 %v2886, %v963
        %v2895 = vmul.f32 %v2887, %v963
        %v2896 = vmul.f32 %v2888, %v963
        %v2897 = vmul.f32 %v2889, %v963
        %v2898 = vmul.f32 %v2890, %v963
        %v2899 = vmul.f32 %v2891, %v963
        %v2900 = vmul.f32 %v2892, %v963
        %v2901 = vmul.f32 %v2893, %v963
        %v2902 = vadd.f32 %v2894, %v977
        %v2903 = vadd.f32 %v2895, %v977
        %v2904 = vadd.f32 %v2896, %v977
        %v2905 = vadd.f32 %v2897, %v977
        %v2906 = vadd.f32 %v2898, %v977
        %v2907 = vadd.f32 %v2899, %v977
        %v2908 = vadd.f32 %v2900, %v977
        %v2909 = vadd.f32 %v2901, %v977
        %v2910 = vmax.f32 %v2902, 0.0
        %v2911 = vmax.f32 %v2903, 0.0
        %v2912 = vmax.f32 %v2904, 0.0
        %v2913 = vmax.f32 %v2905, 0.0
        %v2914 = vmax.f32 %v2906, 0.0
        %v2915 = vmax.f32 %v2907, 0.0
        %v2916 = vmax.f32 %v2908, 0.0
        %v2917 = vmax.f32 %v2909, 0.0
        %2918 = vst [vmem:[%s334] sm:$0xff] %v2910
        %2919 = vst [vmem:[%s334 + $0x8] sm:$0xff] %v2911
        %2920 = vst [vmem:[%s334 + $0x10] sm:$0xff] %v2912
        %2921 = vst [vmem:[%s334 + $0x18] sm:$0xff] %v2913
        %2922 = vst [vmem:[%s334 + $0x20] sm:$0xff] %v2914
        %2923 = vst [vmem:[%s334 + $0x28] sm:$0xff] %v2915
        %2924 = vst [vmem:[%s334 + $0x30] sm:$0xff] %v2916
        %2925 = vst [vmem:[%s334 + $0x38] sm:$0xff] %v2917
        %s2926 = sand.u32 %s140, 1
        %s2927 = scalar_lea.sflag [#allocation5], %s2926
        %s2928 = sand.u32 %s140, 1
        %s2929 = smul.addr %s2928, 64
        %s2930 = scalar_lea.vmem [#allocation6], %s2929
        %s2931 = sand.u32 %s29, 1
        %s2932 = scalar_lea.sflag [#allocation8], %s2931
        %s2933 = sand.u32 %s168, 1
        %s2934 = smul.addr %s2933, 64
        %s2935 = scalar_lea.vmem [#allocation7], %s2934
        %s2936 = sand.u32 %s29, 1
        %s2937 = scalar_lea.sflag [#allocation8], %s2936
        %s2938 = sand.u32 %s196, 1
        %s2939 = smul.addr %s2938, 64
        %s2940 = scalar_lea.vmem [#allocation9], %s2939
        %s2941 = sand.u32 %s224, 1
        %s2942 = scalar_lea.sflag [#allocation11], %s2941
        %s2943 = sand.u32 %s224, 1
        %s2944 = smul.addr %s2943, 64
        %s2945 = scalar_lea.vmem [#allocation10], %s2944
        // Predicated region
        $region41: #{tpu_custom_call.1} parent=35 // pred_check
          %p2946 = pneg %p150
        $region42: #{tpu_custom_call.1} parent=35 // pred_check_branch
          %2948 = sbr.rel (%p2946) target = $region44
        $region43: #{tpu_custom_call.1} parent=35 // pred_region
          %s2949 = smul.u32 4, %s34
          %s2951 = ssub.s32 1024, 1024
          %2952 = vsyncadd %s2927, %s2951
          %s2953 = smul.addr %s2949, 2
          %s2954 = smul.addr %s33, 32
          %s2955 = sadd.s32 %s2953, %s2954
          %s2956 = smul.addr %s2955, 128
          %s2957 = scalar_lea.hbm %s4, %s2956
          %s2958 = sshll.u32 %s2930, 4
          %s2959 = int_to_ptr.vmem [resolvable:$true] %s2958
          %2964 = dma.vmem_to_hbm [thread:$0]  %s2959, 1024, %s2957, %s2927, 128, 128, 8
        $region44: #{tpu_custom_call.1} parent=35 // pred_fallthru
          _
        // Predicated region
        $region45: #{tpu_custom_call.1} parent=35 // pred_check
          %p2965 = pneg %p178
        $region46: #{tpu_custom_call.1} parent=35 // pred_check_branch
          %2967 = sbr.rel (%p2965) target = $region48
        $region47: #{tpu_custom_call.1} parent=35 // pred_region
          %s2968 = smul.u32 4, %s34
          %s2970 = ssub.s32 1024, 1024
          %2971 = vsyncadd %s2932, %s2970
          %s2972 = smul.addr %s2968, 2
          %s2973 = smul.addr %s33, 32
          %s2974 = sadd.s32 %s2972, %s2973
          %s2975 = smul.addr %s2974, 128
          %s2976 = scalar_lea.hbm %s5, %s2975
          %s2977 = sshll.u32 %s2935, 4
          %s2978 = int_to_ptr.vmem [resolvable:$true] %s2977
          %2983 = dma.vmem_to_hbm [thread:$0]  %s2978, 1024, %s2976, %s2932, 128, 128, 8
        $region48: #{tpu_custom_call.1} parent=35 // pred_fallthru
          _
        // Predicated region
        $region49: #{tpu_custom_call.1} parent=35 // pred_check
          %p2984 = pneg %p206
        $region50: #{tpu_custom_call.1} parent=35 // pred_check_branch
          %2986 = sbr.rel (%p2984) target = $region52
        $region51: #{tpu_custom_call.1} parent=35 // pred_region
          %s2987 = smul.u32 4, %s34
          %s2989 = ssub.s32 1024, 1024
          %2990 = vsyncadd %s2937, %s2989
          %s2991 = smul.addr %s2987, 2
          %s2992 = smul.addr %s33, 32
          %s2993 = sadd.s32 %s2991, %s2992
          %s2994 = smul.addr %s2993, 128
          %s2995 = scalar_lea.hbm %s6, %s2994
          %s2996 = sshll.u32 %s2940, 4
          %s2997 = int_to_ptr.vmem [resolvable:$true] %s2996
          %3002 = dma.vmem_to_hbm [thread:$0]  %s2997, 1024, %s2995, %s2937, 128, 128, 8
        $region52: #{tpu_custom_call.1} parent=35 // pred_fallthru
          _
        // Predicated region
        $region53: #{tpu_custom_call.1} parent=35 // pred_check
          %p3003 = pneg %p234
        $region54: #{tpu_custom_call.1} parent=35 // pred_check_branch
          %3005 = sbr.rel (%p3003) target = $region56
        $region55: #{tpu_custom_call.1} parent=35 // pred_region
          %s3006 = smul.u32 4, %s34
          %s3008 = ssub.s32 1024, 1024
          %3009 = vsyncadd %s2942, %s3008
          %s3010 = smul.addr %s3006, 2
          %s3011 = smul.addr %s33, 32
          %s3012 = sadd.s32 %s3010, %s3011
          %s3013 = smul.addr %s3012, 128
          %s3014 = scalar_lea.hbm %s7, %s3013
          %s3015 = sshll.u32 %s2945, 4
          %s3016 = int_to_ptr.vmem [resolvable:$true] %s3015
          %3021 = dma.vmem_to_hbm [thread:$0]  %s3016, 1024, %s3014, %s2942, 128, 128, 8
        $region56: #{tpu_custom_call.1} parent=35 // pred_fallthru
          _
      $region36: #{tpu_custom_call.1} parent=5 // pred_fallthru
        _
      %p3022 = scmp.le.s32.totalorder 2, %s24
      // Predicated region
      $region57: #{tpu_custom_call.1} parent=5 // pred_check
        %p3023 = pneg %p3022
      $region58: #{tpu_custom_call.1} parent=5 // pred_check_branch
        %3025 = sbr.rel (%p3023) target = $region60
      $region59: #{tpu_custom_call.1} parent=5 // pred_region
        %s3026 = ssub.s32 %s24, 2
        // Predicated region
        $region61: #{tpu_custom_call.1} parent=59 // pred_check
          %p3027 = pneg %p156
        $region62: #{tpu_custom_call.1} parent=59 // pred_check_branch
          %3029 = sbr.rel (%p3027) target = $region64
        $region63: #{tpu_custom_call.1} parent=59 // pred_region
          %s3030 = sand.u32 %s141, 1
          %s3031 = scalar_lea.sflag [#allocation5], %s3030
          %s3032 = sand.u32 %s141, 1
          %s3033 = smul.addr %s3032, 64
          %s3034 = scalar_lea.vmem [#allocation6], %s3033
          %3035 = dma.done %s3031, 1024
        $region64: #{tpu_custom_call.1} parent=59 // pred_fallthru
          _
        // Predicated region
        $region65: #{tpu_custom_call.1} parent=59 // pred_check
          %p3036 = pneg %p184
        $region66: #{tpu_custom_call.1} parent=59 // pred_check_branch
          %3038 = sbr.rel (%p3036) target = $region68
        $region67: #{tpu_custom_call.1} parent=59 // pred_region
          %s3039 = sand.u32 %s30, 1
          %s3040 = scalar_lea.sflag [#allocation8], %s3039
          %s3041 = sand.u32 %s169, 1
          %s3042 = smul.addr %s3041, 64
          %s3043 = scalar_lea.vmem [#allocation7], %s3042
          %3044 = dma.done %s3040, 1024
        $region68: #{tpu_custom_call.1} parent=59 // pred_fallthru
          _
        // Predicated region
        $region69: #{tpu_custom_call.1} parent=59 // pred_check
          %p3045 = pneg %p212
        $region70: #{tpu_custom_call.1} parent=59 // pred_check_branch
          %3047 = sbr.rel (%p3045) target = $region72
        $region71: #{tpu_custom_call.1} parent=59 // pred_region
          %s3048 = sand.u32 %s30, 1
          %s3049 = scalar_lea.sflag [#allocation8], %s3048
          %s3050 = sand.u32 %s197, 1
          %s3051 = smul.addr %s3050, 64
          %s3052 = scalar_lea.vmem [#allocation9], %s3051
          %3053 = dma.done %s3049, 1024
        $region72: #{tpu_custom_call.1} parent=59 // pred_fallthru
          _
        // Predicated region
        $region73: #{tpu_custom_call.1} parent=59 // pred_check
          %p3054 = pneg %p240
        $region74: #{tpu_custom_call.1} parent=59 // pred_check_branch
          %3056 = sbr.rel (%p3054) target = $region76
        $region75: #{tpu_custom_call.1} parent=59 // pred_region
          %s3057 = sand.u32 %s225, 1
          %s3058 = scalar_lea.sflag [#allocation11], %s3057
          %s3059 = sand.u32 %s225, 1
          %s3060 = smul.addr %s3059, 64
          %s3061 = scalar_lea.vmem [#allocation10], %s3060
          %3062 = dma.done %s3058, 1024
        $region76: #{tpu_custom_call.1} parent=59 // pred_fallthru
          _
      $region60: #{tpu_custom_call.1} parent=5 // pred_fallthru
        _
    $region6: #{tpu_custom_call.1} parent=1 // loop_footer
      %s28 = sadd.s32 1, %s24
    $region7: #{tpu_custom_call.1} parent=1 // loop_footer_branch
      %23 = sbr.rel target = $region3
    $region8: #{tpu_custom_call.1} parent=1 // loop_exit
      _
    %3063 = vsyncpa [#allocation4], 1
    %s3064 = scalar_lea.sflag [#allocation4], 1
    %3065 = vsyncpa %s3064, 1
    %3066 = vsyncpa [#allocation5], 1
    %s3067 = scalar_lea.sflag [#allocation5], 1
    %3068 = vsyncpa %s3067, 1
    %3069 = vsyncpa [#allocation8], 1
    %s3070 = scalar_lea.sflag [#allocation8], 1
    %3071 = vsyncpa %s3070, 1
    %3072 = vsyncpa [#allocation11], 1
    %s3073 = scalar_lea.sflag [#allocation11], 1
    %3074 = vsyncpa %s3073, 1

</llo_original>
